<compile_context>
chip_gen: v5e
topology: v5e:2x2
jax: 0.10.0
libtpu: 0.0.40
codegen_flags: <defaults>
</compile_context>

<pallas_src>
import functools

import jax
import jax.numpy as jnp
from jax.experimental import pallas as pl
from jax.experimental.pallas import tpu as pltpu

_BN_EPS = 1e-5
_VMEM_LIMIT = 40 * 1024 * 1024  # safe on v5e/v6e (128 MiB phys) and v7x (64 MiB)


# ----------------------------------------------------------------------------
# tiling helpers
# ----------------------------------------------------------------------------

def _chan_block(c, cap=256):
    """Output-channel block: full C when small, else a 256/128-lane tile."""
    if c <= cap:
        return c
    for b in (256, 128):
        if c % b == 0:
            return b
    return c


def _pick_row_block(m, target=2048, want_tiles=2):
    """Largest divisor of m that is 8-aligned, <= target and leaves >=2 tiles."""
    divs = [d for d in range(1, m + 1) if m % d == 0 and (d % 8 == 0 or d == m)]
    good = [d for d in divs if d <= target and m // d >= want_tiles]
    if good:
        return max(good)
    fit = [d for d in divs if d <= target]
    if fit:
        return max(fit)
    return min(divs)


# ----------------------------------------------------------------------------
# Pallas kernels
# ----------------------------------------------------------------------------

def _conv3x3_kernel(*refs, H, W, Wp, fuse_in):
    # Inputs : x (1, H+2, Wp, Cin) bf16 padded image block (data rows 1..H,
    #          cols 1..W, zeros elsewhere); w (3, 3*Cin, bco) bf16 packed as
    #          w[dx, dy*Cin + c, o];  optional scale/shift (1, Cin) f32 when the
    #          previous BatchNorm+ReLU is fused into this conv's input load.
    # Outputs: y (1, H+2, Wp, bco) bf16 in the same padded layout (ready to be
    #          the next conv's input); per-image channel sum / sumsq (1,1,bco).
    if fuse_in:
        x_ref, w_ref, sc_ref, sh_ref, y_ref, sum_ref, sq_ref = refs
    else:
        x_ref, w_ref, y_ref, sum_ref, sq_ref = refs
        sc_ref = sh_ref = None

    cin = x_ref.shape[3]
    bco = y_ref.shape[3]
    flat_in = (H + 2) * Wp
    flat_out = H * Wp

    col = jax.lax.broadcasted_iota(jnp.int32, (Wp, 1), 0)
    colmask = jnp.logical_and(col >= 1, col <= W)          # valid output columns

    if fuse_in:
        # stage-1 BatchNorm(batch stats) + ReLU applied to the raw conv-1
        # output right after it lands in VMEM; halo rows/cols re-zeroed.
        x3 = x_ref[0]                                       # (H+2, Wp, Cin) bf16
        sc = sc_ref[...].reshape(1, 1, cin)
        sh = sh_ref[...].reshape(1, 1, cin)
        act = jnp.maximum(x3.astype(jnp.float32) * sc + sh, 0.0)
        act = jnp.where(colmask, act, 0.0)
        zrow3 = jnp.zeros((1, Wp, cin), jnp.float32)
        x3 = jnp.concatenate([zrow3, act[1:H + 1], zrow3], axis=0)
        xb = x3.astype(jnp.bfloat16).reshape(flat_in, cin)
    else:
        xb = x_ref[0].reshape(flat_in, cin)                 # Wp % 8 == 0: free

    # Pack the three row taps (dy) into the contraction dim: aligned sublane
    # slices (offset dy*Wp is a multiple of 8), lane-dim concat.
    lhs = jnp.concatenate(
        [xb[dy * Wp: dy * Wp + flat_out, :] for dy in range(3)], axis=1)

    p0 = jnp.dot(lhs, w_ref[0], preferred_element_type=jnp.float32)
    p1 = jnp.dot(lhs, w_ref[1], preferred_element_type=jnp.float32)
    p2 = jnp.dot(lhs, w_ref[2], preferred_element_type=jnp.float32)

    # Combine the three column taps (dx) once per tile; output column w+1 holds
    # out[:, w], i.e. the result is already in the next conv's padded layout.
    zrow = jnp.zeros((1, bco), jnp.float32)
    y = jnp.concatenate(
        [zrow, p0[:-2, :] + p1[1:-1, :] + p2[2:, :], zrow], axis=0)

    y3 = y.reshape(H, Wp, bco)
    y3 = jnp.where(colmask, y3, 0.0)                        # zero invalid cols

    # BatchNorm batch statistics over valid pixels only (f32).
    sum_ref[...] = jnp.sum(y3, axis=(0, 1), keepdims=True)
    sq_ref[...] = jnp.sum(y3 * y3, axis=(0, 1), keepdims=True)

    y_ref[0, 1:H + 1, :, :] = y3.astype(y_ref.dtype)
    y_ref[0, 0, :, :] = jnp.zeros((Wp, bco), y_ref.dtype)
    y_ref[0, H + 1, :, :] = jnp.zeros((Wp, bco), y_ref.dtype)


def _bn_relu_kernel(y_ref, scale_ref, shift_ref, o_ref):
    # y (bm, bc) bf16, scale/shift (1, bc) f32 precomputed BN affine.
    o_ref[...] = jnp.maximum(
        y_ref[...].astype(jnp.float32) * scale_ref[...] + shift_ref[...],
        0.0).astype(o_ref.dtype)


# ----------------------------------------------------------------------------
# wrappers
# ----------------------------------------------------------------------------

def conv3x3_stats(xp, w_oihw, valid_w, in_scale=None, in_shift=None):
    """3x3 conv (padding=1, no bias) fused with per-image channel statistics.

    xp: (N, H+2, Wp, Cin) bf16 zero-padded input (data at rows 1..H, cols
        1..valid_w); w_oihw: (Cout, Cin, 3, 3) PyTorch layout.
    If in_scale/in_shift are given, scale*x+shift followed by ReLU (and halo
    re-zeroing) is applied to the input block in-kernel (fused previous BN).
    Returns (y, sum, sumsq): y is (N, H+2, Wp, Cout) bf16 in the same padded
    layout; sum/sumsq are (N, 1, Cout) f32 per-image partial statistics.
    """
    N, Hp2, Wp, Cin = xp.shape
    H = Hp2 - 2
    W = valid_w
    Cout = w_oihw.shape[0]
    bco = _chan_block(Cout)
    n_co = Cout // bco

    # w[dx, dy*Cin + c, o] = w_oihw[o, c, dy, dx]
    wk = jnp.transpose(w_oihw, (3, 2, 1, 0)).reshape(3, 3 * Cin, Cout)
    wk = wk.astype(jnp.bfloat16)

    fuse_in = in_scale is not None
    kernel = functools.partial(_conv3x3_kernel, H=H, W=W, Wp=Wp, fuse_in=fuse_in)

    in_specs = [
        pl.BlockSpec((1, Hp2, Wp, Cin), lambda n, co: (n, 0, 0, 0)),
        pl.BlockSpec((3, 3 * Cin, bco), lambda n, co: (0, 0, co)),
    ]
    args = [xp, wk]
    if fuse_in:
        in_specs += [pl.BlockSpec((1, Cin), lambda n, co: (0, 0)),
                     pl.BlockSpec((1, Cin), lambda n, co: (0, 0))]
        args += [in_scale.reshape(1, Cin).astype(jnp.float32),
                 in_shift.reshape(1, Cin).astype(jnp.float32)]

    y, tsum, tsq = pl.pallas_call(
        kernel,
        grid=(N, n_co),
        in_specs=in_specs,
        out_specs=[
            pl.BlockSpec((1, Hp2, Wp, bco), lambda n, co: (n, 0, 0, co)),
            pl.BlockSpec((1, 1, bco), lambda n, co: (n, 0, co)),
            pl.BlockSpec((1, 1, bco), lambda n, co: (n, 0, co)),
        ],
        out_shape=(
            jax.ShapeDtypeStruct((N, Hp2, Wp, Cout), jnp.bfloat16),
            jax.ShapeDtypeStruct((N, 1, Cout), jnp.float32),
            jax.ShapeDtypeStruct((N, 1, Cout), jnp.float32),
        ),
        compiler_params=pltpu.CompilerParams(
            dimension_semantics=("parallel", "parallel"),
            vmem_limit_bytes=_VMEM_LIMIT,
        ),
    )(*args)
    return y, tsum, tsq


def _bn_scale_shift(tsum, tsq, count, gamma, beta):
    """Tiny (C,)-sized finalization of the batch statistics into an affine."""
    total = jnp.sum(tsum, axis=0).reshape(-1)
    total_sq = jnp.sum(tsq, axis=0).reshape(-1)
    mean = total / count
    var = jnp.maximum(total_sq / count - mean * mean, 0.0)   # clamp (cancellation)
    scale = gamma * jax.lax.rsqrt(var + _BN_EPS)
    shift = beta - mean * scale
    return scale, shift


def bn_relu_apply(y, scale, shift, out_dtype=jnp.float32):
    """Apply BatchNorm affine (precomputed batch stats) + ReLU, tiled 2-D."""
    N, Hp2, Wp, C = y.shape
    M = N * Hp2 * Wp
    y2d = y.reshape(M, C)
    bc = _chan_block(C)
    bm = _pick_row_block(M, target=2048)
    out = pl.pallas_call(
        _bn_relu_kernel,
        grid=(M // bm, C // bc),
        in_specs=[
            pl.BlockSpec((bm, bc), lambda m, c: (m, c)),
            pl.BlockSpec((1, bc), lambda m, c: (0, c)),
            pl.BlockSpec((1, bc), lambda m, c: (0, c)),
        ],
        out_specs=pl.BlockSpec((bm, bc), lambda m, c: (m, c)),
        out_shape=jax.ShapeDtypeStruct((M, C), out_dtype),
        compiler_params=pltpu.CompilerParams(
            dimension_semantics=("parallel", "parallel"),
            vmem_limit_bytes=_VMEM_LIMIT,
        ),
    )(y2d, scale.reshape(1, C).astype(jnp.float32),
      shift.reshape(1, C).astype(jnp.float32))
    return out.reshape(N, Hp2, Wp, C)


def double_conv_forward(params, x_nchw):
    """DoubleConv forward: (conv3x3 -> BN(batch stats) -> ReLU) x 2, NCHW in/out.

    Conv biases are omitted from compute: with batch-statistics BatchNorm they
    cancel exactly (BN subtracts the batch mean).  Eval-mode (running-stats) BN
    is not implemented here.
    """
    x = jnp.transpose(x_nchw, (0, 2, 3, 1))                 # NCHW -> NHWC
    N, H, W, _ = x.shape
    Wp = ((W + 2 + 7) // 8) * 8                             # lane/sublane-friendly
    xp = jnp.pad(x.astype(jnp.bfloat16),
                 ((0, 0), (1, 1), (1, Wp - W - 1), (0, 0)))

    # stage 1: conv + batch stats
    y1, s1, q1 = conv3x3_stats(xp, params["w1"], W)
    scale1, shift1 = _bn_scale_shift(s1, q1, N * H * W, params["g1"],
                                     params["bt1"])

    # stage 2: conv with stage-1 BN+ReLU fused into the input load
    y2, s2, q2 = conv3x3_stats(y1, params["w2"], W,
                               in_scale=scale1, in_shift=shift1)
    scale2, shift2 = _bn_scale_shift(s2, q2, N * H * W, params["g2"],
                                     params["bt2"])

    a2 = bn_relu_apply(y2, scale2, shift2, out_dtype=jnp.float32)
    out = a2[:, 1:H + 1, 1:W + 1, :]                        # strip padding
    return jnp.transpose(out, (0, 3, 1, 2))                 # NHWC -> NCHW


# ----------------------------------------------------------------------------
# parameters & pure-JAX reference (correctness sanity check)
# ----------------------------------------------------------------------------

def init_double_conv_params(key, in_channels, out_channels):
    k1, k2 = jax.random.split(key)

    def conv_w(k, cout, cin):
        s = (2.0 / (cin * 9)) ** 0.5
        return jax.random.normal(k, (cout, cin, 3, 3), jnp.float32) * s

    return {
        "w1": conv_w(k1, out_channels, in_channels),
        "b1": jnp.zeros((out_channels,), jnp.float32),  # cancels under batch-stat BN
        "g1": jnp.ones((out_channels,), jnp.float32),
        "bt1": jnp.zeros((out_channels,), jnp.float32),
        "w2": conv_w(k2, out_channels, out_channels),
        "b2": jnp.zeros((out_channels,), jnp.float32),
        "g2": jnp.ones((out_channels,), jnp.float32),
        "bt2": jnp.zeros((out_channels,), jnp.float32),
    }


def _q(a):  # mirror the kernel's bf16 MXU-operand quantization
    return a.astype(jnp.bfloat16).astype(jnp.float32)


def _reference_double_conv(params, x_nchw):
    def conv(x, w):
        return jax.lax.conv_general_dilated(
            _q(x), _q(w), window_strides=(1, 1), padding=((1, 1), (1, 1)),
            dimension_numbers=("NCHW", "OIHW", "NCHW"),
            preferred_element_type=jnp.float32,
            precision=jax.lax.Precision.HIGHEST)

    def bn_relu(y, g, b):
        mean = jnp.mean(y, axis=(0, 2, 3), keepdims=True)
        var = jnp.mean(jnp.square(y - mean), axis=(0, 2, 3), keepdims=True)
        yhat = (y - mean) * jax.lax.rsqrt(var + _BN_EPS)
        return jnp.maximum(yhat * g.reshape(1, -1, 1, 1)
                           + b.reshape(1, -1, 1, 1), 0.0)

    a1 = bn_relu(conv(x_nchw, params["w1"]), params["g1"], params["bt1"])
    a2 = bn_relu(conv(a1, params["w2"]), params["g2"], params["bt2"])
    return a2


# ----------------------------------------------------------------------------

if __name__ == "__main__":
    key = jax.random.PRNGKey(0)
    pkey, xkey = jax.random.split(key)
    in_ch, out_ch = 4, 8
    params = init_double_conv_params(pkey, in_ch, out_ch)
    x = jax.random.normal(xkey, (2, in_ch, 16, 16), jnp.float32)

    fwd = jax.jit(double_conv_forward)
    out = jax.block_until_ready(fwd(params, x))

    assert out.shape == (2, out_ch, 16, 16), out.shape
    assert bool(jnp.all(jnp.isfinite(out)))

    ref = _reference_double_conv(params, x)
    err = float(jnp.max(jnp.abs(out - ref)))
    assert err < 1e-1, f"max abs error vs reference: {err}"

    print("KERNEL_OK")
</pallas_src>

<mosaic_0001>
module attributes {stable_mosaic.version = 11 : i64} {
  func.func @_conv3x3_kernel(%arg0: i32, %arg1: i32, %arg2: memref<1x18x24x4xbf16, #tpu.memory_space<vmem>>, %arg3: memref<3x12x8xbf16, #tpu.memory_space<vmem>>, %arg4: memref<1x18x24x8xbf16, #tpu.memory_space<vmem>>, %arg5: memref<1x1x8xf32, #tpu.memory_space<vmem>>, %arg6: memref<1x1x8xf32, #tpu.memory_space<vmem>>) attributes {dimension_semantics = [#tpu.dimension_semantics<parallel>, #tpu.dimension_semantics<parallel>], iteration_bounds = array<i64: 2, 1>, scalar_prefetch = 0 : i64, scratch_operands = 0 : i64, tpu.core_type = #tpu.core_type<tc>, window_params = [{transform_indices = @transform_0, window_bounds = array<i64: 1, 18, 24, 4>}, {transform_indices = @transform_1, window_bounds = array<i64: 3, 12, 8>}, {transform_indices = @transform_2, window_bounds = array<i64: 1, 18, 24, 8>}, {transform_indices = @transform_3, window_bounds = array<i64: 1, 1, 8>}, {transform_indices = @transform_4, window_bounds = array<i64: 1, 1, 8>}]} {
    %0 = tpu.iota {dimensions = array<i32: 0>} : vector<24x1xi32>
    %c1_i32 = arith.constant 1 : i32
    %1 = vector.broadcast %c1_i32 : i32 to vector<24x1xi32>
    %2 = arith.cmpi sge, %0, %1 : vector<24x1xi32>
    %c16_i32 = arith.constant 16 : i32
    %3 = vector.broadcast %c16_i32 : i32 to vector<24x1xi32>
    %4 = arith.cmpi sle, %0, %3 : vector<24x1xi32>
    %5 = arith.andi %2, %4 : vector<24x1xi1>
    %c0 = arith.constant 0 : index
    %c0_0 = arith.constant 0 : index
    %c0_1 = arith.constant 0 : index
    %c0_2 = arith.constant 0 : index
    %6 = vector.load %arg2[%c0, %c0_0, %c0_1, %c0_2] : memref<1x18x24x4xbf16, #tpu.memory_space<vmem>>, vector<1x18x24x4xbf16>
    %7 = vector.shape_cast %6 : vector<1x18x24x4xbf16> to vector<18x24x4xbf16>
    %8 = vector.shape_cast %7 : vector<18x24x4xbf16> to vector<432x4xbf16>
    %9 = vector.extract_strided_slice %8 {offsets = [0, 0], sizes = [384, 4], strides = [1, 1]} : vector<432x4xbf16> to vector<384x4xbf16>
    %10 = vector.extract_strided_slice %8 {offsets = [24, 0], sizes = [384, 4], strides = [1, 1]} : vector<432x4xbf16> to vector<384x4xbf16>
    %11 = vector.extract_strided_slice %8 {offsets = [48, 0], sizes = [384, 4], strides = [1, 1]} : vector<432x4xbf16> to vector<384x4xbf16>
    %12 = tpu.concatenate %9, %10, %11 in 1 : vector<384x4xbf16>, vector<384x4xbf16>, vector<384x4xbf16> -> vector<384x12xbf16>
    %c0_3 = arith.constant 0 : index
    %c0_4 = arith.constant 0 : index
    %c0_5 = arith.constant 0 : index
    %13 = vector.load %arg3[%c0_3, %c0_4, %c0_5] : memref<3x12x8xbf16, #tpu.memory_space<vmem>>, vector<1x12x8xbf16>
    %14 = vector.shape_cast %13 : vector<1x12x8xbf16> to vector<12x8xbf16>
    %cst = arith.constant dense<0.000000e+00> : vector<384x8xf32>
    %15 = tpu.matmul %12, %14, %cst {dimension_numbers = #tpu.dot_dimension_numbers<[1], [0], [0], [1], [0, 0, 1, 1], [], []>} : vector<384x12xbf16>, vector<12x8xbf16>, vector<384x8xf32> -> vector<384x8xf32>
    %c1 = arith.constant 1 : index
    %c0_6 = arith.constant 0 : index
    %c0_7 = arith.constant 0 : index
    %16 = vector.load %arg3[%c1, %c0_6, %c0_7] : memref<3x12x8xbf16, #tpu.memory_space<vmem>>, vector<1x12x8xbf16>
    %17 = vector.shape_cast %16 : vector<1x12x8xbf16> to vector<12x8xbf16>
    %cst_8 = arith.constant dense<0.000000e+00> : vector<384x8xf32>
    %18 = tpu.matmul %12, %17, %cst_8 {dimension_numbers = #tpu.dot_dimension_numbers<[1], [0], [0], [1], [0, 0, 1, 1], [], []>} : vector<384x12xbf16>, vector<12x8xbf16>, vector<384x8xf32> -> vector<384x8xf32>
    %c2 = arith.constant 2 : index
    %c0_9 = arith.constant 0 : index
    %c0_10 = arith.constant 0 : index
    %19 = vector.load %arg3[%c2, %c0_9, %c0_10] : memref<3x12x8xbf16, #tpu.memory_space<vmem>>, vector<1x12x8xbf16>
    %20 = vector.shape_cast %19 : vector<1x12x8xbf16> to vector<12x8xbf16>
    %cst_11 = arith.constant dense<0.000000e+00> : vector<384x8xf32>
    %21 = tpu.matmul %12, %20, %cst_11 {dimension_numbers = #tpu.dot_dimension_numbers<[1], [0], [0], [1], [0, 0, 1, 1], [], []>} : vector<384x12xbf16>, vector<12x8xbf16>, vector<384x8xf32> -> vector<384x8xf32>
    %cst_12 = arith.constant 0.000000e+00 : f32
    %22 = vector.broadcast %cst_12 : f32 to vector<1x8xf32>
    %23 = vector.extract_strided_slice %15 {offsets = [0, 0], sizes = [382, 8], strides = [1, 1]} : vector<384x8xf32> to vector<382x8xf32>
    %24 = vector.extract_strided_slice %18 {offsets = [1, 0], sizes = [382, 8], strides = [1, 1]} : vector<384x8xf32> to vector<382x8xf32>
    %25 = arith.addf %23, %24 : vector<382x8xf32>
    %26 = vector.extract_strided_slice %21 {offsets = [2, 0], sizes = [382, 8], strides = [1, 1]} : vector<384x8xf32> to vector<382x8xf32>
    %27 = arith.addf %25, %26 : vector<382x8xf32>
    %28 = tpu.concatenate %22, %27, %22 in 0 : vector<1x8xf32>, vector<382x8xf32>, vector<1x8xf32> -> vector<384x8xf32>
    %29 = vector.shape_cast %28 : vector<384x8xf32> to vector<16x24x8xf32>
    %cst_13 = arith.constant 0.000000e+00 : f32
    %30 = vector.shape_cast %5 : vector<24x1xi1> to vector<1x24x1xi1>
    %31 = vector.broadcast %30 : vector<1x24x1xi1> to vector<16x24x8xi1>
    %32 = vector.broadcast %cst_13 : f32 to vector<16x24x8xf32>
    %33 = arith.select %31, %29, %32 : vector<16x24x8xi1>, vector<16x24x8xf32>
    %cst_14 = arith.constant dense<0.000000e+00> : vector<8xf32>
    %34 = vector.multi_reduction <add>, %33, %cst_14 [0, 1] : vector<16x24x8xf32> to vector<8xf32>
    %35 = vector.shape_cast %34 : vector<8xf32> to vector<1x1x8xf32>
    %c0_15 = arith.constant 0 : index
    %c0_16 = arith.constant 0 : index
    %c0_17 = arith.constant 0 : index
    %36 = vector.load %arg5[%c0_15, %c0_16, %c0_17] : memref<1x1x8xf32, #tpu.memory_space<vmem>>, vector<1x1x8xf32>
    tpu.vector_store %arg5[%c0_15, %c0_16, %c0_17], %35 {strides = array<i32>} : memref<1x1x8xf32, #tpu.memory_space<vmem>>, vector<1x1x8xf32>,
    %37 = arith.mulf %33, %33 : vector<16x24x8xf32>
    %cst_18 = arith.constant dense<0.000000e+00> : vector<8xf32>
    %38 = vector.multi_reduction <add>, %37, %cst_18 [0, 1] : vector<16x24x8xf32> to vector<8xf32>
    %39 = vector.shape_cast %38 : vector<8xf32> to vector<1x1x8xf32>
    %c0_19 = arith.constant 0 : index
    %c0_20 = arith.constant 0 : index
    %c0_21 = arith.constant 0 : index
    %40 = vector.load %arg6[%c0_19, %c0_20, %c0_21] : memref<1x1x8xf32, #tpu.memory_space<vmem>>, vector<1x1x8xf32>
    tpu.vector_store %arg6[%c0_19, %c0_20, %c0_21], %39 {strides = array<i32>} : memref<1x1x8xf32, #tpu.memory_space<vmem>>, vector<1x1x8xf32>,
    %41 = arith.truncf %33 : vector<16x24x8xf32> to vector<16x24x8xbf16>
    %c0_22 = arith.constant 0 : index
    %c1_23 = arith.constant 1 : index
    %c0_24 = arith.constant 0 : index
    %c0_25 = arith.constant 0 : index
    %42 = vector.load %arg4[%c0_22, %c1_23, %c0_24, %c0_25] : memref<1x18x24x8xbf16, #tpu.memory_space<vmem>>, vector<1x16x24x8xbf16>
    %43 = vector.shape_cast %42 : vector<1x16x24x8xbf16> to vector<16x24x8xbf16>
    %44 = vector.shape_cast %41 : vector<16x24x8xbf16> to vector<1x16x24x8xbf16>
    tpu.vector_store %arg4[%c0_22, %c1_23, %c0_24, %c0_25], %44 {strides = array<i32>} : memref<1x18x24x8xbf16, #tpu.memory_space<vmem>>, vector<1x16x24x8xbf16>,
    %cst_26 = arith.constant 0.000000e+00 : bf16
    %45 = vector.broadcast %cst_26 : bf16 to vector<24x8xbf16>
    %c0_27 = arith.constant 0 : index
    %c0_28 = arith.constant 0 : index
    %c0_29 = arith.constant 0 : index
    %c0_30 = arith.constant 0 : index
    %46 = vector.load %arg4[%c0_27, %c0_28, %c0_29, %c0_30] : memref<1x18x24x8xbf16, #tpu.memory_space<vmem>>, vector<1x1x24x8xbf16>
    %47 = vector.shape_cast %46 : vector<1x1x24x8xbf16> to vector<24x8xbf16>
    %48 = vector.shape_cast %45 : vector<24x8xbf16> to vector<1x1x24x8xbf16>
    tpu.vector_store %arg4[%c0_27, %c0_28, %c0_29, %c0_30], %48 {strides = array<i32>} : memref<1x18x24x8xbf16, #tpu.memory_space<vmem>>, vector<1x1x24x8xbf16>,
    %cst_31 = arith.constant 0.000000e+00 : bf16
    %49 = vector.broadcast %cst_31 : bf16 to vector<24x8xbf16>
    %c0_32 = arith.constant 0 : index
    %c17 = arith.constant 17 : index
    %c0_33 = arith.constant 0 : index
    %c0_34 = arith.constant 0 : index
    %50 = vector.load %arg4[%c0_32, %c17, %c0_33, %c0_34] : memref<1x18x24x8xbf16, #tpu.memory_space<vmem>>, vector<1x1x24x8xbf16>
    %51 = vector.shape_cast %50 : vector<1x1x24x8xbf16> to vector<24x8xbf16>
    %52 = vector.shape_cast %49 : vector<24x8xbf16> to vector<1x1x24x8xbf16>
    tpu.vector_store %arg4[%c0_32, %c17, %c0_33, %c0_34], %52 {strides = array<i32>} : memref<1x18x24x8xbf16, #tpu.memory_space<vmem>>, vector<1x1x24x8xbf16>,
    return
  }
  func.func @transform_0(%arg0: i32, %arg1: i32) -> (i32, i32, i32, i32) {
    %c0_i32 = arith.constant 0 : i32
    %c0_i32_0 = arith.constant 0 : i32
    %c0_i32_1 = arith.constant 0 : i32
    %c0_i32_2 = arith.constant 0 : i32
    return %arg0, %c0_i32, %c0_i32_0, %c0_i32_1 : i32, i32, i32, i32
  }
  func.func @transform_1(%arg0: i32, %arg1: i32) -> (i32, i32, i32) {
    %c0_i32 = arith.constant 0 : i32
    %c0_i32_0 = arith.constant 0 : i32
    %c0_i32_1 = arith.constant 0 : i32
    return %c0_i32, %c0_i32_0, %arg1 : i32, i32, i32
  }
  func.func @transform_2(%arg0: i32, %arg1: i32) -> (i32, i32, i32, i32) {
    %c0_i32 = arith.constant 0 : i32
    %c0_i32_0 = arith.constant 0 : i32
    %c0_i32_1 = arith.constant 0 : i32
    return %arg0, %c0_i32, %c0_i32_0, %arg1 : i32, i32, i32, i32
  }
  func.func @transform_3(%arg0: i32, %arg1: i32) -> (i32, i32, i32) {
    %c0_i32 = arith.constant 0 : i32
    %c0_i32_0 = arith.constant 0 : i32
    return %arg0, %c0_i32, %arg1 : i32, i32, i32
  }
  func.func @transform_4(%arg0: i32, %arg1: i32) -> (i32, i32, i32) {
    %c0_i32 = arith.constant 0 : i32
    %c0_i32_0 = arith.constant 0 : i32
    return %arg0, %c0_i32, %arg1 : i32, i32, i32
  }
}

module attributes {stable_mosaic.version = 11 : i64} {
  func.func @_conv3x3_kernel(%arg0: i32, %arg1: i32, %arg2: memref<1x18x24x8xbf16, #tpu.memory_space<vmem>>, %arg3: memref<3x24x8xbf16, #tpu.memory_space<vmem>>, %arg4: memref<1x8xf32, #tpu.memory_space<vmem>>, %arg5: memref<1x8xf32, #tpu.memory_space<vmem>>, %arg6: memref<1x18x24x8xbf16, #tpu.memory_space<vmem>>, %arg7: memref<1x1x8xf32, #tpu.memory_space<vmem>>, %arg8: memref<1x1x8xf32, #tpu.memory_space<vmem>>) attributes {dimension_semantics = [#tpu.dimension_semantics<parallel>, #tpu.dimension_semantics<parallel>], iteration_bounds = array<i64: 2, 1>, scalar_prefetch = 0 : i64, scratch_operands = 0 : i64, tpu.core_type = #tpu.core_type<tc>, window_params = [{transform_indices = @transform_0, window_bounds = array<i64: 1, 18, 24, 8>}, {transform_indices = @transform_1, window_bounds = array<i64: 3, 24, 8>}, {pipeline_mode = #tpu.pipeline_mode<synchronous>, transform_indices = @transform_2, window_bounds = array<i64: 1, 8>}, {pipeline_mode = #tpu.pipeline_mode<synchronous>, transform_indices = @transform_3, window_bounds = array<i64: 1, 8>}, {transform_indices = @transform_4, window_bounds = array<i64: 1, 18, 24, 8>}, {transform_indices = @transform_5, window_bounds = array<i64: 1, 1, 8>}, {transform_indices = @transform_6, window_bounds = array<i64: 1, 1, 8>}]} {
    %0 = tpu.iota {dimensions = array<i32: 0>} : vector<24x1xi32>
    %c1_i32 = arith.constant 1 : i32
    %1 = vector.broadcast %c1_i32 : i32 to vector<24x1xi32>
    %2 = arith.cmpi sge, %0, %1 : vector<24x1xi32>
    %c16_i32 = arith.constant 16 : i32
    %3 = vector.broadcast %c16_i32 : i32 to vector<24x1xi32>
    %4 = arith.cmpi sle, %0, %3 : vector<24x1xi32>
    %5 = arith.andi %2, %4 : vector<24x1xi1>
    %c0 = arith.constant 0 : index
    %c0_0 = arith.constant 0 : index
    %c0_1 = arith.constant 0 : index
    %c0_2 = arith.constant 0 : index
    %6 = vector.load %arg2[%c0, %c0_0, %c0_1, %c0_2] : memref<1x18x24x8xbf16, #tpu.memory_space<vmem>>, vector<1x18x24x8xbf16>
    %7 = vector.shape_cast %6 : vector<1x18x24x8xbf16> to vector<18x24x8xbf16>
    %c0_3 = arith.constant 0 : index
    %c0_4 = arith.constant 0 : index
    %8 = vector.load %arg4[%c0_3, %c0_4] : memref<1x8xf32, #tpu.memory_space<vmem>>, vector<1x8xf32>
    %9 = vector.shape_cast %8 : vector<1x8xf32> to vector<1x1x8xf32>
    %c0_5 = arith.constant 0 : index
    %c0_6 = arith.constant 0 : index
    %10 = vector.load %arg5[%c0_5, %c0_6] : memref<1x8xf32, #tpu.memory_space<vmem>>, vector<1x8xf32>
    %11 = vector.shape_cast %10 : vector<1x8xf32> to vector<1x1x8xf32>
    %12 = arith.extf %7 : vector<18x24x8xbf16> to vector<18x24x8xf32>
    %13 = vector.broadcast %9 : vector<1x1x8xf32> to vector<18x24x8xf32>
    %14 = arith.mulf %12, %13 : vector<18x24x8xf32>
    %15 = vector.broadcast %11 : vector<1x1x8xf32> to vector<18x24x8xf32>
    %16 = arith.addf %14, %15 : vector<18x24x8xf32>
    %cst = arith.constant 0.000000e+00 : f32
    %17 = vector.broadcast %cst : f32 to vector<18x24x8xf32>
    %18 = arith.maximumf %16, %17 : vector<18x24x8xf32>
    %cst_7 = arith.constant 0.000000e+00 : f32
    %19 = vector.shape_cast %5 : vector<24x1xi1> to vector<1x24x1xi1>
    %20 = vector.broadcast %19 : vector<1x24x1xi1> to vector<18x24x8xi1>
    %21 = vector.broadcast %cst_7 : f32 to vector<18x24x8xf32>
    %22 = arith.select %20, %18, %21 : vector<18x24x8xi1>, vector<18x24x8xf32>
    %cst_8 = arith.constant 0.000000e+00 : f32
    %23 = vector.broadcast %cst_8 : f32 to vector<1x24x8xf32>
    %24 = vector.extract_strided_slice %22 {offsets = [1, 0, 0], sizes = [16, 24, 8], strides = [1, 1, 1]} : vector<18x24x8xf32> to vector<16x24x8xf32>
    %25 = tpu.concatenate %23, %24, %23 in 0 : vector<1x24x8xf32>, vector<16x24x8xf32>, vector<1x24x8xf32> -> vector<18x24x8xf32>
    %26 = arith.truncf %25 : vector<18x24x8xf32> to vector<18x24x8xbf16>
    %27 = vector.shape_cast %26 : vector<18x24x8xbf16> to vector<432x8xbf16>
    %28 = vector.extract_strided_slice %27 {offsets = [0, 0], sizes = [384, 8], strides = [1, 1]} : vector<432x8xbf16> to vector<384x8xbf16>
    %29 = vector.extract_strided_slice %27 {offsets = [24, 0], sizes = [384, 8], strides = [1, 1]} : vector<432x8xbf16> to vector<384x8xbf16>
    %30 = vector.extract_strided_slice %27 {offsets = [48, 0], sizes = [384, 8], strides = [1, 1]} : vector<432x8xbf16> to vector<384x8xbf16>
    %31 = tpu.concatenate %28, %29, %30 in 1 : vector<384x8xbf16>, vector<384x8xbf16>, vector<384x8xbf16> -> vector<384x24xbf16>
    %c0_9 = arith.constant 0 : index
    %c0_10 = arith.constant 0 : index
    %c0_11 = arith.constant 0 : index
    %32 = vector.load %arg3[%c0_9, %c0_10, %c0_11] : memref<3x24x8xbf16, #tpu.memory_space<vmem>>, vector<1x24x8xbf16>
    %33 = vector.shape_cast %32 : vector<1x24x8xbf16> to vector<24x8xbf16>
    %cst_12 = arith.constant dense<0.000000e+00> : vector<384x8xf32>
    %34 = tpu.matmul %31, %33, %cst_12 {dimension_numbers = #tpu.dot_dimension_numbers<[1], [0], [0], [1], [0, 0, 1, 1], [], []>} : vector<384x24xbf16>, vector<24x8xbf16>, vector<384x8xf32> -> vector<384x8xf32>
    %c1 = arith.constant 1 : index
    %c0_13 = arith.constant 0 : index
    %c0_14 = arith.constant 0 : index
    %35 = vector.load %arg3[%c1, %c0_13, %c0_14] : memref<3x24x8xbf16, #tpu.memory_space<vmem>>, vector<1x24x8xbf16>
    %36 = vector.shape_cast %35 : vector<1x24x8xbf16> to vector<24x8xbf16>
    %cst_15 = arith.constant dense<0.000000e+00> : vector<384x8xf32>
    %37 = tpu.matmul %31, %36, %cst_15 {dimension_numbers = #tpu.dot_dimension_numbers<[1], [0], [0], [1], [0, 0, 1, 1], [], []>} : vector<384x24xbf16>, vector<24x8xbf16>, vector<384x8xf32> -> vector<384x8xf32>
    %c2 = arith.constant 2 : index
    %c0_16 = arith.constant 0 : index
    %c0_17 = arith.constant 0 : index
    %38 = vector.load %arg3[%c2, %c0_16, %c0_17] : memref<3x24x8xbf16, #tpu.memory_space<vmem>>, vector<1x24x8xbf16>
    %39 = vector.shape_cast %38 : vector<1x24x8xbf16> to vector<24x8xbf16>
    %cst_18 = arith.constant dense<0.000000e+00> : vector<384x8xf32>
    %40 = tpu.matmul %31, %39, %cst_18 {dimension_numbers = #tpu.dot_dimension_numbers<[1], [0], [0], [1], [0, 0, 1, 1], [], []>} : vector<384x24xbf16>, vector<24x8xbf16>, vector<384x8xf32> -> vector<384x8xf32>
    %cst_19 = arith.constant 0.000000e+00 : f32
    %41 = vector.broadcast %cst_19 : f32 to vector<1x8xf32>
    %42 = vector.extract_strided_slice %34 {offsets = [0, 0], sizes = [382, 8], strides = [1, 1]} : vector<384x8xf32> to vector<382x8xf32>
    %43 = vector.extract_strided_slice %37 {offsets = [1, 0], sizes = [382, 8], strides = [1, 1]} : vector<384x8xf32> to vector<382x8xf32>
    %44 = arith.addf %42, %43 : vector<382x8xf32>
    %45 = vector.extract_strided_slice %40 {offsets = [2, 0], sizes = [382, 8], strides = [1, 1]} : vector<384x8xf32> to vector<382x8xf32>
    %46 = arith.addf %44, %45 : vector<382x8xf32>
    %47 = tpu.concatenate %41, %46, %41 in 0 : vector<1x8xf32>, vector<382x8xf32>, vector<1x8xf32> -> vector<384x8xf32>
    %48 = vector.shape_cast %47 : vector<384x8xf32> to vector<16x24x8xf32>
    %cst_20 = arith.constant 0.000000e+00 : f32
    %49 = vector.shape_cast %5 : vector<24x1xi1> to vector<1x24x1xi1>
    %50 = vector.broadcast %49 : vector<1x24x1xi1> to vector<16x24x8xi1>
    %51 = vector.broadcast %cst_20 : f32 to vector<16x24x8xf32>
    %52 = arith.select %50, %48, %51 : vector<16x24x8xi1>, vector<16x24x8xf32>
    %cst_21 = arith.constant dense<0.000000e+00> : vector<8xf32>
    %53 = vector.multi_reduction <add>, %52, %cst_21 [0, 1] : vector<16x24x8xf32> to vector<8xf32>
    %54 = vector.shape_cast %53 : vector<8xf32> to vector<1x1x8xf32>
    %c0_22 = arith.constant 0 : index
    %c0_23 = arith.constant 0 : index
    %c0_24 = arith.constant 0 : index
    %55 = vector.load %arg7[%c0_22, %c0_23, %c0_24] : memref<1x1x8xf32, #tpu.memory_space<vmem>>, vector<1x1x8xf32>
    tpu.vector_store %arg7[%c0_22, %c0_23, %c0_24], %54 {strides = array<i32>} : memref<1x1x8xf32, #tpu.memory_space<vmem>>, vector<1x1x8xf32>,
    %56 = arith.mulf %52, %52 : vector<16x24x8xf32>
    %cst_25 = arith.constant dense<0.000000e+00> : vector<8xf32>
    %57 = vector.multi_reduction <add>, %56, %cst_25 [0, 1] : vector<16x24x8xf32> to vector<8xf32>
    %58 = vector.shape_cast %57 : vector<8xf32> to vector<1x1x8xf32>
    %c0_26 = arith.constant 0 : index
    %c0_27 = arith.constant 0 : index
    %c0_28 = arith.constant 0 : index
    %59 = vector.load %arg8[%c0_26, %c0_27, %c0_28] : memref<1x1x8xf32, #tpu.memory_space<vmem>>, vector<1x1x8xf32>
    tpu.vector_store %arg8[%c0_26, %c0_27, %c0_28], %58 {strides = array<i32>} : memref<1x1x8xf32, #tpu.memory_space<vmem>>, vector<1x1x8xf32>,
    %60 = arith.truncf %52 : vector<16x24x8xf32> to vector<16x24x8xbf16>
    %c0_29 = arith.constant 0 : index
    %c1_30 = arith.constant 1 : index
    %c0_31 = arith.constant 0 : index
    %c0_32 = arith.constant 0 : index
    %61 = vector.load %arg6[%c0_29, %c1_30, %c0_31, %c0_32] : memref<1x18x24x8xbf16, #tpu.memory_space<vmem>>, vector<1x16x24x8xbf16>
    %62 = vector.shape_cast %61 : vector<1x16x24x8xbf16> to vector<16x24x8xbf16>
    %63 = vector.shape_cast %60 : vector<16x24x8xbf16> to vector<1x16x24x8xbf16>
    tpu.vector_store %arg6[%c0_29, %c1_30, %c0_31, %c0_32], %63 {strides = array<i32>} : memref<1x18x24x8xbf16, #tpu.memory_space<vmem>>, vector<1x16x24x8xbf16>,
    %cst_33 = arith.constant 0.000000e+00 : bf16
    %64 = vector.broadcast %cst_33 : bf16 to vector<24x8xbf16>
    %c0_34 = arith.constant 0 : index
    %c0_35 = arith.constant 0 : index
    %c0_36 = arith.constant 0 : index
    %c0_37 = arith.constant 0 : index
    %65 = vector.load %arg6[%c0_34, %c0_35, %c0_36, %c0_37] : memref<1x18x24x8xbf16, #tpu.memory_space<vmem>>, vector<1x1x24x8xbf16>
    %66 = vector.shape_cast %65 : vector<1x1x24x8xbf16> to vector<24x8xbf16>
    %67 = vector.shape_cast %64 : vector<24x8xbf16> to vector<1x1x24x8xbf16>
    tpu.vector_store %arg6[%c0_34, %c0_35, %c0_36, %c0_37], %67 {strides = array<i32>} : memref<1x18x24x8xbf16, #tpu.memory_space<vmem>>, vector<1x1x24x8xbf16>,
    %cst_38 = arith.constant 0.000000e+00 : bf16
    %68 = vector.broadcast %cst_38 : bf16 to vector<24x8xbf16>
    %c0_39 = arith.constant 0 : index
    %c17 = arith.constant 17 : index
    %c0_40 = arith.constant 0 : index
    %c0_41 = arith.constant 0 : index
    %69 = vector.load %arg6[%c0_39, %c17, %c0_40, %c0_41] : memref<1x18x24x8xbf16, #tpu.memory_space<vmem>>, vector<1x1x24x8xbf16>
    %70 = vector.shape_cast %69 : vector<1x1x24x8xbf16> to vector<24x8xbf16>
    %71 = vector.shape_cast %68 : vector<24x8xbf16> to vector<1x1x24x8xbf16>
    tpu.vector_store %arg6[%c0_39, %c17, %c0_40, %c0_41], %71 {strides = array<i32>} : memref<1x18x24x8xbf16, #tpu.memory_space<vmem>>, vector<1x1x24x8xbf16>,
    return
  }
  func.func @transform_0(%arg0: i32, %arg1: i32) -> (i32, i32, i32, i32) {
    %c0_i32 = arith.constant 0 : i32
    %c0_i32_0 = arith.constant 0 : i32
    %c0_i32_1 = arith.constant 0 : i32
    %c0_i32_2 = arith.constant 0 : i32
    return %arg0, %c0_i32, %c0_i32_0, %c0_i32_1 : i32, i32, i32, i32
  }
  func.func @transform_1(%arg0: i32, %arg1: i32) -> (i32, i32, i32) {
    %c0_i32 = arith.constant 0 : i32
    %c0_i32_0 = arith.constant 0 : i32
    %c0_i32_1 = arith.constant 0 : i32
    return %c0_i32, %c0_i32_0, %arg1 : i32, i32, i32
  }
  func.func @transform_2(%arg0: i32, %arg1: i32) -> (i32, i32) {
    %c0_i32 = arith.constant 0 : i32
    %c0_i32_0 = arith.constant 0 : i32
    %c0_i32_1 = arith.constant 0 : i32
    return %c0_i32, %c0_i32_0 : i32, i32
  }
  func.func @transform_3(%arg0: i32, %arg1: i32) -> (i32, i32) {
    %c0_i32 = arith.constant 0 : i32
    %c0_i32_0 = arith.constant 0 : i32
    %c0_i32_1 = arith.constant 0 : i32
    return %c0_i32, %c0_i32_0 : i32, i32
  }
  func.func @transform_4(%arg0: i32, %arg1: i32) -> (i32, i32, i32, i32) {
    %c0_i32 = arith.constant 0 : i32
    %c0_i32_0 = arith.constant 0 : i32
    %c0_i32_1 = arith.constant 0 : i32
    return %arg0, %c0_i32, %c0_i32_0, %arg1 : i32, i32, i32, i32
  }
  func.func @transform_5(%arg0: i32, %arg1: i32) -> (i32, i32, i32) {
    %c0_i32 = arith.constant 0 : i32
    %c0_i32_0 = arith.constant 0 : i32
    return %arg0, %c0_i32, %arg1 : i32, i32, i32
  }
  func.func @transform_6(%arg0: i32, %arg1: i32) -> (i32, i32, i32) {
    %c0_i32 = arith.constant 0 : i32
    %c0_i32_0 = arith.constant 0 : i32
    return %arg0, %c0_i32, %arg1 : i32, i32, i32
  }
}

module attributes {stable_mosaic.version = 11 : i64} {
  func.func @_bn_relu_kernel(%arg0: i32, %arg1: i32, %arg2: memref<432x8xbf16, #tpu.memory_space<vmem>>, %arg3: memref<1x8xf32, #tpu.memory_space<vmem>>, %arg4: memref<1x8xf32, #tpu.memory_space<vmem>>, %arg5: memref<432x8xf32, #tpu.memory_space<vmem>>) attributes {dimension_semantics = [#tpu.dimension_semantics<parallel>, #tpu.dimension_semantics<parallel>], iteration_bounds = array<i64: 2, 1>, scalar_prefetch = 0 : i64, scratch_operands = 0 : i64, tpu.core_type = #tpu.core_type<tc>, window_params = [{transform_indices = @transform_0, window_bounds = array<i64: 432, 8>}, {transform_indices = @transform_1, window_bounds = array<i64: 1, 8>}, {transform_indices = @transform_2, window_bounds = array<i64: 1, 8>}, {transform_indices = @transform_3, window_bounds = array<i64: 432, 8>}]} {
    %c0 = arith.constant 0 : index
    %c0_0 = arith.constant 0 : index
    %0 = vector.load %arg2[%c0, %c0_0] : memref<432x8xbf16, #tpu.memory_space<vmem>>, vector<432x8xbf16>
    %1 = arith.extf %0 : vector<432x8xbf16> to vector<432x8xf32>
    %c0_1 = arith.constant 0 : index
    %c0_2 = arith.constant 0 : index
    %2 = vector.load %arg3[%c0_1, %c0_2] : memref<1x8xf32, #tpu.memory_space<vmem>>, vector<1x8xf32>
    %3 = vector.broadcast %2 : vector<1x8xf32> to vector<432x8xf32>
    %4 = arith.mulf %1, %3 : vector<432x8xf32>
    %c0_3 = arith.constant 0 : index
    %c0_4 = arith.constant 0 : index
    %5 = vector.load %arg4[%c0_3, %c0_4] : memref<1x8xf32, #tpu.memory_space<vmem>>, vector<1x8xf32>
    %6 = vector.broadcast %5 : vector<1x8xf32> to vector<432x8xf32>
    %7 = arith.addf %4, %6 : vector<432x8xf32>
    %cst = arith.constant 0.000000e+00 : f32
    %8 = vector.broadcast %cst : f32 to vector<432x8xf32>
    %9 = arith.maximumf %7, %8 : vector<432x8xf32>
    %c0_5 = arith.constant 0 : index
    %c0_6 = arith.constant 0 : index
    %10 = vector.load %arg5[%c0_5, %c0_6] : memref<432x8xf32, #tpu.memory_space<vmem>>, vector<432x8xf32>
    tpu.vector_store %arg5[%c0_5, %c0_6], %9 {strides = array<i32>} : memref<432x8xf32, #tpu.memory_space<vmem>>, vector<432x8xf32>,
    return
  }
  func.func @transform_0(%arg0: i32, %arg1: i32) -> (i32, i32) {
    %c0_i32 = arith.constant 0 : i32
    return %arg0, %arg1 : i32, i32
  }
  func.func @transform_1(%arg0: i32, %arg1: i32) -> (i32, i32) {
    %c0_i32 = arith.constant 0 : i32
    %c0_i32_0 = arith.constant 0 : i32
    return %c0_i32, %arg1 : i32, i32
  }
  func.func @transform_2(%arg0: i32, %arg1: i32) -> (i32, i32) {
    %c0_i32 = arith.constant 0 : i32
    %c0_i32_0 = arith.constant 0 : i32
    return %c0_i32, %arg1 : i32, i32
  }
  func.func @transform_3(%arg0: i32, %arg1: i32) -> (i32, i32) {
    %c0_i32 = arith.constant 0 : i32
    return %arg0, %arg1 : i32, i32
  }
}

</mosaic_0001>

<llo_original>
// kernel: double_conv_forward.5
$region0: #{double_conv_forward.5}
  #allocation0 [shape = 'u32[]', space=smem, size = 0x4, offset = 0x4, fixed_abs, tag = 'smem constant byte address 0x4 - core index']
  #allocation1 [shape = 'u32[72,128]{1,0:T(1,128)}', space=vmem, size = 0x9000, scoped, tag = 'internal scratch']
  %s0 = inlined_call_operand.vmem [shape: bf16[864,8], index: 0, kind: input, shape index: {}]
  %s1 = inlined_call_operand.vmem [shape: f32[1,8], index: 1, kind: input, shape index: {}]
  %s2 = inlined_call_operand.vmem [shape: f32[1,8], index: 2, kind: input, shape index: {}]
  %s3 = inlined_call_operand.vmem [shape: f32[864,8], index: 3, kind: output, shape index: {}]
  %s4 = sld [smem:[#allocation0]]
  $region45: #{double_conv_forward.5} parent=0
    _
  %s6 = ssub.s32 1, %s4
  %s7 = scalar_select 0, %s6, %s4
  loop: start=0, step=1, limit=4
  $region2: #{double_conv_forward.5} parent=0 // loop_pre_header
    _
  $region3: #{double_conv_forward.5} parent=0 // loop_header
    %s9 = sphi 0, %s13
    %p10 = scmp.ge.s32.totalorder %s9, 4
    %s16 = sphi 0, %s28
    %s17 = sphi 0, %s24
    %s18 = sphi 0, %s16
    %s19 = sphi 0, %s17
    %s20 = sphi 0, %s18
    %s21 = sphi 0, %s19
    %s33 = sphi 0, %s35
    %s36 = sphi 0, %s33
    %s37 = sphi 0, %s36
    %s53 = sphi 0, %s37
    %s59 = sphi 0, %s61
    %s62 = sphi 0, %s59
    %s63 = sphi 0, %s62
    %s79 = sphi 0, %s63
    %s85 = sphi 0, %s87
    %s88 = sphi 0, %s85
    %s89 = sphi 0, %s88
    %s105 = sphi 0, %s89
    %s113 = sphi 0, %s115
    %s116 = sphi 0, %s113
    %s117 = sphi 0, %s116
    %s133 = sphi 0, %s117
  $region4: #{double_conv_forward.5} parent=0 // loop_header_branch
    %12 = sbr.rel (%p10) target = $region8
  $region5: #{double_conv_forward.5} parent=0 // loop_body
    %s14 = ssub.s32 %s9, 1
    %s15 = ssub.s32 %s9, 2
    %s22 = sadd.s32 1, %s17
    %p23 = scmp.ge.s32.totalorder %s22, 1
    %s24 = scalar_select %p23, 0, %s22
    %s25 = sadd.s32 1, %s16
    %s26 = scalar_select %p23, %s25, %s16
    %p27 = scmp.ge.s32.totalorder %s26, 2
    %s28 = scalar_select %p27, 0, %s26
    %s29 = ssub.s32 %s16, %s28
    %s30 = ssub.s32 %s17, %s24
    %s31 = sor.u32 %s29, %s30
    %p32 = scmp.eq.s32.totalorder %s31, 0
    %s34 = sadd.s32 %s33, 1
    %s35 = scalar_select %p32, %s33, %s34
    %p38 = pneg %p32
    %p39 = scmp.eq.s32.totalorder %s9, 1
    %p40 = por %p38, %p39
    %p41 = scmp.ne.s32.totalorder %s33, %s36
    %p42 = scmp.eq.s32.totalorder %s9, 0
    %p43 = por %p41, %p42
    %p44 = scmp.ne.s32.totalorder %s33, %s36
    %p45 = scmp.eq.s32.totalorder %s14, 1
    %p46 = por %p44, %p45
    %p47 = scmp.ne.s32.totalorder %s36, %s37
    %p48 = scmp.eq.s32.totalorder %s14, 0
    %p49 = por %p47, %p48
    %p50 = scmp.ne.s32.totalorder %s36, %s37
    %p51 = scmp.eq.s32.totalorder %s15, 1
    %p52 = por %p50, %p51
    %p54 = scmp.ne.s32.totalorder %s37, %s53
    %p55 = scmp.eq.s32.totalorder %s15, 0
    %p56 = por %p54, %p55
    %s57 = ssub.s32 %s17, %s24
    %p58 = scmp.eq.s32.totalorder %s57, 0
    %s60 = sadd.s32 %s59, 1
    %s61 = scalar_select %p58, %s59, %s60
    %p64 = pneg %p58
    %p65 = scmp.eq.s32.totalorder %s9, 1
    %p66 = por %p64, %p65
    %p67 = scmp.ne.s32.totalorder %s59, %s62
    %p68 = scmp.eq.s32.totalorder %s9, 0
    %p69 = por %p67, %p68
    %p70 = scmp.ne.s32.totalorder %s59, %s62
    %p71 = scmp.eq.s32.totalorder %s14, 1
    %p72 = por %p70, %p71
    %p73 = scmp.ne.s32.totalorder %s62, %s63
    %p74 = scmp.eq.s32.totalorder %s14, 0
    %p75 = por %p73, %p74
    %p76 = scmp.ne.s32.totalorder %s62, %s63
    %p77 = scmp.eq.s32.totalorder %s15, 1
    %p78 = por %p76, %p77
    %p80 = scmp.ne.s32.totalorder %s63, %s79
    %p81 = scmp.eq.s32.totalorder %s15, 0
    %p82 = por %p80, %p81
    %s83 = ssub.s32 %s17, %s24
    %p84 = scmp.eq.s32.totalorder %s83, 0
    %s86 = sadd.s32 %s85, 1
    %s87 = scalar_select %p84, %s85, %s86
    %p90 = pneg %p84
    %p91 = scmp.eq.s32.totalorder %s9, 1
    %p92 = por %p90, %p91
    %p93 = scmp.ne.s32.totalorder %s85, %s88
    %p94 = scmp.eq.s32.totalorder %s9, 0
    %p95 = por %p93, %p94
    %p96 = scmp.ne.s32.totalorder %s85, %s88
    %p97 = scmp.eq.s32.totalorder %s14, 1
    %p98 = por %p96, %p97
    %p99 = scmp.ne.s32.totalorder %s88, %s89
    %p100 = scmp.eq.s32.totalorder %s14, 0
    %p101 = por %p99, %p100
    %p102 = scmp.ne.s32.totalorder %s88, %s89
    %p103 = scmp.eq.s32.totalorder %s15, 1
    %p104 = por %p102, %p103
    %p106 = scmp.ne.s32.totalorder %s89, %s105
    %p107 = scmp.eq.s32.totalorder %s15, 0
    %p108 = por %p106, %p107
    %s109 = ssub.s32 %s16, %s28
    %s110 = ssub.s32 %s17, %s24
    %s111 = sor.u32 %s109, %s110
    %p112 = scmp.eq.s32.totalorder %s111, 0
    %s114 = sadd.s32 %s113, 1
    %s115 = scalar_select %p112, %s113, %s114
    %p118 = pneg %p112
    %p119 = scmp.eq.s32.totalorder %s9, 1
    %p120 = por %p118, %p119
    %p121 = scmp.ne.s32.totalorder %s113, %s116
    %p122 = scmp.eq.s32.totalorder %s9, 0
    %p123 = por %p121, %p122
    %p124 = scmp.ne.s32.totalorder %s113, %s116
    %p125 = scmp.eq.s32.totalorder %s14, 1
    %p126 = por %p124, %p125
    %p127 = scmp.ne.s32.totalorder %s116, %s117
    %p128 = scmp.eq.s32.totalorder %s14, 0
    %p129 = por %p127, %p128
    %p130 = scmp.ne.s32.totalorder %s116, %s117
    %p131 = scmp.eq.s32.totalorder %s15, 1
    %p132 = por %p130, %p131
    %p134 = scmp.ne.s32.totalorder %s117, %s133
    %p135 = scmp.eq.s32.totalorder %s15, 0
    %p136 = por %p134, %p135
    %p137 = scmp.le.s32.totalorder 1, %s9
    %p138 = scmp.lt.s32.totalorder %s9, 3
    %p139 = pnand %p137, %p138
    %p140 = pneg %p139
    // Predicated region
    $region9: #{double_conv_forward.5} parent=5 // pred_check
      _
    $region10: #{double_conv_forward.5} parent=5 // pred_check_branch
      %142 = sbr.rel (%p139) target = $region12
    $region11: #{double_conv_forward.5} parent=5 // pred_region
      %s143 = ssub.s32 %s9, 1
      // Predicated region
      $region13: #{double_conv_forward.5} parent=11 // pred_check
        %p144 = pneg %p75
      $region14: #{double_conv_forward.5} parent=11 // pred_check_branch
        %146 = sbr.rel (%p144) target = $region16
      $region15: #{double_conv_forward.5} parent=11 // pred_region
        %p147 = scmp.lt.s32.totalorder %s19, 0
        %s148 = scalar_select %p147, %s19, 0
        %s149 = scalar_lea.vmem %s1, %s148
      $region16: #{double_conv_forward.5} parent=11 // pred_fallthru
        _
      // Predicated region
      $region17: #{double_conv_forward.5} parent=11 // pred_check
        %p150 = pneg %p101
      $region18: #{double_conv_forward.5} parent=11 // pred_check_branch
        %152 = sbr.rel (%p150) target = $region20
      $region19: #{double_conv_forward.5} parent=11 // pred_region
        %p153 = scmp.lt.s32.totalorder %s19, 0
        %s154 = scalar_select %p153, %s19, 0
        %s155 = scalar_lea.vmem %s2, %s154
      $region20: #{double_conv_forward.5} parent=11 // pred_fallthru
        _
    $region12: #{double_conv_forward.5} parent=5 // pred_fallthru
      _
    %p156 = scmp.lt.s32.totalorder %s9, 2
    // Predicated region
    $region21: #{double_conv_forward.5} parent=5 // pred_check
      %p157 = pneg %p156
    $region22: #{double_conv_forward.5} parent=5 // pred_check_branch
      %159 = sbr.rel (%p157) target = $region24
    $region23: #{double_conv_forward.5} parent=5 // pred_region
      // Predicated region
      $region25: #{double_conv_forward.5} parent=23 // pred_check
        %p160 = pneg %p43
      $region26: #{double_conv_forward.5} parent=23 // pred_check_branch
        %162 = sbr.rel (%p160) target = $region28
      $region27: #{double_conv_forward.5} parent=23 // pred_region
        %s163 = smul.u32 54, %s16
        %p164 = scmp.lt.s32.totalorder %s163, 107
        %s165 = scalar_select %p164, %s163, 107
        %p166 = scmp.lt.s32.totalorder %s17, 0
        %s167 = scalar_select %p166, %s17, 0
        %s168 = sadd.s32 %s167, %s165
        %s169 = smul.addr %s168, 4
        %s170 = scalar_lea.vmem %s0, %s169
        %s171 = smul.u32 54, %s16
      $region28: #{double_conv_forward.5} parent=23 // pred_fallthru
        _
    $region24: #{double_conv_forward.5} parent=5 // pred_fallthru
      _
    %p172 = scmp.le.s32.totalorder 1, %s9
    %p173 = scmp.lt.s32.totalorder %s9, 3
    %p174 = pnand %p172, %p173
    %p175 = pneg %p174
    // Predicated region
    $region29: #{double_conv_forward.5} parent=5 // pred_check
      _
    $region30: #{double_conv_forward.5} parent=5 // pred_check_branch
      %177 = sbr.rel (%p174) target = $region32
    $region31: #{double_conv_forward.5} parent=5 // pred_region
      %s178 = ssub.s32 %s9, 1
      %s179 = smul.u32 54, %s18
      %p180 = scmp.lt.s32.totalorder %s179, 107
      %s181 = scalar_select %p180, %s179, 107
      %p182 = scmp.lt.s32.totalorder %s19, 0
      %s183 = scalar_select %p182, %s19, 0
      %s184 = sadd.s32 %s183, %s181
      %s185 = smul.addr %s184, 4
      %s186 = scalar_lea.vmem %s0, %s185
      %p187 = pneg %p49
      %p188 = pneg %p46
      %p189 = scmp.lt.s32.totalorder %s19, 0
      %s190 = scalar_select %p189, %s19, 0
      %s191 = scalar_lea.vmem %s1, %s190
      %p192 = pneg %p75
      %p193 = pneg %p72
      %p194 = scmp.lt.s32.totalorder %s19, 0
      %s195 = scalar_select %p194, %s19, 0
      %s196 = scalar_lea.vmem %s2, %s195
      %p197 = pneg %p101
      %p198 = pneg %p98
      %p199 = pneg %p129
      %p200 = pneg %p126
      %s201 = smul.u32 54, %s18
      %p202 = scmp.lt.s32.totalorder %s201, 107
      %s203 = scalar_select %p202, %s201, 107
      %p204 = scmp.lt.s32.totalorder %s19, 0
      %s205 = scalar_select %p204, %s19, 0
      %s206 = sadd.s32 %s205, %s203
      %s207 = smul.addr %s206, 8
      %s208 = scalar_lea.vmem %s3, %s207
      %s209 = smul.u32 54, %s18
      %p210 = scmp.lt.s32.totalorder %s209, 107
      %s211 = scalar_select %p210, %s209, 107
      %p212 = scmp.lt.s32.totalorder %s19, 0
      %s213 = scalar_select %p212, %s19, 0
      %s214 = sadd.s32 %s213, %s211
      %s215 = smul.addr %s214, 4
      %s216 = scalar_lea.vmem %s0, %s215
      %s217 = smul.u32 54, %s18
      %p218 = scmp.lt.s32.totalorder %s19, 0
      %s219 = scalar_select %p218, %s19, 0
      %s220 = scalar_lea.vmem %s1, %s219
      %p221 = scmp.lt.s32.totalorder %s19, 0
      %s222 = scalar_select %p221, %s19, 0
      %s223 = scalar_lea.vmem %s2, %s222
      %s224 = smul.u32 54, %s18
      %p225 = scmp.lt.s32.totalorder %s224, 107
      %s226 = scalar_select %p225, %s224, 107
      %p227 = scmp.lt.s32.totalorder %s19, 0
      %s228 = scalar_select %p227, %s19, 0
      %s229 = sadd.s32 %s228, %s226
      %s230 = smul.addr %s229, 8
      %s231 = scalar_lea.vmem %s3, %s230
      %s232 = smul.u32 54, %s18
      %v233 = vld [vmem:[%s216] sm:$0xf]
      %v234 = vld [vmem:[%s216 + $0x4] sm:$0xf]
      %v235 = vld [vmem:[%s216 + $0x8] sm:$0xf]
      %v236 = vld [vmem:[%s216 + $0xc] sm:$0xf]
      %v237 = vld [vmem:[%s216 + $0x10] sm:$0xf]
      %v238 = vld [vmem:[%s216 + $0x14] sm:$0xf]
      %v239 = vld [vmem:[%s216 + $0x18] sm:$0xf]
      %v240 = vld [vmem:[%s216 + $0x1c] sm:$0xf]
      %v241 = vld [vmem:[%s216 + $0x20] sm:$0xf]
      %v242 = vld [vmem:[%s216 + $0x24] sm:$0xf]
      %v243 = vld [vmem:[%s216 + $0x28] sm:$0xf]
      %v244 = vld [vmem:[%s216 + $0x2c] sm:$0xf]
      %v245 = vld [vmem:[%s216 + $0x30] sm:$0xf]
      %v246 = vld [vmem:[%s216 + $0x34] sm:$0xf]
      %v247 = vld [vmem:[%s216 + $0x38] sm:$0xf]
      %v248 = vld [vmem:[%s216 + $0x3c] sm:$0xf]
      %v249 = vld [vmem:[%s216 + $0x40] sm:$0xf]
      %v250 = vld [vmem:[%s216 + $0x44] sm:$0xf]
      %v251 = vld [vmem:[%s216 + $0x48] sm:$0xf]
      %v252 = vld [vmem:[%s216 + $0x4c] sm:$0xf]
      %v253 = vld [vmem:[%s216 + $0x50] sm:$0xf]
      %v254 = vld [vmem:[%s216 + $0x54] sm:$0xf]
      %v255 = vld [vmem:[%s216 + $0x58] sm:$0xf]
      %v256 = vld [vmem:[%s216 + $0x5c] sm:$0xf]
      %v257 = vld [vmem:[%s216 + $0x60] sm:$0xf]
      %v258 = vld [vmem:[%s216 + $0x64] sm:$0xf]
      %v259 = vld [vmem:[%s216 + $0x68] sm:$0xf]
      %v260 = vld [vmem:[%s216 + $0x6c] sm:$0xf]
      %v261 = vld [vmem:[%s216 + $0x70] sm:$0xf]
      %v262 = vld [vmem:[%s216 + $0x74] sm:$0xf]
      %v263 = vld [vmem:[%s216 + $0x78] sm:$0xf]
      %v264 = vld [vmem:[%s216 + $0x7c] sm:$0xf]
      %v265 = vld [vmem:[%s216 + $0x80] sm:$0xf]
      %v266 = vld [vmem:[%s216 + $0x84] sm:$0xf]
      %v267 = vld [vmem:[%s216 + $0x88] sm:$0xf]
      %v268 = vld [vmem:[%s216 + $0x8c] sm:$0xf]
      %v269 = vld [vmem:[%s216 + $0x90] sm:$0xf]
      %v270 = vld [vmem:[%s216 + $0x94] sm:$0xf]
      %v271 = vld [vmem:[%s216 + $0x98] sm:$0xf]
      %v272 = vld [vmem:[%s216 + $0x9c] sm:$0xf]
      %v273 = vld [vmem:[%s216 + $0xa0] sm:$0xf]
      %v274 = vld [vmem:[%s216 + $0xa4] sm:$0xf]
      %v275 = vld [vmem:[%s216 + $0xa8] sm:$0xf]
      %v276 = vld [vmem:[%s216 + $0xac] sm:$0xf]
      %v277 = vld [vmem:[%s216 + $0xb0] sm:$0xf]
      %v278 = vld [vmem:[%s216 + $0xb4] sm:$0xf]
      %v279 = vld [vmem:[%s216 + $0xb8] sm:$0xf]
      %v280 = vld [vmem:[%s216 + $0xbc] sm:$0xf]
      %v281 = vld [vmem:[%s216 + $0xc0] sm:$0xf]
      %v282 = vld [vmem:[%s216 + $0xc4] sm:$0xf]
      %v283 = vld [vmem:[%s216 + $0xc8] sm:$0xf]
      %v284 = vld [vmem:[%s216 + $0xcc] sm:$0xf]
      %v285 = vld [vmem:[%s216 + $0xd0] sm:$0xf]
      %v286 = vld [vmem:[%s216 + $0xd4] sm:$0xf]
      %v287 = vunpack.c.l.bf16 %v233
      %v288 = vunpack.c.l.bf16 %v234
      %v289 = vunpack.c.l.bf16 %v235
      %v290 = vunpack.c.l.bf16 %v236
      %v291 = vunpack.c.l.bf16 %v237
      %v292 = vunpack.c.l.bf16 %v238
      %v293 = vunpack.c.l.bf16 %v239
      %v294 = vunpack.c.l.bf16 %v240
      %v295 = vunpack.c.l.bf16 %v241
      %v296 = vunpack.c.l.bf16 %v242
      %v297 = vunpack.c.l.bf16 %v243
      %v298 = vunpack.c.l.bf16 %v244
      %v299 = vunpack.c.l.bf16 %v245
      %v300 = vunpack.c.l.bf16 %v246
      %v301 = vunpack.c.l.bf16 %v247
      %v302 = vunpack.c.l.bf16 %v248
      %v303 = vunpack.c.l.bf16 %v249
      %v304 = vunpack.c.l.bf16 %v250
      %v305 = vunpack.c.l.bf16 %v251
      %v306 = vunpack.c.l.bf16 %v252
      %v307 = vunpack.c.l.bf16 %v253
      %v308 = vunpack.c.l.bf16 %v254
      %v309 = vunpack.c.l.bf16 %v255
      %v310 = vunpack.c.l.bf16 %v256
      %v311 = vunpack.c.l.bf16 %v257
      %v312 = vunpack.c.l.bf16 %v258
      %v313 = vunpack.c.l.bf16 %v259
      %v314 = vunpack.c.l.bf16 %v260
      %v315 = vunpack.c.l.bf16 %v261
      %v316 = vunpack.c.l.bf16 %v262
      %v317 = vunpack.c.l.bf16 %v263
      %v318 = vunpack.c.l.bf16 %v264
      %v319 = vunpack.c.l.bf16 %v265
      %v320 = vunpack.c.l.bf16 %v266
      %v321 = vunpack.c.l.bf16 %v267
      %v322 = vunpack.c.l.bf16 %v268
      %v323 = vunpack.c.l.bf16 %v269
      %v324 = vunpack.c.l.bf16 %v270
      %v325 = vunpack.c.l.bf16 %v271
      %v326 = vunpack.c.l.bf16 %v272
      %v327 = vunpack.c.l.bf16 %v273
      %v328 = vunpack.c.l.bf16 %v274
      %v329 = vunpack.c.l.bf16 %v275
      %v330 = vunpack.c.l.bf16 %v276
      %v331 = vunpack.c.l.bf16 %v277
      %v332 = vunpack.c.l.bf16 %v278
      %v333 = vunpack.c.l.bf16 %v279
      %v334 = vunpack.c.l.bf16 %v280
      %v335 = vunpack.c.l.bf16 %v281
      %v336 = vunpack.c.l.bf16 %v282
      %v337 = vunpack.c.l.bf16 %v283
      %v338 = vunpack.c.l.bf16 %v284
      %v339 = vunpack.c.l.bf16 %v285
      %v340 = vunpack.c.l.bf16 %v286
      %v341 = vld [vmem:[%s220] sm:$0x1]
      %v343 = vperm.slane %v341, 0
      %v345 = vmul.f32 %v287, %v343
      %v346 = vmul.f32 %v288, %v343
      %v347 = vmul.f32 %v289, %v343
      %v348 = vmul.f32 %v290, %v343
      %v349 = vmul.f32 %v291, %v343
      %v350 = vmul.f32 %v292, %v343
      %v351 = vmul.f32 %v293, %v343
      %v352 = vmul.f32 %v294, %v343
      %v353 = vmul.f32 %v295, %v343
      %v354 = vmul.f32 %v296, %v343
      %v355 = vmul.f32 %v297, %v343
      %v356 = vmul.f32 %v298, %v343
      %v357 = vmul.f32 %v299, %v343
      %v358 = vmul.f32 %v300, %v343
      %v359 = vmul.f32 %v301, %v343
      %v360 = vmul.f32 %v302, %v343
      %v361 = vmul.f32 %v303, %v343
      %v362 = vmul.f32 %v304, %v343
      %v363 = vmul.f32 %v305, %v343
      %v364 = vmul.f32 %v306, %v343
      %v365 = vmul.f32 %v307, %v343
      %v366 = vmul.f32 %v308, %v343
      %v367 = vmul.f32 %v309, %v343
      %v368 = vmul.f32 %v310, %v343
      %v369 = vmul.f32 %v311, %v343
      %v370 = vmul.f32 %v312, %v343
      %v371 = vmul.f32 %v313, %v343
      %v372 = vmul.f32 %v314, %v343
      %v373 = vmul.f32 %v315, %v343
      %v374 = vmul.f32 %v316, %v343
      %v375 = vmul.f32 %v317, %v343
      %v376 = vmul.f32 %v318, %v343
      %v377 = vmul.f32 %v319, %v343
      %v378 = vmul.f32 %v320, %v343
      %v379 = vmul.f32 %v321, %v343
      %v380 = vmul.f32 %v322, %v343
      %v381 = vmul.f32 %v323, %v343
      %v382 = vmul.f32 %v324, %v343
      %v383 = vmul.f32 %v325, %v343
      %v384 = vmul.f32 %v326, %v343
      %v385 = vmul.f32 %v327, %v343
      %v386 = vmul.f32 %v328, %v343
      %v387 = vmul.f32 %v329, %v343
      %v388 = vmul.f32 %v330, %v343
      %v389 = vmul.f32 %v331, %v343
      %v390 = vmul.f32 %v332, %v343
      %v391 = vmul.f32 %v333, %v343
      %v392 = vmul.f32 %v334, %v343
      %v393 = vmul.f32 %v335, %v343
      %v394 = vmul.f32 %v336, %v343
      %v395 = vmul.f32 %v337, %v343
      %v396 = vmul.f32 %v338, %v343
      %v397 = vmul.f32 %v339, %v343
      %v398 = vmul.f32 %v340, %v343
      %v399 = vld [vmem:[%s223] sm:$0x1]
      %v401 = vperm.slane %v399, 0
      %v403 = vadd.f32 %v345, %v401
      %v404 = vadd.f32 %v346, %v401
      %v405 = vadd.f32 %v347, %v401
      %v406 = vadd.f32 %v348, %v401
      %v407 = vadd.f32 %v349, %v401
      %v408 = vadd.f32 %v350, %v401
      %v409 = vadd.f32 %v351, %v401
      %v410 = vadd.f32 %v352, %v401
      %v411 = vadd.f32 %v353, %v401
      %v412 = vadd.f32 %v354, %v401
      %v413 = vadd.f32 %v355, %v401
      %v414 = vadd.f32 %v356, %v401
      %v415 = vadd.f32 %v357, %v401
      %v416 = vadd.f32 %v358, %v401
      %v417 = vadd.f32 %v359, %v401
      %v418 = vadd.f32 %v360, %v401
      %v419 = vadd.f32 %v361, %v401
      %v420 = vadd.f32 %v362, %v401
      %v421 = vadd.f32 %v363, %v401
      %v422 = vadd.f32 %v364, %v401
      %v423 = vadd.f32 %v365, %v401
      %v424 = vadd.f32 %v366, %v401
      %v425 = vadd.f32 %v367, %v401
      %v426 = vadd.f32 %v368, %v401
      %v427 = vadd.f32 %v369, %v401
      %v428 = vadd.f32 %v370, %v401
      %v429 = vadd.f32 %v371, %v401
      %v430 = vadd.f32 %v372, %v401
      %v431 = vadd.f32 %v373, %v401
      %v432 = vadd.f32 %v374, %v401
      %v433 = vadd.f32 %v375, %v401
      %v434 = vadd.f32 %v376, %v401
      %v435 = vadd.f32 %v377, %v401
      %v436 = vadd.f32 %v378, %v401
      %v437 = vadd.f32 %v379, %v401
      %v438 = vadd.f32 %v380, %v401
      %v439 = vadd.f32 %v381, %v401
      %v440 = vadd.f32 %v382, %v401
      %v441 = vadd.f32 %v383, %v401
      %v442 = vadd.f32 %v384, %v401
      %v443 = vadd.f32 %v385, %v401
      %v444 = vadd.f32 %v386, %v401
      %v445 = vadd.f32 %v387, %v401
      %v446 = vadd.f32 %v388, %v401
      %v447 = vadd.f32 %v389, %v401
      %v448 = vadd.f32 %v390, %v401
      %v449 = vadd.f32 %v391, %v401
      %v450 = vadd.f32 %v392, %v401
      %v451 = vadd.f32 %v393, %v401
      %v452 = vadd.f32 %v394, %v401
      %v453 = vadd.f32 %v395, %v401
      %v454 = vadd.f32 %v396, %v401
      %v455 = vadd.f32 %v397, %v401
      %v456 = vadd.f32 %v398, %v401
      %v457 = vmax.f32 %v403, 0.0
      %v458 = vmax.f32 %v404, 0.0
      %v459 = vmax.f32 %v405, 0.0
      %v460 = vmax.f32 %v406, 0.0
      %v461 = vmax.f32 %v407, 0.0
      %v462 = vmax.f32 %v408, 0.0
      %v463 = vmax.f32 %v409, 0.0
      %v464 = vmax.f32 %v410, 0.0
      %v465 = vmax.f32 %v411, 0.0
      %v466 = vmax.f32 %v412, 0.0
      %v467 = vmax.f32 %v413, 0.0
      %v468 = vmax.f32 %v414, 0.0
      %v469 = vmax.f32 %v415, 0.0
      %v470 = vmax.f32 %v416, 0.0
      %v471 = vmax.f32 %v417, 0.0
      %v472 = vmax.f32 %v418, 0.0
      %v473 = vmax.f32 %v419, 0.0
      %v474 = vmax.f32 %v420, 0.0
      %v475 = vmax.f32 %v421, 0.0
      %v476 = vmax.f32 %v422, 0.0
      %v477 = vmax.f32 %v423, 0.0
      %v478 = vmax.f32 %v424, 0.0
      %v479 = vmax.f32 %v425, 0.0
      %v480 = vmax.f32 %v426, 0.0
      %v481 = vmax.f32 %v427, 0.0
      %v482 = vmax.f32 %v428, 0.0
      %v483 = vmax.f32 %v429, 0.0
      %v484 = vmax.f32 %v430, 0.0
      %v485 = vmax.f32 %v431, 0.0
      %v486 = vmax.f32 %v432, 0.0
      %v487 = vmax.f32 %v433, 0.0
      %v488 = vmax.f32 %v434, 0.0
      %v489 = vmax.f32 %v435, 0.0
      %v490 = vmax.f32 %v436, 0.0
      %v491 = vmax.f32 %v437, 0.0
      %v492 = vmax.f32 %v438, 0.0
      %v493 = vmax.f32 %v439, 0.0
      %v494 = vmax.f32 %v440, 0.0
      %v495 = vmax.f32 %v441, 0.0
      %v496 = vmax.f32 %v442, 0.0
      %v497 = vmax.f32 %v443, 0.0
      %v498 = vmax.f32 %v444, 0.0
      %v499 = vmax.f32 %v445, 0.0
      %v500 = vmax.f32 %v446, 0.0
      %v501 = vmax.f32 %v447, 0.0
      %v502 = vmax.f32 %v448, 0.0
      %v503 = vmax.f32 %v449, 0.0
      %v504 = vmax.f32 %v450, 0.0
      %v505 = vmax.f32 %v451, 0.0
      %v506 = vmax.f32 %v452, 0.0
      %v507 = vmax.f32 %v453, 0.0
      %v508 = vmax.f32 %v454, 0.0
      %v509 = vmax.f32 %v455, 0.0
      %v510 = vmax.f32 %v456, 0.0
      %vm511 = vcmask 64512
      %512 = vst.msk [vmem:[%s231] sm:$0xff] %vm511, %v457
      %513 = vst.msk [vmem:[%s231 + $0x8] sm:$0xff] %vm511, %v458
      %514 = vst.msk [vmem:[%s231 + $0x10] sm:$0xff] %vm511, %v459
      %515 = vst.msk [vmem:[%s231 + $0x18] sm:$0xff] %vm511, %v460
      %516 = vst.msk [vmem:[%s231 + $0x20] sm:$0xff] %vm511, %v461
      %517 = vst.msk [vmem:[%s231 + $0x28] sm:$0xff] %vm511, %v462
      %518 = vst.msk [vmem:[%s231 + $0x30] sm:$0xff] %vm511, %v463
      %519 = vst.msk [vmem:[%s231 + $0x38] sm:$0xff] %vm511, %v464
      %520 = vst.msk [vmem:[%s231 + $0x40] sm:$0xff] %vm511, %v465
      %521 = vst.msk [vmem:[%s231 + $0x48] sm:$0xff] %vm511, %v466
      %522 = vst.msk [vmem:[%s231 + $0x50] sm:$0xff] %vm511, %v467
      %523 = vst.msk [vmem:[%s231 + $0x58] sm:$0xff] %vm511, %v468
      %524 = vst.msk [vmem:[%s231 + $0x60] sm:$0xff] %vm511, %v469
      %525 = vst.msk [vmem:[%s231 + $0x68] sm:$0xff] %vm511, %v470
      %526 = vst.msk [vmem:[%s231 + $0x70] sm:$0xff] %vm511, %v471
      %527 = vst.msk [vmem:[%s231 + $0x78] sm:$0xff] %vm511, %v472
      %528 = vst.msk [vmem:[%s231 + $0x80] sm:$0xff] %vm511, %v473
      %529 = vst.msk [vmem:[%s231 + $0x88] sm:$0xff] %vm511, %v474
      %530 = vst.msk [vmem:[%s231 + $0x90] sm:$0xff] %vm511, %v475
      %531 = vst.msk [vmem:[%s231 + $0x98] sm:$0xff] %vm511, %v476
      %532 = vst.msk [vmem:[%s231 + $0xa0] sm:$0xff] %vm511, %v477
      %533 = vst.msk [vmem:[%s231 + $0xa8] sm:$0xff] %vm511, %v478
      %534 = vst.msk [vmem:[%s231 + $0xb0] sm:$0xff] %vm511, %v479
      %535 = vst.msk [vmem:[%s231 + $0xb8] sm:$0xff] %vm511, %v480
      %536 = vst.msk [vmem:[%s231 + $0xc0] sm:$0xff] %vm511, %v481
      %537 = vst.msk [vmem:[%s231 + $0xc8] sm:$0xff] %vm511, %v482
      %538 = vst.msk [vmem:[%s231 + $0xd0] sm:$0xff] %vm511, %v483
      %539 = vst.msk [vmem:[%s231 + $0xd8] sm:$0xff] %vm511, %v484
      %540 = vst.msk [vmem:[%s231 + $0xe0] sm:$0xff] %vm511, %v485
      %541 = vst.msk [vmem:[%s231 + $0xe8] sm:$0xff] %vm511, %v486
      %542 = vst.msk [vmem:[%s231 + $0xf0] sm:$0xff] %vm511, %v487
      %543 = vst.msk [vmem:[%s231 + $0xf8] sm:$0xff] %vm511, %v488
      %544 = vst.msk [vmem:[%s231 + $0x100] sm:$0xff] %vm511, %v489
      %545 = vst.msk [vmem:[%s231 + $0x108] sm:$0xff] %vm511, %v490
      %546 = vst.msk [vmem:[%s231 + $0x110] sm:$0xff] %vm511, %v491
      %547 = vst.msk [vmem:[%s231 + $0x118] sm:$0xff] %vm511, %v492
      %548 = vst.msk [vmem:[%s231 + $0x120] sm:$0xff] %vm511, %v493
      %549 = vst.msk [vmem:[%s231 + $0x128] sm:$0xff] %vm511, %v494
      %550 = vst.msk [vmem:[%s231 + $0x130] sm:$0xff] %vm511, %v495
      %551 = vst.msk [vmem:[%s231 + $0x138] sm:$0xff] %vm511, %v496
      %552 = vst.msk [vmem:[%s231 + $0x140] sm:$0xff] %vm511, %v497
      %553 = vst.msk [vmem:[%s231 + $0x148] sm:$0xff] %vm511, %v498
      %554 = vst.msk [vmem:[%s231 + $0x150] sm:$0xff] %vm511, %v499
      %555 = vst.msk [vmem:[%s231 + $0x158] sm:$0xff] %vm511, %v500
      %556 = vst.msk [vmem:[%s231 + $0x160] sm:$0xff] %vm511, %v501
      %557 = vst.msk [vmem:[%s231 + $0x168] sm:$0xff] %vm511, %v502
      %558 = vst.msk [vmem:[%s231 + $0x170] sm:$0xff] %vm511, %v503
      %559 = vst.msk [vmem:[%s231 + $0x178] sm:$0xff] %vm511, %v504
      %560 = vst.msk [vmem:[%s231 + $0x180] sm:$0xff] %vm511, %v505
      %561 = vst.msk [vmem:[%s231 + $0x188] sm:$0xff] %vm511, %v506
      %562 = vst.msk [vmem:[%s231 + $0x190] sm:$0xff] %vm511, %v507
      %563 = vst.msk [vmem:[%s231 + $0x198] sm:$0xff] %vm511, %v508
      %564 = vst.msk [vmem:[%s231 + $0x1a0] sm:$0xff] %vm511, %v509
      %565 = vst.msk [vmem:[%s231 + $0x1a8] sm:$0xff] %vm511, %v510
      %s566 = smul.u32 54, %s18
      %p567 = scmp.lt.s32.totalorder %s566, 107
      %s568 = scalar_select %p567, %s566, 107
      %p569 = scmp.lt.s32.totalorder %s19, 0
      %s570 = scalar_select %p569, %s19, 0
      %s571 = sadd.s32 %s570, %s568
      %s572 = smul.addr %s571, 8
      %s573 = scalar_lea.vmem %s3, %s572
      // Predicated region
      $region33: #{double_conv_forward.5} parent=31 // pred_check
        %p574 = pneg %p126
      $region34: #{double_conv_forward.5} parent=31 // pred_check_branch
        %576 = sbr.rel (%p574) target = $region36
      $region35: #{double_conv_forward.5} parent=31 // pred_region
        %s577 = smul.u32 54, %s18
      $region36: #{double_conv_forward.5} parent=31 // pred_fallthru
        _
    $region32: #{double_conv_forward.5} parent=5 // pred_fallthru
      _
    %p578 = scmp.le.s32.totalorder 2, %s9
    // Predicated region
    $region37: #{double_conv_forward.5} parent=5 // pred_check
      %p579 = pneg %p578
    $region38: #{double_conv_forward.5} parent=5 // pred_check_branch
      %581 = sbr.rel (%p579) target = $region40
    $region39: #{double_conv_forward.5} parent=5 // pred_region
      %s582 = ssub.s32 %s9, 2
      // Predicated region
      $region41: #{double_conv_forward.5} parent=39 // pred_check
        %p583 = pneg %p132
      $region42: #{double_conv_forward.5} parent=39 // pred_check_branch
        %585 = sbr.rel (%p583) target = $region44
      $region43: #{double_conv_forward.5} parent=39 // pred_region
        %s586 = smul.u32 54, %s20
        %p587 = scmp.lt.s32.totalorder %s586, 107
        %s588 = scalar_select %p587, %s586, 107
        %p589 = scmp.lt.s32.totalorder %s21, 0
        %s590 = scalar_select %p589, %s21, 0
        %s591 = sadd.s32 %s590, %s588
        %s592 = smul.addr %s591, 8
        %s593 = scalar_lea.vmem %s3, %s592
      $region44: #{double_conv_forward.5} parent=39 // pred_fallthru
        _
    $region40: #{double_conv_forward.5} parent=5 // pred_fallthru
      _
  $region6: #{double_conv_forward.5} parent=0 // loop_footer
    %s13 = sadd.s32 1, %s9
  $region7: #{double_conv_forward.5} parent=0 // loop_footer_branch
    %8 = sbr.rel target = $region3
  $region8: #{double_conv_forward.5} parent=0 // loop_exit
    _

// kernel: double_conv_forward.4
$region0: #{double_conv_forward.4}
  #allocation0 [shape = 'u32[]', space=smem, size = 0x4, offset = 0x4, fixed_abs, tag = 'smem constant byte address 0x4 - core index']
  #allocation1 [shape = 'u32[72,128]{1,0:T(1,128)}', space=vmem, size = 0x9000, scoped, tag = 'internal scratch']
  %s0 = inlined_call_operand.vmem [shape: bf16[2,18,24,8], index: 0, kind: input, shape index: {}]
  %s1 = inlined_call_operand.vmem [shape: bf16[3,24,8], index: 1, kind: input, shape index: {}]
  %s2 = inlined_call_operand.vmem [shape: f32[1,8], index: 2, kind: input, shape index: {}]
  %s3 = inlined_call_operand.vmem [shape: f32[1,8], index: 3, kind: input, shape index: {}]
  %s4 = inlined_call_operand.vmem [shape: bf16[2,18,24,8], index: 4, kind: output, shape index: {0}]
  %s5 = inlined_call_operand.vmem [shape: f32[2,1,8], index: 5, kind: output, shape index: {1}]
  %s6 = inlined_call_operand.vmem [shape: f32[2,1,8], index: 6, kind: output, shape index: {2}]
  %7 = xla_tuple %s4, %s5, %s6
  %s8 = sld [smem:[#allocation0]]
  $region65: #{double_conv_forward.4} parent=0
    _
  %s10 = ssub.s32 1, %s8
  %s11 = scalar_select 0, %s10, %s8
  loop: start=0, step=1, limit=4
  $region2: #{double_conv_forward.4} parent=0 // loop_pre_header
    _
  $region3: #{double_conv_forward.4} parent=0 // loop_header
    %s13 = sphi 0, %s17
    %p14 = scmp.ge.s32.totalorder %s13, 4
    %s20 = sphi 0, %s32
    %s21 = sphi 0, %s28
    %s22 = sphi 0, %s20
    %s23 = sphi 0, %s21
    %s24 = sphi 0, %s22
    %s25 = sphi 0, %s23
    %s35 = sphi 0, %s37
    %s38 = sphi 0, %s35
    %s39 = sphi 0, %s38
    %s55 = sphi 0, %s39
    %s61 = sphi 0, %s63
    %s64 = sphi 0, %s61
    %s65 = sphi 0, %s64
    %s81 = sphi 0, %s65
    %s85 = sphi 0, %s85
    %s87 = sphi 0, %s85
    %s88 = sphi 0, %s87
    %s102 = sphi 0, %s88
    %s106 = sphi 0, %s106
    %s108 = sphi 0, %s106
    %s109 = sphi 0, %s108
    %s123 = sphi 0, %s109
    %s131 = sphi 0, %s133
    %s134 = sphi 0, %s131
    %s135 = sphi 0, %s134
    %s151 = sphi 0, %s135
    %s159 = sphi 0, %s161
    %s162 = sphi 0, %s159
    %s163 = sphi 0, %s162
    %s179 = sphi 0, %s163
    %s187 = sphi 0, %s189
    %s190 = sphi 0, %s187
    %s191 = sphi 0, %s190
    %s207 = sphi 0, %s191
  $region4: #{double_conv_forward.4} parent=0 // loop_header_branch
    %16 = sbr.rel (%p14) target = $region8
  $region5: #{double_conv_forward.4} parent=0 // loop_body
    %s18 = ssub.s32 %s13, 1
    %s19 = ssub.s32 %s13, 2
    %s26 = sadd.s32 1, %s21
    %p27 = scmp.ge.s32.totalorder %s26, 1
    %s28 = scalar_select %p27, 0, %s26
    %s29 = sadd.s32 1, %s20
    %s30 = scalar_select %p27, %s29, %s20
    %p31 = scmp.ge.s32.totalorder %s30, 2
    %s32 = scalar_select %p31, 0, %s30
    %s33 = ssub.s32 %s20, %s32
    %p34 = scmp.eq.s32.totalorder %s33, 0
    %s36 = sadd.s32 %s35, 1
    %s37 = scalar_select %p34, %s35, %s36
    %p40 = pneg %p34
    %p41 = scmp.eq.s32.totalorder %s13, 1
    %p42 = por %p40, %p41
    %p43 = scmp.ne.s32.totalorder %s35, %s38
    %p44 = scmp.eq.s32.totalorder %s13, 0
    %p45 = por %p43, %p44
    %p46 = scmp.ne.s32.totalorder %s35, %s38
    %p47 = scmp.eq.s32.totalorder %s18, 1
    %p48 = por %p46, %p47
    %p49 = scmp.ne.s32.totalorder %s38, %s39
    %p50 = scmp.eq.s32.totalorder %s18, 0
    %p51 = por %p49, %p50
    %p52 = scmp.ne.s32.totalorder %s38, %s39
    %p53 = scmp.eq.s32.totalorder %s19, 1
    %p54 = por %p52, %p53
    %p56 = scmp.ne.s32.totalorder %s39, %s55
    %p57 = scmp.eq.s32.totalorder %s19, 0
    %p58 = por %p56, %p57
    %s59 = ssub.s32 %s21, %s28
    %p60 = scmp.eq.s32.totalorder %s59, 0
    %s62 = sadd.s32 %s61, 1
    %s63 = scalar_select %p60, %s61, %s62
    %p66 = pneg %p60
    %p67 = scmp.eq.s32.totalorder %s13, 1
    %p68 = por %p66, %p67
    %p69 = scmp.ne.s32.totalorder %s61, %s64
    %p70 = scmp.eq.s32.totalorder %s13, 0
    %p71 = por %p69, %p70
    %p72 = scmp.ne.s32.totalorder %s61, %s64
    %p73 = scmp.eq.s32.totalorder %s18, 1
    %p74 = por %p72, %p73
    %p75 = scmp.ne.s32.totalorder %s64, %s65
    %p76 = scmp.eq.s32.totalorder %s18, 0
    %p77 = por %p75, %p76
    %p78 = scmp.ne.s32.totalorder %s64, %s65
    %p79 = scmp.eq.s32.totalorder %s19, 1
    %p80 = por %p78, %p79
    %p82 = scmp.ne.s32.totalorder %s65, %s81
    %p83 = scmp.eq.s32.totalorder %s19, 0
    %p84 = por %p82, %p83
    %s86 = sadd.s32 %s85, 1
    %p89 = scmp.eq.s32.totalorder %s13, 1
    %p90 = scmp.ne.s32.totalorder %s85, %s87
    %p91 = scmp.eq.s32.totalorder %s13, 0
    %p92 = por %p90, %p91
    %p93 = scmp.ne.s32.totalorder %s85, %s87
    %p94 = scmp.eq.s32.totalorder %s18, 1
    %p95 = por %p93, %p94
    %p96 = scmp.ne.s32.totalorder %s87, %s88
    %p97 = scmp.eq.s32.totalorder %s18, 0
    %p98 = por %p96, %p97
    %p99 = scmp.ne.s32.totalorder %s87, %s88
    %p100 = scmp.eq.s32.totalorder %s19, 1
    %p101 = por %p99, %p100
    %p103 = scmp.ne.s32.totalorder %s88, %s102
    %p104 = scmp.eq.s32.totalorder %s19, 0
    %p105 = por %p103, %p104
    %s107 = sadd.s32 %s106, 1
    %p110 = scmp.eq.s32.totalorder %s13, 1
    %p111 = scmp.ne.s32.totalorder %s106, %s108
    %p112 = scmp.eq.s32.totalorder %s13, 0
    %p113 = por %p111, %p112
    %p114 = scmp.ne.s32.totalorder %s106, %s108
    %p115 = scmp.eq.s32.totalorder %s18, 1
    %p116 = por %p114, %p115
    %p117 = scmp.ne.s32.totalorder %s108, %s109
    %p118 = scmp.eq.s32.totalorder %s18, 0
    %p119 = por %p117, %p118
    %p120 = scmp.ne.s32.totalorder %s108, %s109
    %p121 = scmp.eq.s32.totalorder %s19, 1
    %p122 = por %p120, %p121
    %p124 = scmp.ne.s32.totalorder %s109, %s123
    %p125 = scmp.eq.s32.totalorder %s19, 0
    %p126 = por %p124, %p125
    %s127 = ssub.s32 %s20, %s32
    %s128 = ssub.s32 %s21, %s28
    %s129 = sor.u32 %s127, %s128
    %p130 = scmp.eq.s32.totalorder %s129, 0
    %s132 = sadd.s32 %s131, 1
    %s133 = scalar_select %p130, %s131, %s132
    %p136 = pneg %p130
    %p137 = scmp.eq.s32.totalorder %s13, 1
    %p138 = por %p136, %p137
    %p139 = scmp.ne.s32.totalorder %s131, %s134
    %p140 = scmp.eq.s32.totalorder %s13, 0
    %p141 = por %p139, %p140
    %p142 = scmp.ne.s32.totalorder %s131, %s134
    %p143 = scmp.eq.s32.totalorder %s18, 1
    %p144 = por %p142, %p143
    %p145 = scmp.ne.s32.totalorder %s134, %s135
    %p146 = scmp.eq.s32.totalorder %s18, 0
    %p147 = por %p145, %p146
    %p148 = scmp.ne.s32.totalorder %s134, %s135
    %p149 = scmp.eq.s32.totalorder %s19, 1
    %p150 = por %p148, %p149
    %p152 = scmp.ne.s32.totalorder %s135, %s151
    %p153 = scmp.eq.s32.totalorder %s19, 0
    %p154 = por %p152, %p153
    %s155 = ssub.s32 %s20, %s32
    %s156 = ssub.s32 %s21, %s28
    %s157 = sor.u32 %s155, %s156
    %p158 = scmp.eq.s32.totalorder %s157, 0
    %s160 = sadd.s32 %s159, 1
    %s161 = scalar_select %p158, %s159, %s160
    %p164 = pneg %p158
    %p165 = scmp.eq.s32.totalorder %s13, 1
    %p166 = por %p164, %p165
    %p167 = scmp.ne.s32.totalorder %s159, %s162
    %p168 = scmp.eq.s32.totalorder %s13, 0
    %p169 = por %p167, %p168
    %p170 = scmp.ne.s32.totalorder %s159, %s162
    %p171 = scmp.eq.s32.totalorder %s18, 1
    %p172 = por %p170, %p171
    %p173 = scmp.ne.s32.totalorder %s162, %s163
    %p174 = scmp.eq.s32.totalorder %s18, 0
    %p175 = por %p173, %p174
    %p176 = scmp.ne.s32.totalorder %s162, %s163
    %p177 = scmp.eq.s32.totalorder %s19, 1
    %p178 = por %p176, %p177
    %p180 = scmp.ne.s32.totalorder %s163, %s179
    %p181 = scmp.eq.s32.totalorder %s19, 0
    %p182 = por %p180, %p181
    %s183 = ssub.s32 %s20, %s32
    %s184 = ssub.s32 %s21, %s28
    %s185 = sor.u32 %s183, %s184
    %p186 = scmp.eq.s32.totalorder %s185, 0
    %s188 = sadd.s32 %s187, 1
    %s189 = scalar_select %p186, %s187, %s188
    %p192 = pneg %p186
    %p193 = scmp.eq.s32.totalorder %s13, 1
    %p194 = por %p192, %p193
    %p195 = scmp.ne.s32.totalorder %s187, %s190
    %p196 = scmp.eq.s32.totalorder %s13, 0
    %p197 = por %p195, %p196
    %p198 = scmp.ne.s32.totalorder %s187, %s190
    %p199 = scmp.eq.s32.totalorder %s18, 1
    %p200 = por %p198, %p199
    %p201 = scmp.ne.s32.totalorder %s190, %s191
    %p202 = scmp.eq.s32.totalorder %s18, 0
    %p203 = por %p201, %p202
    %p204 = scmp.ne.s32.totalorder %s190, %s191
    %p205 = scmp.eq.s32.totalorder %s19, 1
    %p206 = por %p204, %p205
    %p208 = scmp.ne.s32.totalorder %s191, %s207
    %p209 = scmp.eq.s32.totalorder %s19, 0
    %p210 = por %p208, %p209
    %p211 = scmp.le.s32.totalorder 1, %s13
    %p212 = scmp.lt.s32.totalorder %s13, 3
    %p213 = pnand %p211, %p212
    %p214 = pneg %p213
    // Predicated region
    $region9: #{double_conv_forward.4} parent=5 // pred_check
      _
    $region10: #{double_conv_forward.4} parent=5 // pred_check_branch
      %216 = sbr.rel (%p213) target = $region12
    $region11: #{double_conv_forward.4} parent=5 // pred_region
      %s217 = ssub.s32 %s13, 1
      // Predicated region
      $region13: #{double_conv_forward.4} parent=11 // pred_check
        %p218 = pneg %p77
      $region14: #{double_conv_forward.4} parent=11 // pred_check_branch
        %220 = sbr.rel (%p218) target = $region16
      $region15: #{double_conv_forward.4} parent=11 // pred_region
        %p221 = scmp.lt.s32.totalorder %s23, 0
        %s222 = scalar_select %p221, %s23, 0
        %s223 = smul.addr %s222, 4
        %s224 = scalar_lea.vmem %s1, %s223
      $region16: #{double_conv_forward.4} parent=11 // pred_fallthru
        _
      // Predicated region
      $region17: #{double_conv_forward.4} parent=11 // pred_check
        %p225 = pneg %p98
      $region18: #{double_conv_forward.4} parent=11 // pred_check_branch
        %227 = sbr.rel (%p225) target = $region20
      $region19: #{double_conv_forward.4} parent=11 // pred_region
        _
      $region20: #{double_conv_forward.4} parent=11 // pred_fallthru
        _
      // Predicated region
      $region21: #{double_conv_forward.4} parent=11 // pred_check
        %p228 = pneg %p119
      $region22: #{double_conv_forward.4} parent=11 // pred_check_branch
        %230 = sbr.rel (%p228) target = $region24
      $region23: #{double_conv_forward.4} parent=11 // pred_region
        _
      $region24: #{double_conv_forward.4} parent=11 // pred_fallthru
        _
    $region12: #{double_conv_forward.4} parent=5 // pred_fallthru
      _
    %p231 = scmp.lt.s32.totalorder %s13, 2
    // Predicated region
    $region25: #{double_conv_forward.4} parent=5 // pred_check
      %p232 = pneg %p231
    $region26: #{double_conv_forward.4} parent=5 // pred_check_branch
      %234 = sbr.rel (%p232) target = $region28
    $region27: #{double_conv_forward.4} parent=5 // pred_region
      // Predicated region
      $region29: #{double_conv_forward.4} parent=27 // pred_check
        %p235 = pneg %p45
      $region30: #{double_conv_forward.4} parent=27 // pred_check_branch
        %237 = sbr.rel (%p235) target = $region32
      $region31: #{double_conv_forward.4} parent=27 // pred_region
        %p238 = scmp.lt.s32.totalorder %s20, 1
        %s239 = scalar_select %p238, %s20, 1
        %s240 = smul.addr %s239, 54
        %s241 = smul.addr %s240, 4
        %s242 = scalar_lea.vmem %s0, %s241
      $region32: #{double_conv_forward.4} parent=27 // pred_fallthru
        _
    $region28: #{double_conv_forward.4} parent=5 // pred_fallthru
      _
    %p243 = scmp.le.s32.totalorder 1, %s13
    %p244 = scmp.lt.s32.totalorder %s13, 3
    %p245 = pnand %p243, %p244
    %p246 = pneg %p245
    // Predicated region
    $region33: #{double_conv_forward.4} parent=5 // pred_check
      _
    $region34: #{double_conv_forward.4} parent=5 // pred_check_branch
      %248 = sbr.rel (%p245) target = $region36
    $region35: #{double_conv_forward.4} parent=5 // pred_region
      %s249 = ssub.s32 %s13, 1
      %p250 = scmp.lt.s32.totalorder %s22, 1
      %s251 = scalar_select %p250, %s22, 1
      %s252 = smul.addr %s251, 54
      %s253 = smul.addr %s252, 4
      %s254 = scalar_lea.vmem %s0, %s253
      %p255 = pneg %p51
      %p256 = pneg %p48
      %p257 = scmp.lt.s32.totalorder %s23, 0
      %s258 = scalar_select %p257, %s23, 0
      %s259 = smul.addr %s258, 4
      %s260 = scalar_lea.vmem %s1, %s259
      %p261 = pneg %p77
      %p262 = pneg %p74
      %p263 = pneg %p98
      %p264 = pneg %p95
      %p265 = pneg %p119
      %p266 = pneg %p116
      %p267 = pneg %p147
      %p268 = pneg %p144
      %p269 = scmp.lt.s32.totalorder %s22, 1
      %s270 = scalar_select %p269, %s22, 1
      %p271 = scmp.lt.s32.totalorder %s23, 0
      %s272 = scalar_select %p271, %s23, 0
      %s273 = smul.addr %s270, 54
      %s274 = sadd.s32 %s272, %s273
      %s275 = smul.addr %s274, 4
      %s276 = scalar_lea.vmem %s4, %s275
      %p277 = pneg %p175
      %p278 = pneg %p172
      %p279 = scmp.lt.s32.totalorder %s22, 1
      %s280 = scalar_select %p279, %s22, 1
      %p281 = scmp.lt.s32.totalorder %s23, 0
      %s282 = scalar_select %p281, %s23, 0
      %s283 = sadd.s32 %s282, %s280
      %s284 = scalar_lea.vmem %s5, %s283
      %p285 = pneg %p203
      %p286 = pneg %p200
      %p287 = scmp.lt.s32.totalorder %s22, 1
      %s288 = scalar_select %p287, %s22, 1
      %p289 = scmp.lt.s32.totalorder %s23, 0
      %s290 = scalar_select %p289, %s23, 0
      %s291 = sadd.s32 %s290, %s288
      %s292 = scalar_lea.vmem %s6, %s291
      %p293 = scmp.lt.s32.totalorder %s22, 1
      %s294 = scalar_select %p293, %s22, 1
      %s295 = smul.addr %s294, 54
      %s296 = smul.addr %s295, 4
      %s297 = scalar_lea.vmem %s0, %s296
      %p298 = scmp.lt.s32.totalorder %s23, 0
      %s299 = scalar_select %p298, %s23, 0
      %s300 = smul.addr %s299, 4
      %s301 = scalar_lea.vmem %s1, %s300
      %p302 = scmp.lt.s32.totalorder %s22, 1
      %s303 = scalar_select %p302, %s22, 1
      %p304 = scmp.lt.s32.totalorder %s23, 0
      %s305 = scalar_select %p304, %s23, 0
      %s306 = smul.addr %s303, 54
      %s307 = sadd.s32 %s305, %s306
      %s308 = smul.addr %s307, 4
      %s309 = scalar_lea.vmem %s4, %s308
      %p310 = scmp.lt.s32.totalorder %s22, 1
      %s311 = scalar_select %p310, %s22, 1
      %p312 = scmp.lt.s32.totalorder %s23, 0
      %s313 = scalar_select %p312, %s23, 0
      %s314 = sadd.s32 %s313, %s311
      %s315 = scalar_lea.vmem %s5, %s314
      %p316 = scmp.lt.s32.totalorder %s22, 1
      %s317 = scalar_select %p316, %s22, 1
      %p318 = scmp.lt.s32.totalorder %s23, 0
      %s319 = scalar_select %p318, %s23, 0
      %s320 = sadd.s32 %s319, %s317
      %s321 = scalar_lea.vmem %s6, %s320
      %v323 = vlaneseq
      %v324 = vshrl.u32 %v323, 7
      %v325 = vadd.s32 %v324, 8
      %v326 = vadd.s32 %v324, 16
      %vm327 = vcmp.ge.s32.totalorder %v324, 1
      %vm328 = vcmp.ge.s32.totalorder %v325, 1
      %vm329 = vcmp.ge.s32.totalorder %v326, 1
      %vm330 = vcmp.le.s32.totalorder %v324, 16
      %vm331 = vcmp.le.s32.totalorder %v325, 16
      %vm332 = vcmp.le.s32.totalorder %v326, 16
      %vm333 = vmand %vm327, %vm330
      %vm334 = vmand %vm328, %vm331
      %vm335 = vmand %vm329, %vm332
      %v336 = vld [vmem:[%s297 + $0xc] sm:$0xf]
      %v337 = vld [vmem:[%s297 + $0x10] sm:$0xf]
      %v338 = vld [vmem:[%s297 + $0x14] sm:$0xf]
      %v339 = vld [vmem:[%s297 + $0x18] sm:$0xf]
      %v340 = vld [vmem:[%s297 + $0x1c] sm:$0xf]
      %v341 = vld [vmem:[%s297 + $0x20] sm:$0xf]
      %v342 = vld [vmem:[%s297 + $0x24] sm:$0xf]
      %v343 = vld [vmem:[%s297 + $0x28] sm:$0xf]
      %v344 = vld [vmem:[%s297 + $0x2c] sm:$0xf]
      %v345 = vld [vmem:[%s297 + $0x30] sm:$0xf]
      %v346 = vld [vmem:[%s297 + $0x34] sm:$0xf]
      %v347 = vld [vmem:[%s297 + $0x38] sm:$0xf]
      %v348 = vld [vmem:[%s297 + $0x3c] sm:$0xf]
      %v349 = vld [vmem:[%s297 + $0x40] sm:$0xf]
      %v350 = vld [vmem:[%s297 + $0x44] sm:$0xf]
      %v351 = vld [vmem:[%s297 + $0x48] sm:$0xf]
      %v352 = vld [vmem:[%s297 + $0x4c] sm:$0xf]
      %v353 = vld [vmem:[%s297 + $0x50] sm:$0xf]
      %v354 = vld [vmem:[%s297 + $0x54] sm:$0xf]
      %v355 = vld [vmem:[%s297 + $0x58] sm:$0xf]
      %v356 = vld [vmem:[%s297 + $0x5c] sm:$0xf]
      %v357 = vld [vmem:[%s297 + $0x60] sm:$0xf]
      %v358 = vld [vmem:[%s297 + $0x64] sm:$0xf]
      %v359 = vld [vmem:[%s297 + $0x68] sm:$0xf]
      %v360 = vld [vmem:[%s297 + $0x6c] sm:$0xf]
      %v361 = vld [vmem:[%s297 + $0x70] sm:$0xf]
      %v362 = vld [vmem:[%s297 + $0x74] sm:$0xf]
      %v363 = vld [vmem:[%s297 + $0x78] sm:$0xf]
      %v364 = vld [vmem:[%s297 + $0x7c] sm:$0xf]
      %v365 = vld [vmem:[%s297 + $0x80] sm:$0xf]
      %v366 = vld [vmem:[%s297 + $0x84] sm:$0xf]
      %v367 = vld [vmem:[%s297 + $0x88] sm:$0xf]
      %v368 = vld [vmem:[%s297 + $0x8c] sm:$0xf]
      %v369 = vld [vmem:[%s297 + $0x90] sm:$0xf]
      %v370 = vld [vmem:[%s297 + $0x94] sm:$0xf]
      %v371 = vld [vmem:[%s297 + $0x98] sm:$0xf]
      %v372 = vld [vmem:[%s297 + $0x9c] sm:$0xf]
      %v373 = vld [vmem:[%s297 + $0xa0] sm:$0xf]
      %v374 = vld [vmem:[%s297 + $0xa4] sm:$0xf]
      %v375 = vld [vmem:[%s297 + $0xa8] sm:$0xf]
      %v376 = vld [vmem:[%s297 + $0xac] sm:$0xf]
      %v377 = vld [vmem:[%s297 + $0xb0] sm:$0xf]
      %v378 = vld [vmem:[%s297 + $0xb4] sm:$0xf]
      %v379 = vld [vmem:[%s297 + $0xb8] sm:$0xf]
      %v380 = vld [vmem:[%s297 + $0xbc] sm:$0xf]
      %v381 = vld [vmem:[%s297 + $0xc0] sm:$0xf]
      %v382 = vld [vmem:[%s297 + $0xc4] sm:$0xf]
      %v383 = vld [vmem:[%s297 + $0xc8] sm:$0xf]
      %v384 = vld [vmem:[%s2] sm:$0x1]
      %v385 = vld [vmem:[%s3] sm:$0x1]
      %v386 = vunpack.c.l.bf16 %v336
      %v387 = vunpack.c.l.bf16 %v337
      %v388 = vunpack.c.l.bf16 %v338
      %v389 = vunpack.c.l.bf16 %v339
      %v390 = vunpack.c.l.bf16 %v340
      %v391 = vunpack.c.l.bf16 %v341
      %v392 = vunpack.c.l.bf16 %v342
      %v393 = vunpack.c.l.bf16 %v343
      %v394 = vunpack.c.l.bf16 %v344
      %v395 = vunpack.c.l.bf16 %v345
      %v396 = vunpack.c.l.bf16 %v346
      %v397 = vunpack.c.l.bf16 %v347
      %v398 = vunpack.c.l.bf16 %v348
      %v399 = vunpack.c.l.bf16 %v349
      %v400 = vunpack.c.l.bf16 %v350
      %v401 = vunpack.c.l.bf16 %v351
      %v402 = vunpack.c.l.bf16 %v352
      %v403 = vunpack.c.l.bf16 %v353
      %v404 = vunpack.c.l.bf16 %v354
      %v405 = vunpack.c.l.bf16 %v355
      %v406 = vunpack.c.l.bf16 %v356
      %v407 = vunpack.c.l.bf16 %v357
      %v408 = vunpack.c.l.bf16 %v358
      %v409 = vunpack.c.l.bf16 %v359
      %v410 = vunpack.c.l.bf16 %v360
      %v411 = vunpack.c.l.bf16 %v361
      %v412 = vunpack.c.l.bf16 %v362
      %v413 = vunpack.c.l.bf16 %v363
      %v414 = vunpack.c.l.bf16 %v364
      %v415 = vunpack.c.l.bf16 %v365
      %v416 = vunpack.c.l.bf16 %v366
      %v417 = vunpack.c.l.bf16 %v367
      %v418 = vunpack.c.l.bf16 %v368
      %v419 = vunpack.c.l.bf16 %v369
      %v420 = vunpack.c.l.bf16 %v370
      %v421 = vunpack.c.l.bf16 %v371
      %v422 = vunpack.c.l.bf16 %v372
      %v423 = vunpack.c.l.bf16 %v373
      %v424 = vunpack.c.l.bf16 %v374
      %v425 = vunpack.c.l.bf16 %v375
      %v426 = vunpack.c.l.bf16 %v376
      %v427 = vunpack.c.l.bf16 %v377
      %v428 = vunpack.c.l.bf16 %v378
      %v429 = vunpack.c.l.bf16 %v379
      %v430 = vunpack.c.l.bf16 %v380
      %v431 = vunpack.c.l.bf16 %v381
      %v432 = vunpack.c.l.bf16 %v382
      %v433 = vunpack.c.l.bf16 %v383
      %v435 = vperm.slane %v384, 0
      %v437 = vmul.f32 %v386, %v435
      %v438 = vmul.f32 %v387, %v435
      %v439 = vmul.f32 %v388, %v435
      %v440 = vmul.f32 %v389, %v435
      %v441 = vmul.f32 %v390, %v435
      %v442 = vmul.f32 %v391, %v435
      %v443 = vmul.f32 %v392, %v435
      %v444 = vmul.f32 %v393, %v435
      %v445 = vmul.f32 %v394, %v435
      %v446 = vmul.f32 %v395, %v435
      %v447 = vmul.f32 %v396, %v435
      %v448 = vmul.f32 %v397, %v435
      %v449 = vmul.f32 %v398, %v435
      %v450 = vmul.f32 %v399, %v435
      %v451 = vmul.f32 %v400, %v435
      %v452 = vmul.f32 %v401, %v435
      %v453 = vmul.f32 %v402, %v435
      %v454 = vmul.f32 %v403, %v435
      %v455 = vmul.f32 %v404, %v435
      %v456 = vmul.f32 %v405, %v435
      %v457 = vmul.f32 %v406, %v435
      %v458 = vmul.f32 %v407, %v435
      %v459 = vmul.f32 %v408, %v435
      %v460 = vmul.f32 %v409, %v435
      %v461 = vmul.f32 %v410, %v435
      %v462 = vmul.f32 %v411, %v435
      %v463 = vmul.f32 %v412, %v435
      %v464 = vmul.f32 %v413, %v435
      %v465 = vmul.f32 %v414, %v435
      %v466 = vmul.f32 %v415, %v435
      %v467 = vmul.f32 %v416, %v435
      %v468 = vmul.f32 %v417, %v435
      %v469 = vmul.f32 %v418, %v435
      %v470 = vmul.f32 %v419, %v435
      %v471 = vmul.f32 %v420, %v435
      %v472 = vmul.f32 %v421, %v435
      %v473 = vmul.f32 %v422, %v435
      %v474 = vmul.f32 %v423, %v435
      %v475 = vmul.f32 %v424, %v435
      %v476 = vmul.f32 %v425, %v435
      %v477 = vmul.f32 %v426, %v435
      %v478 = vmul.f32 %v427, %v435
      %v479 = vmul.f32 %v428, %v435
      %v480 = vmul.f32 %v429, %v435
      %v481 = vmul.f32 %v430, %v435
      %v482 = vmul.f32 %v431, %v435
      %v483 = vmul.f32 %v432, %v435
      %v484 = vmul.f32 %v433, %v435
      %v486 = vperm.slane %v385, 0
      %v488 = vadd.f32 %v437, %v486
      %v489 = vadd.f32 %v438, %v486
      %v490 = vadd.f32 %v439, %v486
      %v491 = vadd.f32 %v440, %v486
      %v492 = vadd.f32 %v441, %v486
      %v493 = vadd.f32 %v442, %v486
      %v494 = vadd.f32 %v443, %v486
      %v495 = vadd.f32 %v444, %v486
      %v496 = vadd.f32 %v445, %v486
      %v497 = vadd.f32 %v446, %v486
      %v498 = vadd.f32 %v447, %v486
      %v499 = vadd.f32 %v448, %v486
      %v500 = vadd.f32 %v449, %v486
      %v501 = vadd.f32 %v450, %v486
      %v502 = vadd.f32 %v451, %v486
      %v503 = vadd.f32 %v452, %v486
      %v504 = vadd.f32 %v453, %v486
      %v505 = vadd.f32 %v454, %v486
      %v506 = vadd.f32 %v455, %v486
      %v507 = vadd.f32 %v456, %v486
      %v508 = vadd.f32 %v457, %v486
      %v509 = vadd.f32 %v458, %v486
      %v510 = vadd.f32 %v459, %v486
      %v511 = vadd.f32 %v460, %v486
      %v512 = vadd.f32 %v461, %v486
      %v513 = vadd.f32 %v462, %v486
      %v514 = vadd.f32 %v463, %v486
      %v515 = vadd.f32 %v464, %v486
      %v516 = vadd.f32 %v465, %v486
      %v517 = vadd.f32 %v466, %v486
      %v518 = vadd.f32 %v467, %v486
      %v519 = vadd.f32 %v468, %v486
      %v520 = vadd.f32 %v469, %v486
      %v521 = vadd.f32 %v470, %v486
      %v522 = vadd.f32 %v471, %v486
      %v523 = vadd.f32 %v472, %v486
      %v524 = vadd.f32 %v473, %v486
      %v525 = vadd.f32 %v474, %v486
      %v526 = vadd.f32 %v475, %v486
      %v527 = vadd.f32 %v476, %v486
      %v528 = vadd.f32 %v477, %v486
      %v529 = vadd.f32 %v478, %v486
      %v530 = vadd.f32 %v479, %v486
      %v531 = vadd.f32 %v480, %v486
      %v532 = vadd.f32 %v481, %v486
      %v533 = vadd.f32 %v482, %v486
      %v534 = vadd.f32 %v483, %v486
      %v535 = vadd.f32 %v484, %v486
      %v536 = vmax.f32 %v488, 0.0
      %v537 = vmax.f32 %v489, 0.0
      %v538 = vmax.f32 %v490, 0.0
      %v539 = vmax.f32 %v491, 0.0
      %v540 = vmax.f32 %v492, 0.0
      %v541 = vmax.f32 %v493, 0.0
      %v542 = vmax.f32 %v494, 0.0
      %v543 = vmax.f32 %v495, 0.0
      %v544 = vmax.f32 %v496, 0.0
      %v545 = vmax.f32 %v497, 0.0
      %v546 = vmax.f32 %v498, 0.0
      %v547 = vmax.f32 %v499, 0.0
      %v548 = vmax.f32 %v500, 0.0
      %v549 = vmax.f32 %v501, 0.0
      %v550 = vmax.f32 %v502, 0.0
      %v551 = vmax.f32 %v503, 0.0
      %v552 = vmax.f32 %v504, 0.0
      %v553 = vmax.f32 %v505, 0.0
      %v554 = vmax.f32 %v506, 0.0
      %v555 = vmax.f32 %v507, 0.0
      %v556 = vmax.f32 %v508, 0.0
      %v557 = vmax.f32 %v509, 0.0
      %v558 = vmax.f32 %v510, 0.0
      %v559 = vmax.f32 %v511, 0.0
      %v560 = vmax.f32 %v512, 0.0
      %v561 = vmax.f32 %v513, 0.0
      %v562 = vmax.f32 %v514, 0.0
      %v563 = vmax.f32 %v515, 0.0
      %v564 = vmax.f32 %v516, 0.0
      %v565 = vmax.f32 %v517, 0.0
      %v566 = vmax.f32 %v518, 0.0
      %v567 = vmax.f32 %v519, 0.0
      %v568 = vmax.f32 %v520, 0.0
      %v569 = vmax.f32 %v521, 0.0
      %v570 = vmax.f32 %v522, 0.0
      %v571 = vmax.f32 %v523, 0.0
      %v572 = vmax.f32 %v524, 0.0
      %v573 = vmax.f32 %v525, 0.0
      %v574 = vmax.f32 %v526, 0.0
      %v575 = vmax.f32 %v527, 0.0
      %v576 = vmax.f32 %v528, 0.0
      %v577 = vmax.f32 %v529, 0.0
      %v578 = vmax.f32 %v530, 0.0
      %v579 = vmax.f32 %v531, 0.0
      %v580 = vmax.f32 %v532, 0.0
      %v581 = vmax.f32 %v533, 0.0
      %v582 = vmax.f32 %v534, 0.0
      %v583 = vmax.f32 %v535, 0.0
      %v584 = vsel %vm333, 1, 0
      %v585 = vsel %vm334, 1, 0
      %v586 = vsel %vm335, 1, 0
      %vm587 = vcmp.eq.s32.totalorder %v584, 1
      %vm588 = vcmp.eq.s32.totalorder %v585, 1
      %vm589 = vcmp.eq.s32.totalorder %v586, 1
      %v590 = vsel %vm587, %v536, 0.0
      %v591 = vsel %vm588, %v537, 0.0
      %v592 = vsel %vm589, %v538, 0.0
      %v593 = vsel %vm587, %v539, 0.0
      %v594 = vsel %vm588, %v540, 0.0
      %v595 = vsel %vm589, %v541, 0.0
      %v596 = vsel %vm587, %v542, 0.0
      %v597 = vsel %vm588, %v543, 0.0
      %v598 = vsel %vm589, %v544, 0.0
      %v599 = vsel %vm587, %v545, 0.0
      %v600 = vsel %vm588, %v546, 0.0
      %v601 = vsel %vm589, %v547, 0.0
      %v602 = vsel %vm587, %v548, 0.0
      %v603 = vsel %vm588, %v549, 0.0
      %v604 = vsel %vm589, %v550, 0.0
      %v605 = vsel %vm587, %v551, 0.0
      %v606 = vsel %vm588, %v552, 0.0
      %v607 = vsel %vm589, %v553, 0.0
      %v608 = vsel %vm587, %v554, 0.0
      %v609 = vsel %vm588, %v555, 0.0
      %v610 = vsel %vm589, %v556, 0.0
      %v611 = vsel %vm587, %v557, 0.0
      %v612 = vsel %vm588, %v558, 0.0
      %v613 = vsel %vm589, %v559, 0.0
      %v614 = vsel %vm587, %v560, 0.0
      %v615 = vsel %vm588, %v561, 0.0
      %v616 = vsel %vm589, %v562, 0.0
      %v617 = vsel %vm587, %v563, 0.0
      %v618 = vsel %vm588, %v564, 0.0
      %v619 = vsel %vm589, %v565, 0.0
      %v620 = vsel %vm587, %v566, 0.0
      %v621 = vsel %vm588, %v567, 0.0
      %v622 = vsel %vm589, %v568, 0.0
      %v623 = vsel %vm587, %v569, 0.0
      %v624 = vsel %vm588, %v570, 0.0
      %v625 = vsel %vm589, %v571, 0.0
      %v626 = vsel %vm587, %v572, 0.0
      %v627 = vsel %vm588, %v573, 0.0
      %v628 = vsel %vm589, %v574, 0.0
      %v629 = vsel %vm587, %v575, 0.0
      %v630 = vsel %vm588, %v576, 0.0
      %v631 = vsel %vm589, %v577, 0.0
      %v632 = vsel %vm587, %v578, 0.0
      %v633 = vsel %vm588, %v579, 0.0
      %v634 = vsel %vm589, %v580, 0.0
      %v635 = vsel %vm587, %v581, 0.0
      %v636 = vsel %vm588, %v582, 0.0
      %v637 = vsel %vm589, %v583, 0.0
      %v638 = vpack.c.bf16 0.0, 0.0
      %v639 = vpack.c.bf16 %v590, %v590
      %v640 = vpack.c.bf16 %v591, %v591
      %v641 = vpack.c.bf16 %v592, %v592
      %v642 = vpack.c.bf16 %v593, %v593
      %v643 = vpack.c.bf16 %v594, %v594
      %v644 = vpack.c.bf16 %v595, %v595
      %v645 = vpack.c.bf16 %v596, %v596
      %v646 = vpack.c.bf16 %v597, %v597
      %v647 = vpack.c.bf16 %v598, %v598
      %v648 = vpack.c.bf16 %v599, %v599
      %v649 = vpack.c.bf16 %v600, %v600
      %v650 = vpack.c.bf16 %v601, %v601
      %v651 = vpack.c.bf16 %v602, %v602
      %v652 = vpack.c.bf16 %v603, %v603
      %v653 = vpack.c.bf16 %v604, %v604
      %v654 = vpack.c.bf16 %v605, %v605
      %v655 = vpack.c.bf16 %v606, %v606
      %v656 = vpack.c.bf16 %v607, %v607
      %v657 = vpack.c.bf16 %v608, %v608
      %v658 = vpack.c.bf16 %v609, %v609
      %v659 = vpack.c.bf16 %v610, %v610
      %v660 = vpack.c.bf16 %v611, %v611
      %v661 = vpack.c.bf16 %v612, %v612
      %v662 = vpack.c.bf16 %v613, %v613
      %v663 = vpack.c.bf16 %v614, %v614
      %v664 = vpack.c.bf16 %v615, %v615
      %v665 = vpack.c.bf16 %v616, %v616
      %v666 = vpack.c.bf16 %v617, %v617
      %v667 = vpack.c.bf16 %v618, %v618
      %v668 = vpack.c.bf16 %v619, %v619
      %v669 = vpack.c.bf16 %v620, %v620
      %v670 = vpack.c.bf16 %v621, %v621
      %v671 = vpack.c.bf16 %v622, %v622
      %v672 = vpack.c.bf16 %v623, %v623
      %v673 = vpack.c.bf16 %v624, %v624
      %v674 = vpack.c.bf16 %v625, %v625
      %v675 = vpack.c.bf16 %v626, %v626
      %v676 = vpack.c.bf16 %v627, %v627
      %v677 = vpack.c.bf16 %v628, %v628
      %v678 = vpack.c.bf16 %v629, %v629
      %v679 = vpack.c.bf16 %v630, %v630
      %v680 = vpack.c.bf16 %v631, %v631
      %v681 = vpack.c.bf16 %v632, %v632
      %v682 = vpack.c.bf16 %v633, %v633
      %v683 = vpack.c.bf16 %v634, %v634
      %v684 = vpack.c.bf16 %v635, %v635
      %v685 = vpack.c.bf16 %v636, %v636
      %v686 = vpack.c.bf16 %v637, %v637
      %v733 = vunpack.c.l.b16 %v638
      %v734 = vunpack.c.l.b16 %v639
      %v735 = vunpack.c.l.b16 %v640
      %v736 = vunpack.c.l.b16 %v641
      %v737 = vunpack.c.l.b16 %v642
      %v738 = vunpack.c.l.b16 %v643
      %v739 = vunpack.c.l.b16 %v644
      %v740 = vunpack.c.l.b16 %v645
      %v741 = vunpack.c.l.b16 %v646
      %v742 = vunpack.c.l.b16 %v647
      %v743 = vunpack.c.l.b16 %v648
      %v744 = vunpack.c.l.b16 %v649
      %v745 = vunpack.c.l.b16 %v650
      %v746 = vunpack.c.l.b16 %v651
      %v747 = vunpack.c.l.b16 %v652
      %v748 = vunpack.c.l.b16 %v653
      %v749 = vunpack.c.l.b16 %v654
      %v750 = vunpack.c.l.b16 %v655
      %v751 = vunpack.c.l.b16 %v656
      %v752 = vunpack.c.l.b16 %v657
      %v753 = vunpack.c.l.b16 %v658
      %v754 = vunpack.c.l.b16 %v659
      %v755 = vunpack.c.l.b16 %v660
      %v756 = vunpack.c.l.b16 %v661
      %v757 = vunpack.c.l.b16 %v662
      %v758 = vunpack.c.l.b16 %v663
      %v759 = vunpack.c.l.b16 %v664
      %v760 = vunpack.c.l.b16 %v665
      %v761 = vunpack.c.l.b16 %v666
      %v762 = vunpack.c.l.b16 %v667
      %v763 = vunpack.c.l.b16 %v668
      %v764 = vunpack.c.l.b16 %v669
      %v765 = vunpack.c.l.b16 %v670
      %v766 = vunpack.c.l.b16 %v671
      %v767 = vunpack.c.l.b16 %v672
      %v768 = vunpack.c.l.b16 %v673
      %v769 = vunpack.c.l.b16 %v674
      %v770 = vunpack.c.l.b16 %v675
      %v771 = vunpack.c.l.b16 %v676
      %v772 = vunpack.c.l.b16 %v677
      %v773 = vunpack.c.l.b16 %v678
      %v774 = vunpack.c.l.b16 %v679
      %v775 = vunpack.c.l.b16 %v680
      %v776 = vunpack.c.l.b16 %v681
      %v777 = vunpack.c.l.b16 %v682
      %v778 = vunpack.c.l.b16 %v683
      %v779 = vpack.c.b16 %v733, %v733
      %v780 = vpack.c.b16 %v734, %v733
      %v781 = vpack.c.b16 %v736, %v735
      %v782 = vpack.c.b16 %v738, %v737
      %v783 = vpack.c.b16 %v740, %v739
      %v784 = vpack.c.b16 %v742, %v741
      %v785 = vpack.c.b16 %v744, %v743
      %v786 = vpack.c.b16 %v746, %v745
      %v787 = vpack.c.b16 %v748, %v747
      %v788 = vpack.c.b16 %v750, %v749
      %v789 = vpack.c.b16 %v752, %v751
      %v790 = vpack.c.b16 %v754, %v753
      %v791 = vpack.c.b16 %v756, %v755
      %v792 = vpack.c.b16 %v758, %v757
      %v793 = vpack.c.b16 %v760, %v759
      %v794 = vpack.c.b16 %v762, %v761
      %v795 = vpack.c.b16 %v764, %v763
      %v796 = vpack.c.b16 %v766, %v765
      %v797 = vpack.c.b16 %v768, %v767
      %v798 = vpack.c.b16 %v770, %v769
      %v799 = vpack.c.b16 %v772, %v771
      %v800 = vpack.c.b16 %v774, %v773
      %v801 = vpack.c.b16 %v776, %v775
      %v802 = vpack.c.b16 %v778, %v777
      %v806 = vunpack.c.l.b16 %v684
      %v807 = vunpack.c.l.b16 %v685
      %v808 = vunpack.c.l.b16 %v686
      %v809 = vpack.c.b16 %v735, %v734
      %v810 = vpack.c.b16 %v737, %v736
      %v811 = vpack.c.b16 %v739, %v738
      %v812 = vpack.c.b16 %v741, %v740
      %v813 = vpack.c.b16 %v743, %v742
      %v814 = vpack.c.b16 %v745, %v744
      %v815 = vpack.c.b16 %v747, %v746
      %v816 = vpack.c.b16 %v749, %v748
      %v817 = vpack.c.b16 %v751, %v750
      %v818 = vpack.c.b16 %v753, %v752
      %v819 = vpack.c.b16 %v755, %v754
      %v820 = vpack.c.b16 %v757, %v756
      %v821 = vpack.c.b16 %v759, %v758
      %v822 = vpack.c.b16 %v761, %v760
      %v823 = vpack.c.b16 %v763, %v762
      %v824 = vpack.c.b16 %v765, %v764
      %v825 = vpack.c.b16 %v767, %v766
      %v826 = vpack.c.b16 %v769, %v768
      %v827 = vpack.c.b16 %v771, %v770
      %v828 = vpack.c.b16 %v773, %v772
      %v829 = vpack.c.b16 %v775, %v774
      %v830 = vpack.c.b16 %v777, %v776
      %v831 = vpack.c.b16 %v806, %v778
      %v832 = vpack.c.b16 %v808, %v807
      %833 = vrot.lane.b32.xlu0 %v809, 8
      %v834 = vpop.permute.xlu0 %833
      %835 = vrot.lane.b32.xlu0 %v810, 8
      %v836 = vpop.permute.xlu0 %835
      %837 = vrot.lane.b32.xlu0 %v811, 8
      %v838 = vpop.permute.xlu0 %837
      %839 = vrot.lane.b32.xlu0 %v812, 8
      %v840 = vpop.permute.xlu0 %839
      %841 = vrot.lane.b32.xlu0 %v813, 8
      %v842 = vpop.permute.xlu0 %841
      %843 = vrot.lane.b32.xlu0 %v814, 8
      %v844 = vpop.permute.xlu0 %843
      %845 = vrot.lane.b32.xlu0 %v815, 8
      %v846 = vpop.permute.xlu0 %845
      %847 = vrot.lane.b32.xlu0 %v816, 8
      %v848 = vpop.permute.xlu0 %847
      %849 = vrot.lane.b32.xlu0 %v817, 8
      %v850 = vpop.permute.xlu0 %849
      %851 = vrot.lane.b32.xlu0 %v818, 8
      %v852 = vpop.permute.xlu0 %851
      %853 = vrot.lane.b32.xlu0 %v819, 8
      %v854 = vpop.permute.xlu0 %853
      %855 = vrot.lane.b32.xlu0 %v820, 8
      %v856 = vpop.permute.xlu0 %855
      %857 = vrot.lane.b32.xlu0 %v821, 8
      %v858 = vpop.permute.xlu0 %857
      %859 = vrot.lane.b32.xlu0 %v822, 8
      %v860 = vpop.permute.xlu0 %859
      %861 = vrot.lane.b32.xlu0 %v823, 8
      %v862 = vpop.permute.xlu0 %861
      %863 = vrot.lane.b32.xlu0 %v824, 8
      %v864 = vpop.permute.xlu0 %863
      %865 = vrot.lane.b32.xlu0 %v825, 8
      %v866 = vpop.permute.xlu0 %865
      %867 = vrot.lane.b32.xlu0 %v826, 8
      %v868 = vpop.permute.xlu0 %867
      %869 = vrot.lane.b32.xlu0 %v827, 8
      %v870 = vpop.permute.xlu0 %869
      %871 = vrot.lane.b32.xlu0 %v828, 8
      %v872 = vpop.permute.xlu0 %871
      %873 = vrot.lane.b32.xlu0 %v829, 8
      %v874 = vpop.permute.xlu0 %873
      %875 = vrot.lane.b32.xlu0 %v830, 8
      %v876 = vpop.permute.xlu0 %875
      %877 = vrot.lane.b32.xlu0 %v831, 8
      %v878 = vpop.permute.xlu0 %877
      %879 = vrot.lane.b32.xlu0 %v832, 8
      %v880 = vpop.permute.xlu0 %879
      %v881 = vpack.c.b16 %v807, %v806
      %v882 = vpack.c.b16 %v733, %v808
      %883 = vrot.lane.b32.xlu0 %v782, 16
      %v884 = vpop.permute.xlu0 %883
      %885 = vrot.lane.b32.xlu0 %v783, 16
      %v886 = vpop.permute.xlu0 %885
      %887 = vrot.lane.b32.xlu0 %v784, 16
      %v888 = vpop.permute.xlu0 %887
      %889 = vrot.lane.b32.xlu0 %v785, 16
      %v890 = vpop.permute.xlu0 %889
      %891 = vrot.lane.b32.xlu0 %v786, 16
      %v892 = vpop.permute.xlu0 %891
      %893 = vrot.lane.b32.xlu0 %v787, 16
      %v894 = vpop.permute.xlu0 %893
      %895 = vrot.lane.b32.xlu0 %v788, 16
      %v896 = vpop.permute.xlu0 %895
      %897 = vrot.lane.b32.xlu0 %v789, 16
      %v898 = vpop.permute.xlu0 %897
      %899 = vrot.lane.b32.xlu0 %v790, 16
      %v900 = vpop.permute.xlu0 %899
      %901 = vrot.lane.b32.xlu0 %v791, 16
      %v902 = vpop.permute.xlu0 %901
      %903 = vrot.lane.b32.xlu0 %v792, 16
      %v904 = vpop.permute.xlu0 %903
      %905 = vrot.lane.b32.xlu0 %v793, 16
      %v906 = vpop.permute.xlu0 %905
      %907 = vrot.lane.b32.xlu0 %v794, 16
      %v908 = vpop.permute.xlu0 %907
      %909 = vrot.lane.b32.xlu0 %v795, 16
      %v910 = vpop.permute.xlu0 %909
      %911 = vrot.lane.b32.xlu0 %v796, 16
      %v912 = vpop.permute.xlu0 %911
      %913 = vrot.lane.b32.xlu0 %v797, 16
      %v914 = vpop.permute.xlu0 %913
      %915 = vrot.lane.b32.xlu0 %v798, 16
      %v916 = vpop.permute.xlu0 %915
      %917 = vrot.lane.b32.xlu0 %v799, 16
      %v918 = vpop.permute.xlu0 %917
      %919 = vrot.lane.b32.xlu0 %v800, 16
      %v920 = vpop.permute.xlu0 %919
      %921 = vrot.lane.b32.xlu0 %v801, 16
      %v922 = vpop.permute.xlu0 %921
      %923 = vrot.lane.b32.xlu0 %v802, 16
      %v924 = vpop.permute.xlu0 %923
      %925 = vrot.lane.b32.xlu0 %v881, 16
      %v926 = vpop.permute.xlu0 %925
      %927 = vrot.lane.b32.xlu0 %v882, 16
      %v928 = vpop.permute.xlu0 %927
      %929 = vrot.lane.b32.xlu0 %v779, 16
      %v930 = vpop.permute.xlu0 %929
      %vm931 = vcmask 64512
      %v934 = vsel %vm931, %v779, %v834
      %v937 = vsel %vm931, %v780, %v836
      %v940 = vsel %vm931, %v781, %v838
      %v943 = vsel %vm931, %v782, %v840
      %v946 = vsel %vm931, %v783, %v842
      %v949 = vsel %vm931, %v784, %v844
      %v952 = vsel %vm931, %v785, %v846
      %v955 = vsel %vm931, %v786, %v848
      %v958 = vsel %vm931, %v787, %v850
      %v961 = vsel %vm931, %v788, %v852
      %v964 = vsel %vm931, %v789, %v854
      %v967 = vsel %vm931, %v790, %v856
      %v970 = vsel %vm931, %v791, %v858
      %v973 = vsel %vm931, %v792, %v860
      %v976 = vsel %vm931, %v793, %v862
      %v979 = vsel %vm931, %v794, %v864
      %v982 = vsel %vm931, %v795, %v866
      %v985 = vsel %vm931, %v796, %v868
      %v988 = vsel %vm931, %v797, %v870
      %v991 = vsel %vm931, %v798, %v872
      %v994 = vsel %vm931, %v799, %v874
      %v997 = vsel %vm931, %v800, %v876
      %v1000 = vsel %vm931, %v801, %v878
      %v1003 = vsel %vm931, %v802, %v880
      %vm1004 = vcmask 130048
      %v1006 = vsel %vm1004, %v934, %v884
      %v1008 = vsel %vm1004, %v937, %v886
      %v1010 = vsel %vm1004, %v940, %v888
      %v1012 = vsel %vm1004, %v943, %v890
      %v1014 = vsel %vm1004, %v946, %v892
      %v1016 = vsel %vm1004, %v949, %v894
      %v1018 = vsel %vm1004, %v952, %v896
      %v1020 = vsel %vm1004, %v955, %v898
      %v1022 = vsel %vm1004, %v958, %v900
      %v1024 = vsel %vm1004, %v961, %v902
      %v1026 = vsel %vm1004, %v964, %v904
      %v1028 = vsel %vm1004, %v967, %v906
      %v1030 = vsel %vm1004, %v970, %v908
      %v1032 = vsel %vm1004, %v973, %v910
      %v1034 = vsel %vm1004, %v976, %v912
      %v1036 = vsel %vm1004, %v979, %v914
      %v1038 = vsel %vm1004, %v982, %v916
      %v1040 = vsel %vm1004, %v985, %v918
      %v1042 = vsel %vm1004, %v988, %v920
      %v1044 = vsel %vm1004, %v991, %v922
      %v1046 = vsel %vm1004, %v994, %v924
      %v1048 = vsel %vm1004, %v997, %v926
      %v1050 = vsel %vm1004, %v1000, %v928
      %v1052 = vsel %vm1004, %v1003, %v930
      %v1053 = vld [vmem:[%s301] sm:$0xf]
      %v1054 = vld [vmem:[%s301 + $0x4] sm:$0xf]
      %v1055 = vld [vmem:[%s301 + $0x8] sm:$0xf]
      %v1059 = vunpack.c.l.b16 %v1053
      %v1060 = vunpack.c.l.b16 %v1054
      %v1061 = vunpack.c.l.b16 %v1055
      %v1062 = vpack.c.b16 %v1060, %v1059
      %v1063 = vpack.c.b16 %v1061, %v1061
      %vm1065 = vcmask 195584
      %v1066 = vsel %vm1065, %v1006, 0
      %v1068 = vsel %vm1065, %v1008, 0
      %v1070 = vsel %vm1065, %v1010, 0
      %v1072 = vsel %vm1065, %v1012, 0
      %v1074 = vsel %vm1065, %v1014, 0
      %v1076 = vsel %vm1065, %v1016, 0
      %v1078 = vsel %vm1065, %v1018, 0
      %v1080 = vsel %vm1065, %v1020, 0
      %v1082 = vsel %vm1065, %v1022, 0
      %v1084 = vsel %vm1065, %v1024, 0
      %v1086 = vsel %vm1065, %v1026, 0
      %v1088 = vsel %vm1065, %v1028, 0
      %v1090 = vsel %vm1065, %v1030, 0
      %v1092 = vsel %vm1065, %v1032, 0
      %v1094 = vsel %vm1065, %v1034, 0
      %v1096 = vsel %vm1065, %v1036, 0
      %v1098 = vsel %vm1065, %v1038, 0
      %v1100 = vsel %vm1065, %v1040, 0
      %v1102 = vsel %vm1065, %v1042, 0
      %v1104 = vsel %vm1065, %v1044, 0
      %v1106 = vsel %vm1065, %v1046, 0
      %v1108 = vsel %vm1065, %v1048, 0
      %v1110 = vsel %vm1065, %v1050, 0
      %v1112 = vsel %vm1065, %v1052, 0
      %vm1114 = vcmask 1043456
      %v1116 = vsel %vm1114, %v1063, 0
      %1118 = vmatpush.bf16.msra.mxu0 0
      %1119 = vmatpush.bf16.msra.mxu0 0
      %1120 = vmatpush.bf16.msra.mxu0 0
      %1121 = vmatpush.bf16.msra.mxu0 0
      %1122 = vmatpush.bf16.msra.mxu0 0
      %1123 = vmatpush.bf16.msra.mxu0 0
      %1124 = vmatpush.bf16.msra.mxu0 %v1116
      %1125 = vmatpush.bf16.msra.mxu0 %v1062
      %1126 = vmatmul.bf16.gmra.mxu0 %v1066
      %v1127 = vpop.f32.mrf.mxu0
      %v1128 = vadd.f32 0.0, %v1127
      %v1129 = vpop.f32.mrf.mxu0
      %v1130 = vadd.f32 0.0, %v1129
      %1131 = vmatmul.bf16.gmra.mxu0 %v1068
      %v1132 = vpop.f32.mrf.mxu0
      %v1133 = vadd.f32 0.0, %v1132
      %v1134 = vpop.f32.mrf.mxu0
      %v1135 = vadd.f32 0.0, %v1134
      %1136 = vmatmul.bf16.gmra.mxu0 %v1070
      %v1137 = vpop.f32.mrf.mxu0
      %v1138 = vadd.f32 0.0, %v1137
      %v1139 = vpop.f32.mrf.mxu0
      %v1140 = vadd.f32 0.0, %v1139
      %1141 = vmatmul.bf16.gmra.mxu0 %v1072
      %v1142 = vpop.f32.mrf.mxu0
      %v1143 = vadd.f32 0.0, %v1142
      %v1144 = vpop.f32.mrf.mxu0
      %v1145 = vadd.f32 0.0, %v1144
      %1146 = vmatmul.bf16.gmra.mxu0 %v1074
      %v1147 = vpop.f32.mrf.mxu0
      %v1148 = vadd.f32 0.0, %v1147
      %v1149 = vpop.f32.mrf.mxu0
      %v1150 = vadd.f32 0.0, %v1149
      %1151 = vmatmul.bf16.gmra.mxu0 %v1076
      %v1152 = vpop.f32.mrf.mxu0
      %v1153 = vadd.f32 0.0, %v1152
      %v1154 = vpop.f32.mrf.mxu0
      %v1155 = vadd.f32 0.0, %v1154
      %1156 = vmatmul.bf16.gmra.mxu0 %v1078
      %v1157 = vpop.f32.mrf.mxu0
      %v1158 = vadd.f32 0.0, %v1157
      %v1159 = vpop.f32.mrf.mxu0
      %v1160 = vadd.f32 0.0, %v1159
      %1161 = vmatmul.bf16.gmra.mxu0 %v1080
      %v1162 = vpop.f32.mrf.mxu0
      %v1163 = vadd.f32 0.0, %v1162
      %v1164 = vpop.f32.mrf.mxu0
      %v1165 = vadd.f32 0.0, %v1164
      %1166 = vmatmul.bf16.gmra.mxu0 %v1082
      %v1167 = vpop.f32.mrf.mxu0
      %v1168 = vadd.f32 0.0, %v1167
      %v1169 = vpop.f32.mrf.mxu0
      %v1170 = vadd.f32 0.0, %v1169
      %1171 = vmatmul.bf16.gmra.mxu0 %v1084
      %v1172 = vpop.f32.mrf.mxu0
      %v1173 = vadd.f32 0.0, %v1172
      %v1174 = vpop.f32.mrf.mxu0
      %v1175 = vadd.f32 0.0, %v1174
      %1176 = vmatmul.bf16.gmra.mxu0 %v1086
      %v1177 = vpop.f32.mrf.mxu0
      %v1178 = vadd.f32 0.0, %v1177
      %v1179 = vpop.f32.mrf.mxu0
      %v1180 = vadd.f32 0.0, %v1179
      %1181 = vmatmul.bf16.gmra.mxu0 %v1088
      %v1182 = vpop.f32.mrf.mxu0
      %v1183 = vadd.f32 0.0, %v1182
      %v1184 = vpop.f32.mrf.mxu0
      %v1185 = vadd.f32 0.0, %v1184
      %1186 = vmatmul.bf16.gmra.mxu0 %v1090
      %v1187 = vpop.f32.mrf.mxu0
      %v1188 = vadd.f32 0.0, %v1187
      %v1189 = vpop.f32.mrf.mxu0
      %v1190 = vadd.f32 0.0, %v1189
      %1191 = vmatmul.bf16.gmra.mxu0 %v1092
      %v1192 = vpop.f32.mrf.mxu0
      %v1193 = vadd.f32 0.0, %v1192
      %v1194 = vpop.f32.mrf.mxu0
      %v1195 = vadd.f32 0.0, %v1194
      %1196 = vmatmul.bf16.gmra.mxu0 %v1094
      %v1197 = vpop.f32.mrf.mxu0
      %v1198 = vadd.f32 0.0, %v1197
      %v1199 = vpop.f32.mrf.mxu0
      %v1200 = vadd.f32 0.0, %v1199
      %1201 = vmatmul.bf16.gmra.mxu0 %v1096
      %v1202 = vpop.f32.mrf.mxu0
      %v1203 = vadd.f32 0.0, %v1202
      %v1204 = vpop.f32.mrf.mxu0
      %v1205 = vadd.f32 0.0, %v1204
      %1206 = vmatmul.bf16.gmra.mxu0 %v1098
      %v1207 = vpop.f32.mrf.mxu0
      %v1208 = vadd.f32 0.0, %v1207
      %v1209 = vpop.f32.mrf.mxu0
      %v1210 = vadd.f32 0.0, %v1209
      %1211 = vmatmul.bf16.gmra.mxu0 %v1100
      %v1212 = vpop.f32.mrf.mxu0
      %v1213 = vadd.f32 0.0, %v1212
      %v1214 = vpop.f32.mrf.mxu0
      %v1215 = vadd.f32 0.0, %v1214
      %1216 = vmatmul.bf16.gmra.mxu0 %v1102
      %v1217 = vpop.f32.mrf.mxu0
      %v1218 = vadd.f32 0.0, %v1217
      %v1219 = vpop.f32.mrf.mxu0
      %v1220 = vadd.f32 0.0, %v1219
      %1221 = vmatmul.bf16.gmra.mxu0 %v1104
      %v1222 = vpop.f32.mrf.mxu0
      %v1223 = vadd.f32 0.0, %v1222
      %v1224 = vpop.f32.mrf.mxu0
      %v1225 = vadd.f32 0.0, %v1224
      %1226 = vmatmul.bf16.gmra.mxu0 %v1106
      %v1227 = vpop.f32.mrf.mxu0
      %v1228 = vadd.f32 0.0, %v1227
      %v1229 = vpop.f32.mrf.mxu0
      %v1230 = vadd.f32 0.0, %v1229
      %1231 = vmatmul.bf16.gmra.mxu0 %v1108
      %v1232 = vpop.f32.mrf.mxu0
      %v1233 = vadd.f32 0.0, %v1232
      %v1234 = vpop.f32.mrf.mxu0
      %v1235 = vadd.f32 0.0, %v1234
      %1236 = vmatmul.bf16.gmra.mxu0 %v1110
      %v1237 = vpop.f32.mrf.mxu0
      %v1238 = vadd.f32 0.0, %v1237
      %v1239 = vpop.f32.mrf.mxu0
      %v1240 = vadd.f32 0.0, %v1239
      %1241 = vmatmul.bf16.gmra.mxu0 %v1112
      %v1242 = vpop.f32.mrf.mxu0
      %v1243 = vadd.f32 0.0, %v1242
      %v1244 = vpop.f32.mrf.mxu0
      %v1245 = vadd.f32 0.0, %v1244
      %1246 = vdwg.mxu0
      %s1247 = scalar_lea.vmem %s301, 12
      %v1248 = vld [vmem:[%s1247] sm:$0xf]
      %v1249 = vld [vmem:[%s1247 + $0x4] sm:$0xf]
      %v1250 = vld [vmem:[%s1247 + $0x8] sm:$0xf]
      %v1254 = vunpack.c.l.b16 %v1248
      %v1255 = vunpack.c.l.b16 %v1249
      %v1256 = vunpack.c.l.b16 %v1250
      %v1257 = vpack.c.b16 %v1255, %v1254
      %v1258 = vpack.c.b16 %v1256, %v1256
      %v1261 = vsel %vm1114, %v1258, 0
      %1263 = vmatpush.bf16.msra.mxu0 0
      %1264 = vmatpush.bf16.msra.mxu0 0
      %1265 = vmatpush.bf16.msra.mxu0 0
      %1266 = vmatpush.bf16.msra.mxu0 0
      %1267 = vmatpush.bf16.msra.mxu0 0
      %1268 = vmatpush.bf16.msra.mxu0 0
      %1269 = vmatpush.bf16.msra.mxu0 %v1261
      %1270 = vmatpush.bf16.msra.mxu0 %v1257
      %1271 = vmatmul.bf16.gmra.mxu0 %v1066
      %v1272 = vpop.f32.mrf.mxu0
      %v1273 = vadd.f32 0.0, %v1272
      %v1274 = vpop.f32.mrf.mxu0
      %v1275 = vadd.f32 0.0, %v1274
      %1276 = vmatmul.bf16.gmra.mxu0 %v1068
      %v1277 = vpop.f32.mrf.mxu0
      %v1278 = vadd.f32 0.0, %v1277
      %v1279 = vpop.f32.mrf.mxu0
      %v1280 = vadd.f32 0.0, %v1279
      %1281 = vmatmul.bf16.gmra.mxu0 %v1070
      %v1282 = vpop.f32.mrf.mxu0
      %v1283 = vadd.f32 0.0, %v1282
      %v1284 = vpop.f32.mrf.mxu0
      %v1285 = vadd.f32 0.0, %v1284
      %1286 = vmatmul.bf16.gmra.mxu0 %v1072
      %v1287 = vpop.f32.mrf.mxu0
      %v1288 = vadd.f32 0.0, %v1287
      %v1289 = vpop.f32.mrf.mxu0
      %v1290 = vadd.f32 0.0, %v1289
      %1291 = vmatmul.bf16.gmra.mxu0 %v1074
      %v1292 = vpop.f32.mrf.mxu0
      %v1293 = vadd.f32 0.0, %v1292
      %v1294 = vpop.f32.mrf.mxu0
      %v1295 = vadd.f32 0.0, %v1294
      %1296 = vmatmul.bf16.gmra.mxu0 %v1076
      %v1297 = vpop.f32.mrf.mxu0
      %v1298 = vadd.f32 0.0, %v1297
      %v1299 = vpop.f32.mrf.mxu0
      %v1300 = vadd.f32 0.0, %v1299
      %1301 = vmatmul.bf16.gmra.mxu0 %v1078
      %v1302 = vpop.f32.mrf.mxu0
      %v1303 = vadd.f32 0.0, %v1302
      %v1304 = vpop.f32.mrf.mxu0
      %v1305 = vadd.f32 0.0, %v1304
      %1306 = vmatmul.bf16.gmra.mxu0 %v1080
      %v1307 = vpop.f32.mrf.mxu0
      %v1308 = vadd.f32 0.0, %v1307
      %v1309 = vpop.f32.mrf.mxu0
      %v1310 = vadd.f32 0.0, %v1309
      %1311 = vmatmul.bf16.gmra.mxu0 %v1082
      %v1312 = vpop.f32.mrf.mxu0
      %v1313 = vadd.f32 0.0, %v1312
      %v1314 = vpop.f32.mrf.mxu0
      %v1315 = vadd.f32 0.0, %v1314
      %1316 = vmatmul.bf16.gmra.mxu0 %v1084
      %v1317 = vpop.f32.mrf.mxu0
      %v1318 = vadd.f32 0.0, %v1317
      %v1319 = vpop.f32.mrf.mxu0
      %v1320 = vadd.f32 0.0, %v1319
      %1321 = vmatmul.bf16.gmra.mxu0 %v1086
      %v1322 = vpop.f32.mrf.mxu0
      %v1323 = vadd.f32 0.0, %v1322
      %v1324 = vpop.f32.mrf.mxu0
      %v1325 = vadd.f32 0.0, %v1324
      %1326 = vmatmul.bf16.gmra.mxu0 %v1088
      %v1327 = vpop.f32.mrf.mxu0
      %v1328 = vadd.f32 0.0, %v1327
      %v1329 = vpop.f32.mrf.mxu0
      %v1330 = vadd.f32 0.0, %v1329
      %1331 = vmatmul.bf16.gmra.mxu0 %v1090
      %v1332 = vpop.f32.mrf.mxu0
      %v1333 = vadd.f32 0.0, %v1332
      %v1334 = vpop.f32.mrf.mxu0
      %v1335 = vadd.f32 0.0, %v1334
      %1336 = vmatmul.bf16.gmra.mxu0 %v1092
      %v1337 = vpop.f32.mrf.mxu0
      %v1338 = vadd.f32 0.0, %v1337
      %v1339 = vpop.f32.mrf.mxu0
      %v1340 = vadd.f32 0.0, %v1339
      %1341 = vmatmul.bf16.gmra.mxu0 %v1094
      %v1342 = vpop.f32.mrf.mxu0
      %v1343 = vadd.f32 0.0, %v1342
      %v1344 = vpop.f32.mrf.mxu0
      %v1345 = vadd.f32 0.0, %v1344
      %1346 = vmatmul.bf16.gmra.mxu0 %v1096
      %v1347 = vpop.f32.mrf.mxu0
      %v1348 = vadd.f32 0.0, %v1347
      %v1349 = vpop.f32.mrf.mxu0
      %v1350 = vadd.f32 0.0, %v1349
      %1351 = vmatmul.bf16.gmra.mxu0 %v1098
      %v1352 = vpop.f32.mrf.mxu0
      %v1353 = vadd.f32 0.0, %v1352
      %v1354 = vpop.f32.mrf.mxu0
      %v1355 = vadd.f32 0.0, %v1354
      %1356 = vmatmul.bf16.gmra.mxu0 %v1100
      %v1357 = vpop.f32.mrf.mxu0
      %v1358 = vadd.f32 0.0, %v1357
      %v1359 = vpop.f32.mrf.mxu0
      %v1360 = vadd.f32 0.0, %v1359
      %1361 = vmatmul.bf16.gmra.mxu0 %v1102
      %v1362 = vpop.f32.mrf.mxu0
      %v1363 = vadd.f32 0.0, %v1362
      %v1364 = vpop.f32.mrf.mxu0
      %v1365 = vadd.f32 0.0, %v1364
      %1366 = vmatmul.bf16.gmra.mxu0 %v1104
      %v1367 = vpop.f32.mrf.mxu0
      %v1368 = vadd.f32 0.0, %v1367
      %v1369 = vpop.f32.mrf.mxu0
      %v1370 = vadd.f32 0.0, %v1369
      %1371 = vmatmul.bf16.gmra.mxu0 %v1106
      %v1372 = vpop.f32.mrf.mxu0
      %v1373 = vadd.f32 0.0, %v1372
      %v1374 = vpop.f32.mrf.mxu0
      %v1375 = vadd.f32 0.0, %v1374
      %1376 = vmatmul.bf16.gmra.mxu0 %v1108
      %v1377 = vpop.f32.mrf.mxu0
      %v1378 = vadd.f32 0.0, %v1377
      %v1379 = vpop.f32.mrf.mxu0
      %v1380 = vadd.f32 0.0, %v1379
      %1381 = vmatmul.bf16.gmra.mxu0 %v1110
      %v1382 = vpop.f32.mrf.mxu0
      %v1383 = vadd.f32 0.0, %v1382
      %v1384 = vpop.f32.mrf.mxu0
      %v1385 = vadd.f32 0.0, %v1384
      %1386 = vmatmul.bf16.gmra.mxu0 %v1112
      %v1387 = vpop.f32.mrf.mxu0
      %v1388 = vadd.f32 0.0, %v1387
      %v1389 = vpop.f32.mrf.mxu0
      %v1390 = vadd.f32 0.0, %v1389
      %1391 = vdwg.mxu0
      %s1392 = scalar_lea.vmem %s301, 24
      %v1393 = vld [vmem:[%s1392] sm:$0xf]
      %v1394 = vld [vmem:[%s1392 + $0x4] sm:$0xf]
      %v1395 = vld [vmem:[%s1392 + $0x8] sm:$0xf]
      %v1399 = vunpack.c.l.b16 %v1393
      %v1400 = vunpack.c.l.b16 %v1394
      %v1401 = vunpack.c.l.b16 %v1395
      %v1402 = vpack.c.b16 %v1400, %v1399
      %v1403 = vpack.c.b16 %v1401, %v1401
      %v1406 = vsel %vm1114, %v1403, 0
      %1408 = vmatpush.bf16.msra.mxu0 0
      %1409 = vmatpush.bf16.msra.mxu0 0
      %1410 = vmatpush.bf16.msra.mxu0 0
      %1411 = vmatpush.bf16.msra.mxu0 0
      %1412 = vmatpush.bf16.msra.mxu0 0
      %1413 = vmatpush.bf16.msra.mxu0 0
      %1414 = vmatpush.bf16.msra.mxu0 %v1406
      %1415 = vmatpush.bf16.msra.mxu0 %v1402
      %1416 = vmatmul.bf16.gmra.mxu0 %v1066
      %v1417 = vpop.f32.mrf.mxu0
      %v1418 = vadd.f32 0.0, %v1417
      %v1419 = vpop.f32.mrf.mxu0
      %v1420 = vadd.f32 0.0, %v1419
      %1421 = vmatmul.bf16.gmra.mxu0 %v1068
      %v1422 = vpop.f32.mrf.mxu0
      %v1423 = vadd.f32 0.0, %v1422
      %v1424 = vpop.f32.mrf.mxu0
      %v1425 = vadd.f32 0.0, %v1424
      %1426 = vmatmul.bf16.gmra.mxu0 %v1070
      %v1427 = vpop.f32.mrf.mxu0
      %v1428 = vadd.f32 0.0, %v1427
      %v1429 = vpop.f32.mrf.mxu0
      %v1430 = vadd.f32 0.0, %v1429
      %1431 = vmatmul.bf16.gmra.mxu0 %v1072
      %v1432 = vpop.f32.mrf.mxu0
      %v1433 = vadd.f32 0.0, %v1432
      %v1434 = vpop.f32.mrf.mxu0
      %v1435 = vadd.f32 0.0, %v1434
      %1436 = vmatmul.bf16.gmra.mxu0 %v1074
      %v1437 = vpop.f32.mrf.mxu0
      %v1438 = vadd.f32 0.0, %v1437
      %v1439 = vpop.f32.mrf.mxu0
      %v1440 = vadd.f32 0.0, %v1439
      %1441 = vmatmul.bf16.gmra.mxu0 %v1076
      %v1442 = vpop.f32.mrf.mxu0
      %v1443 = vadd.f32 0.0, %v1442
      %v1444 = vpop.f32.mrf.mxu0
      %v1445 = vadd.f32 0.0, %v1444
      %1446 = vmatmul.bf16.gmra.mxu0 %v1078
      %v1447 = vpop.f32.mrf.mxu0
      %v1448 = vadd.f32 0.0, %v1447
      %v1449 = vpop.f32.mrf.mxu0
      %v1450 = vadd.f32 0.0, %v1449
      %1451 = vmatmul.bf16.gmra.mxu0 %v1080
      %v1452 = vpop.f32.mrf.mxu0
      %v1453 = vadd.f32 0.0, %v1452
      %v1454 = vpop.f32.mrf.mxu0
      %v1455 = vadd.f32 0.0, %v1454
      %1456 = vmatmul.bf16.gmra.mxu0 %v1082
      %v1457 = vpop.f32.mrf.mxu0
      %v1458 = vadd.f32 0.0, %v1457
      %v1459 = vpop.f32.mrf.mxu0
      %v1460 = vadd.f32 0.0, %v1459
      %1461 = vmatmul.bf16.gmra.mxu0 %v1084
      %v1462 = vpop.f32.mrf.mxu0
      %v1463 = vadd.f32 0.0, %v1462
      %v1464 = vpop.f32.mrf.mxu0
      %v1465 = vadd.f32 0.0, %v1464
      %1466 = vmatmul.bf16.gmra.mxu0 %v1086
      %v1467 = vpop.f32.mrf.mxu0
      %v1468 = vadd.f32 0.0, %v1467
      %v1469 = vpop.f32.mrf.mxu0
      %v1470 = vadd.f32 0.0, %v1469
      %1471 = vmatmul.bf16.gmra.mxu0 %v1088
      %v1472 = vpop.f32.mrf.mxu0
      %v1473 = vadd.f32 0.0, %v1472
      %v1474 = vpop.f32.mrf.mxu0
      %v1475 = vadd.f32 0.0, %v1474
      %1476 = vmatmul.bf16.gmra.mxu0 %v1090
      %v1477 = vpop.f32.mrf.mxu0
      %v1478 = vadd.f32 0.0, %v1477
      %v1479 = vpop.f32.mrf.mxu0
      %v1480 = vadd.f32 0.0, %v1479
      %1481 = vmatmul.bf16.gmra.mxu0 %v1092
      %v1482 = vpop.f32.mrf.mxu0
      %v1483 = vadd.f32 0.0, %v1482
      %v1484 = vpop.f32.mrf.mxu0
      %v1485 = vadd.f32 0.0, %v1484
      %1486 = vmatmul.bf16.gmra.mxu0 %v1094
      %v1487 = vpop.f32.mrf.mxu0
      %v1488 = vadd.f32 0.0, %v1487
      %v1489 = vpop.f32.mrf.mxu0
      %v1490 = vadd.f32 0.0, %v1489
      %1491 = vmatmul.bf16.gmra.mxu0 %v1096
      %v1492 = vpop.f32.mrf.mxu0
      %v1493 = vadd.f32 0.0, %v1492
      %v1494 = vpop.f32.mrf.mxu0
      %v1495 = vadd.f32 0.0, %v1494
      %1496 = vmatmul.bf16.gmra.mxu0 %v1098
      %v1497 = vpop.f32.mrf.mxu0
      %v1498 = vadd.f32 0.0, %v1497
      %v1499 = vpop.f32.mrf.mxu0
      %v1500 = vadd.f32 0.0, %v1499
      %1501 = vmatmul.bf16.gmra.mxu0 %v1100
      %v1502 = vpop.f32.mrf.mxu0
      %v1503 = vadd.f32 0.0, %v1502
      %v1504 = vpop.f32.mrf.mxu0
      %v1505 = vadd.f32 0.0, %v1504
      %1506 = vmatmul.bf16.gmra.mxu0 %v1102
      %v1507 = vpop.f32.mrf.mxu0
      %v1508 = vadd.f32 0.0, %v1507
      %v1509 = vpop.f32.mrf.mxu0
      %v1510 = vadd.f32 0.0, %v1509
      %1511 = vmatmul.bf16.gmra.mxu0 %v1104
      %v1512 = vpop.f32.mrf.mxu0
      %v1513 = vadd.f32 0.0, %v1512
      %v1514 = vpop.f32.mrf.mxu0
      %v1515 = vadd.f32 0.0, %v1514
      %1516 = vmatmul.bf16.gmra.mxu0 %v1106
      %v1517 = vpop.f32.mrf.mxu0
      %v1518 = vadd.f32 0.0, %v1517
      %v1519 = vpop.f32.mrf.mxu0
      %v1520 = vadd.f32 0.0, %v1519
      %1521 = vmatmul.bf16.gmra.mxu0 %v1108
      %v1522 = vpop.f32.mrf.mxu0
      %v1523 = vadd.f32 0.0, %v1522
      %v1524 = vpop.f32.mrf.mxu0
      %v1525 = vadd.f32 0.0, %v1524
      %1526 = vmatmul.bf16.gmra.mxu0 %v1110
      %v1527 = vpop.f32.mrf.mxu0
      %v1528 = vadd.f32 0.0, %v1527
      %v1529 = vpop.f32.mrf.mxu0
      %v1530 = vadd.f32 0.0, %v1529
      %1531 = vmatmul.bf16.gmra.mxu0 %v1112
      %v1532 = vpop.f32.mrf.mxu0
      %v1533 = vadd.f32 0.0, %v1532
      %v1534 = vpop.f32.mrf.mxu0
      %v1535 = vadd.f32 0.0, %v1534
      %1536 = vdwg.mxu0
      %vm1585 = vcmask 1046528
      %v1586 = vrot.slane %v1273, 1
      %v1587 = vrot.slane %v1275, 1
      %v1588 = vsel %vm1585, %v1586, %v1587
      %v1589 = vrot.slane %v1278, 1
      %v1590 = vsel %vm1585, %v1587, %v1589
      %v1591 = vrot.slane %v1280, 1
      %v1592 = vsel %vm1585, %v1589, %v1591
      %v1593 = vrot.slane %v1283, 1
      %v1594 = vsel %vm1585, %v1591, %v1593
      %v1595 = vrot.slane %v1285, 1
      %v1596 = vsel %vm1585, %v1593, %v1595
      %v1597 = vrot.slane %v1288, 1
      %v1598 = vsel %vm1585, %v1595, %v1597
      %v1599 = vrot.slane %v1290, 1
      %v1600 = vsel %vm1585, %v1597, %v1599
      %v1601 = vrot.slane %v1293, 1
      %v1602 = vsel %vm1585, %v1599, %v1601
      %v1603 = vrot.slane %v1295, 1
      %v1604 = vsel %vm1585, %v1601, %v1603
      %v1605 = vrot.slane %v1298, 1
      %v1606 = vsel %vm1585, %v1603, %v1605
      %v1607 = vrot.slane %v1300, 1
      %v1608 = vsel %vm1585, %v1605, %v1607
      %v1609 = vrot.slane %v1303, 1
      %v1610 = vsel %vm1585, %v1607, %v1609
      %v1611 = vrot.slane %v1305, 1
      %v1612 = vsel %vm1585, %v1609, %v1611
      %v1613 = vrot.slane %v1308, 1
      %v1614 = vsel %vm1585, %v1611, %v1613
      %v1615 = vrot.slane %v1310, 1
      %v1616 = vsel %vm1585, %v1613, %v1615
      %v1617 = vrot.slane %v1313, 1
      %v1618 = vsel %vm1585, %v1615, %v1617
      %v1619 = vrot.slane %v1315, 1
      %v1620 = vsel %vm1585, %v1617, %v1619
      %v1621 = vrot.slane %v1318, 1
      %v1622 = vsel %vm1585, %v1619, %v1621
      %v1623 = vrot.slane %v1320, 1
      %v1624 = vsel %vm1585, %v1621, %v1623
      %v1625 = vrot.slane %v1323, 1
      %v1626 = vsel %vm1585, %v1623, %v1625
      %v1627 = vrot.slane %v1325, 1
      %v1628 = vsel %vm1585, %v1625, %v1627
      %v1629 = vrot.slane %v1328, 1
      %v1630 = vsel %vm1585, %v1627, %v1629
      %v1631 = vrot.slane %v1330, 1
      %v1632 = vsel %vm1585, %v1629, %v1631
      %v1633 = vrot.slane %v1333, 1
      %v1634 = vsel %vm1585, %v1631, %v1633
      %v1635 = vrot.slane %v1335, 1
      %v1636 = vsel %vm1585, %v1633, %v1635
      %v1637 = vrot.slane %v1338, 1
      %v1638 = vsel %vm1585, %v1635, %v1637
      %v1639 = vrot.slane %v1340, 1
      %v1640 = vsel %vm1585, %v1637, %v1639
      %v1641 = vrot.slane %v1343, 1
      %v1642 = vsel %vm1585, %v1639, %v1641
      %v1643 = vrot.slane %v1345, 1
      %v1644 = vsel %vm1585, %v1641, %v1643
      %v1645 = vrot.slane %v1348, 1
      %v1646 = vsel %vm1585, %v1643, %v1645
      %v1647 = vrot.slane %v1350, 1
      %v1648 = vsel %vm1585, %v1645, %v1647
      %v1649 = vrot.slane %v1353, 1
      %v1650 = vsel %vm1585, %v1647, %v1649
      %v1651 = vrot.slane %v1355, 1
      %v1652 = vsel %vm1585, %v1649, %v1651
      %v1653 = vrot.slane %v1358, 1
      %v1654 = vsel %vm1585, %v1651, %v1653
      %v1655 = vrot.slane %v1360, 1
      %v1656 = vsel %vm1585, %v1653, %v1655
      %v1657 = vrot.slane %v1363, 1
      %v1658 = vsel %vm1585, %v1655, %v1657
      %v1659 = vrot.slane %v1365, 1
      %v1660 = vsel %vm1585, %v1657, %v1659
      %v1661 = vrot.slane %v1368, 1
      %v1662 = vsel %vm1585, %v1659, %v1661
      %v1663 = vrot.slane %v1370, 1
      %v1664 = vsel %vm1585, %v1661, %v1663
      %v1665 = vrot.slane %v1373, 1
      %v1666 = vsel %vm1585, %v1663, %v1665
      %v1667 = vrot.slane %v1375, 1
      %v1668 = vsel %vm1585, %v1665, %v1667
      %v1669 = vrot.slane %v1378, 1
      %v1670 = vsel %vm1585, %v1667, %v1669
      %v1671 = vrot.slane %v1380, 1
      %v1672 = vsel %vm1585, %v1669, %v1671
      %v1673 = vrot.slane %v1383, 1
      %v1674 = vsel %vm1585, %v1671, %v1673
      %v1675 = vrot.slane %v1385, 1
      %v1676 = vsel %vm1585, %v1673, %v1675
      %v1677 = vrot.slane %v1388, 1
      %v1678 = vsel %vm1585, %v1675, %v1677
      %v1679 = vrot.slane %v1390, 1
      %v1680 = vsel %vm1585, %v1677, %v1679
      %v1729 = vadd.f32 %v1128, %v1588
      %v1730 = vadd.f32 %v1130, %v1590
      %v1731 = vadd.f32 %v1133, %v1592
      %v1732 = vadd.f32 %v1135, %v1594
      %v1733 = vadd.f32 %v1138, %v1596
      %v1734 = vadd.f32 %v1140, %v1598
      %v1735 = vadd.f32 %v1143, %v1600
      %v1736 = vadd.f32 %v1145, %v1602
      %v1737 = vadd.f32 %v1148, %v1604
      %v1738 = vadd.f32 %v1150, %v1606
      %v1739 = vadd.f32 %v1153, %v1608
      %v1740 = vadd.f32 %v1155, %v1610
      %v1741 = vadd.f32 %v1158, %v1612
      %v1742 = vadd.f32 %v1160, %v1614
      %v1743 = vadd.f32 %v1163, %v1616
      %v1744 = vadd.f32 %v1165, %v1618
      %v1745 = vadd.f32 %v1168, %v1620
      %v1746 = vadd.f32 %v1170, %v1622
      %v1747 = vadd.f32 %v1173, %v1624
      %v1748 = vadd.f32 %v1175, %v1626
      %v1749 = vadd.f32 %v1178, %v1628
      %v1750 = vadd.f32 %v1180, %v1630
      %v1751 = vadd.f32 %v1183, %v1632
      %v1752 = vadd.f32 %v1185, %v1634
      %v1753 = vadd.f32 %v1188, %v1636
      %v1754 = vadd.f32 %v1190, %v1638
      %v1755 = vadd.f32 %v1193, %v1640
      %v1756 = vadd.f32 %v1195, %v1642
      %v1757 = vadd.f32 %v1198, %v1644
      %v1758 = vadd.f32 %v1200, %v1646
      %v1759 = vadd.f32 %v1203, %v1648
      %v1760 = vadd.f32 %v1205, %v1650
      %v1761 = vadd.f32 %v1208, %v1652
      %v1762 = vadd.f32 %v1210, %v1654
      %v1763 = vadd.f32 %v1213, %v1656
      %v1764 = vadd.f32 %v1215, %v1658
      %v1765 = vadd.f32 %v1218, %v1660
      %v1766 = vadd.f32 %v1220, %v1662
      %v1767 = vadd.f32 %v1223, %v1664
      %v1768 = vadd.f32 %v1225, %v1666
      %v1769 = vadd.f32 %v1228, %v1668
      %v1770 = vadd.f32 %v1230, %v1670
      %v1771 = vadd.f32 %v1233, %v1672
      %v1772 = vadd.f32 %v1235, %v1674
      %v1773 = vadd.f32 %v1238, %v1676
      %v1774 = vadd.f32 %v1240, %v1678
      %v1775 = vadd.f32 %v1243, %v1680
      %v1776 = vadd.f32 %v1245, %v1679
      %vm1825 = vcmask 1045504
      %v1826 = vrot.slane %v1418, 2
      %v1827 = vrot.slane %v1420, 2
      %v1828 = vsel %vm1825, %v1826, %v1827
      %v1829 = vrot.slane %v1423, 2
      %v1830 = vsel %vm1825, %v1827, %v1829
      %v1831 = vrot.slane %v1425, 2
      %v1832 = vsel %vm1825, %v1829, %v1831
      %v1833 = vrot.slane %v1428, 2
      %v1834 = vsel %vm1825, %v1831, %v1833
      %v1835 = vrot.slane %v1430, 2
      %v1836 = vsel %vm1825, %v1833, %v1835
      %v1837 = vrot.slane %v1433, 2
      %v1838 = vsel %vm1825, %v1835, %v1837
      %v1839 = vrot.slane %v1435, 2
      %v1840 = vsel %vm1825, %v1837, %v1839
      %v1841 = vrot.slane %v1438, 2
      %v1842 = vsel %vm1825, %v1839, %v1841
      %v1843 = vrot.slane %v1440, 2
      %v1844 = vsel %vm1825, %v1841, %v1843
      %v1845 = vrot.slane %v1443, 2
      %v1846 = vsel %vm1825, %v1843, %v1845
      %v1847 = vrot.slane %v1445, 2
      %v1848 = vsel %vm1825, %v1845, %v1847
      %v1849 = vrot.slane %v1448, 2
      %v1850 = vsel %vm1825, %v1847, %v1849
      %v1851 = vrot.slane %v1450, 2
      %v1852 = vsel %vm1825, %v1849, %v1851
      %v1853 = vrot.slane %v1453, 2
      %v1854 = vsel %vm1825, %v1851, %v1853
      %v1855 = vrot.slane %v1455, 2
      %v1856 = vsel %vm1825, %v1853, %v1855
      %v1857 = vrot.slane %v1458, 2
      %v1858 = vsel %vm1825, %v1855, %v1857
      %v1859 = vrot.slane %v1460, 2
      %v1860 = vsel %vm1825, %v1857, %v1859
      %v1861 = vrot.slane %v1463, 2
      %v1862 = vsel %vm1825, %v1859, %v1861
      %v1863 = vrot.slane %v1465, 2
      %v1864 = vsel %vm1825, %v1861, %v1863
      %v1865 = vrot.slane %v1468, 2
      %v1866 = vsel %vm1825, %v1863, %v1865
      %v1867 = vrot.slane %v1470, 2
      %v1868 = vsel %vm1825, %v1865, %v1867
      %v1869 = vrot.slane %v1473, 2
      %v1870 = vsel %vm1825, %v1867, %v1869
      %v1871 = vrot.slane %v1475, 2
      %v1872 = vsel %vm1825, %v1869, %v1871
      %v1873 = vrot.slane %v1478, 2
      %v1874 = vsel %vm1825, %v1871, %v1873
      %v1875 = vrot.slane %v1480, 2
      %v1876 = vsel %vm1825, %v1873, %v1875
      %v1877 = vrot.slane %v1483, 2
      %v1878 = vsel %vm1825, %v1875, %v1877
      %v1879 = vrot.slane %v1485, 2
      %v1880 = vsel %vm1825, %v1877, %v1879
      %v1881 = vrot.slane %v1488, 2
      %v1882 = vsel %vm1825, %v1879, %v1881
      %v1883 = vrot.slane %v1490, 2
      %v1884 = vsel %vm1825, %v1881, %v1883
      %v1885 = vrot.slane %v1493, 2
      %v1886 = vsel %vm1825, %v1883, %v1885
      %v1887 = vrot.slane %v1495, 2
      %v1888 = vsel %vm1825, %v1885, %v1887
      %v1889 = vrot.slane %v1498, 2
      %v1890 = vsel %vm1825, %v1887, %v1889
      %v1891 = vrot.slane %v1500, 2
      %v1892 = vsel %vm1825, %v1889, %v1891
      %v1893 = vrot.slane %v1503, 2
      %v1894 = vsel %vm1825, %v1891, %v1893
      %v1895 = vrot.slane %v1505, 2
      %v1896 = vsel %vm1825, %v1893, %v1895
      %v1897 = vrot.slane %v1508, 2
      %v1898 = vsel %vm1825, %v1895, %v1897
      %v1899 = vrot.slane %v1510, 2
      %v1900 = vsel %vm1825, %v1897, %v1899
      %v1901 = vrot.slane %v1513, 2
      %v1902 = vsel %vm1825, %v1899, %v1901
      %v1903 = vrot.slane %v1515, 2
      %v1904 = vsel %vm1825, %v1901, %v1903
      %v1905 = vrot.slane %v1518, 2
      %v1906 = vsel %vm1825, %v1903, %v1905
      %v1907 = vrot.slane %v1520, 2
      %v1908 = vsel %vm1825, %v1905, %v1907
      %v1909 = vrot.slane %v1523, 2
      %v1910 = vsel %vm1825, %v1907, %v1909
      %v1911 = vrot.slane %v1525, 2
      %v1912 = vsel %vm1825, %v1909, %v1911
      %v1913 = vrot.slane %v1528, 2
      %v1914 = vsel %vm1825, %v1911, %v1913
      %v1915 = vrot.slane %v1530, 2
      %v1916 = vsel %vm1825, %v1913, %v1915
      %v1917 = vrot.slane %v1533, 2
      %v1918 = vsel %vm1825, %v1915, %v1917
      %v1919 = vrot.slane %v1535, 2
      %v1920 = vsel %vm1825, %v1917, %v1919
      %v1969 = vadd.f32 %v1729, %v1828
      %v1970 = vadd.f32 %v1730, %v1830
      %v1971 = vadd.f32 %v1731, %v1832
      %v1972 = vadd.f32 %v1732, %v1834
      %v1973 = vadd.f32 %v1733, %v1836
      %v1974 = vadd.f32 %v1734, %v1838
      %v1975 = vadd.f32 %v1735, %v1840
      %v1976 = vadd.f32 %v1736, %v1842
      %v1977 = vadd.f32 %v1737, %v1844
      %v1978 = vadd.f32 %v1738, %v1846
      %v1979 = vadd.f32 %v1739, %v1848
      %v1980 = vadd.f32 %v1740, %v1850
      %v1981 = vadd.f32 %v1741, %v1852
      %v1982 = vadd.f32 %v1742, %v1854
      %v1983 = vadd.f32 %v1743, %v1856
      %v1984 = vadd.f32 %v1744, %v1858
      %v1985 = vadd.f32 %v1745, %v1860
      %v1986 = vadd.f32 %v1746, %v1862
      %v1987 = vadd.f32 %v1747, %v1864
      %v1988 = vadd.f32 %v1748, %v1866
      %v1989 = vadd.f32 %v1749, %v1868
      %v1990 = vadd.f32 %v1750, %v1870
      %v1991 = vadd.f32 %v1751, %v1872
      %v1992 = vadd.f32 %v1752, %v1874
      %v1993 = vadd.f32 %v1753, %v1876
      %v1994 = vadd.f32 %v1754, %v1878
      %v1995 = vadd.f32 %v1755, %v1880
      %v1996 = vadd.f32 %v1756, %v1882
      %v1997 = vadd.f32 %v1757, %v1884
      %v1998 = vadd.f32 %v1758, %v1886
      %v1999 = vadd.f32 %v1759, %v1888
      %v2000 = vadd.f32 %v1760, %v1890
      %v2001 = vadd.f32 %v1761, %v1892
      %v2002 = vadd.f32 %v1762, %v1894
      %v2003 = vadd.f32 %v1763, %v1896
      %v2004 = vadd.f32 %v1764, %v1898
      %v2005 = vadd.f32 %v1765, %v1900
      %v2006 = vadd.f32 %v1766, %v1902
      %v2007 = vadd.f32 %v1767, %v1904
      %v2008 = vadd.f32 %v1768, %v1906
      %v2009 = vadd.f32 %v1769, %v1908
      %v2010 = vadd.f32 %v1770, %v1910
      %v2011 = vadd.f32 %v1771, %v1912
      %v2012 = vadd.f32 %v1772, %v1914
      %v2013 = vadd.f32 %v1773, %v1916
      %v2014 = vadd.f32 %v1774, %v1918
      %v2015 = vadd.f32 %v1775, %v1920
      %v2016 = vadd.f32 %v1776, %v1919
      %vm2065 = vcmask 1040384
      %v2066 = vrot.slane %v1969, 7
      %v2067 = vrot.slane %v1970, 7
      %v2068 = vsel %vm2065, %v2066, %v2067
      %v2069 = vrot.slane %v1971, 7
      %v2070 = vsel %vm2065, %v2067, %v2069
      %v2071 = vrot.slane %v1972, 7
      %v2072 = vsel %vm2065, %v2069, %v2071
      %v2073 = vrot.slane %v1973, 7
      %v2074 = vsel %vm2065, %v2071, %v2073
      %v2075 = vrot.slane %v1974, 7
      %v2076 = vsel %vm2065, %v2073, %v2075
      %v2077 = vrot.slane %v1975, 7
      %v2078 = vsel %vm2065, %v2075, %v2077
      %v2079 = vrot.slane %v1976, 7
      %v2080 = vsel %vm2065, %v2077, %v2079
      %v2081 = vrot.slane %v1977, 7
      %v2082 = vsel %vm2065, %v2079, %v2081
      %v2083 = vrot.slane %v1978, 7
      %v2084 = vsel %vm2065, %v2081, %v2083
      %v2085 = vrot.slane %v1979, 7
      %v2086 = vsel %vm2065, %v2083, %v2085
      %v2087 = vrot.slane %v1980, 7
      %v2088 = vsel %vm2065, %v2085, %v2087
      %v2089 = vrot.slane %v1981, 7
      %v2090 = vsel %vm2065, %v2087, %v2089
      %v2091 = vrot.slane %v1982, 7
      %v2092 = vsel %vm2065, %v2089, %v2091
      %v2093 = vrot.slane %v1983, 7
      %v2094 = vsel %vm2065, %v2091, %v2093
      %v2095 = vrot.slane %v1984, 7
      %v2096 = vsel %vm2065, %v2093, %v2095
      %v2097 = vrot.slane %v1985, 7
      %v2098 = vsel %vm2065, %v2095, %v2097
      %v2099 = vrot.slane %v1986, 7
      %v2100 = vsel %vm2065, %v2097, %v2099
      %v2101 = vrot.slane %v1987, 7
      %v2102 = vsel %vm2065, %v2099, %v2101
      %v2103 = vrot.slane %v1988, 7
      %v2104 = vsel %vm2065, %v2101, %v2103
      %v2105 = vrot.slane %v1989, 7
      %v2106 = vsel %vm2065, %v2103, %v2105
      %v2107 = vrot.slane %v1990, 7
      %v2108 = vsel %vm2065, %v2105, %v2107
      %v2109 = vrot.slane %v1991, 7
      %v2110 = vsel %vm2065, %v2107, %v2109
      %v2111 = vrot.slane %v1992, 7
      %v2112 = vsel %vm2065, %v2109, %v2111
      %v2113 = vrot.slane %v1993, 7
      %v2114 = vsel %vm2065, %v2111, %v2113
      %v2115 = vrot.slane %v1994, 7
      %v2116 = vsel %vm2065, %v2113, %v2115
      %v2117 = vrot.slane %v1995, 7
      %v2118 = vsel %vm2065, %v2115, %v2117
      %v2119 = vrot.slane %v1996, 7
      %v2120 = vsel %vm2065, %v2117, %v2119
      %v2121 = vrot.slane %v1997, 7
      %v2122 = vsel %vm2065, %v2119, %v2121
      %v2123 = vrot.slane %v1998, 7
      %v2124 = vsel %vm2065, %v2121, %v2123
      %v2125 = vrot.slane %v1999, 7
      %v2126 = vsel %vm2065, %v2123, %v2125
      %v2127 = vrot.slane %v2000, 7
      %v2128 = vsel %vm2065, %v2125, %v2127
      %v2129 = vrot.slane %v2001, 7
      %v2130 = vsel %vm2065, %v2127, %v2129
      %v2131 = vrot.slane %v2002, 7
      %v2132 = vsel %vm2065, %v2129, %v2131
      %v2133 = vrot.slane %v2003, 7
      %v2134 = vsel %vm2065, %v2131, %v2133
      %v2135 = vrot.slane %v2004, 7
      %v2136 = vsel %vm2065, %v2133, %v2135
      %v2137 = vrot.slane %v2005, 7
      %v2138 = vsel %vm2065, %v2135, %v2137
      %v2139 = vrot.slane %v2006, 7
      %v2140 = vsel %vm2065, %v2137, %v2139
      %v2141 = vrot.slane %v2007, 7
      %v2142 = vsel %vm2065, %v2139, %v2141
      %v2143 = vrot.slane %v2008, 7
      %v2144 = vsel %vm2065, %v2141, %v2143
      %v2145 = vrot.slane %v2009, 7
      %v2146 = vsel %vm2065, %v2143, %v2145
      %v2147 = vrot.slane %v2010, 7
      %v2148 = vsel %vm2065, %v2145, %v2147
      %v2149 = vrot.slane %v2011, 7
      %v2150 = vsel %vm2065, %v2147, %v2149
      %v2151 = vrot.slane %v2012, 7
      %v2152 = vsel %vm2065, %v2149, %v2151
      %v2153 = vrot.slane %v2013, 7
      %v2154 = vsel %vm2065, %v2151, %v2153
      %v2155 = vrot.slane %v2014, 7
      %v2156 = vsel %vm2065, %v2153, %v2155
      %v2157 = vrot.slane %v2015, 7
      %v2158 = vsel %vm2065, %v2155, %v2157
      %v2159 = vrot.slane %v2016, 7
      %v2160 = vsel %vm2065, %v2157, %v2159
      %v2209 = vsel %vm2065, 0.0, %v2066
      %v2210 = vsel %vm1585, %v2160, 0.0
      %v2211 = vsel %vm587, %v2209, 0.0
      %v2212 = vsel %vm588, %v2068, 0.0
      %v2213 = vsel %vm589, %v2070, 0.0
      %v2214 = vsel %vm587, %v2072, 0.0
      %v2215 = vsel %vm588, %v2074, 0.0
      %v2216 = vsel %vm589, %v2076, 0.0
      %v2217 = vsel %vm587, %v2078, 0.0
      %v2218 = vsel %vm588, %v2080, 0.0
      %v2219 = vsel %vm589, %v2082, 0.0
      %v2220 = vsel %vm587, %v2084, 0.0
      %v2221 = vsel %vm588, %v2086, 0.0
      %v2222 = vsel %vm589, %v2088, 0.0
      %v2223 = vsel %vm587, %v2090, 0.0
      %v2224 = vsel %vm588, %v2092, 0.0
      %v2225 = vsel %vm589, %v2094, 0.0
      %v2226 = vsel %vm587, %v2096, 0.0
      %v2227 = vsel %vm588, %v2098, 0.0
      %v2228 = vsel %vm589, %v2100, 0.0
      %v2229 = vsel %vm587, %v2102, 0.0
      %v2230 = vsel %vm588, %v2104, 0.0
      %v2231 = vsel %vm589, %v2106, 0.0
      %v2232 = vsel %vm587, %v2108, 0.0
      %v2233 = vsel %vm588, %v2110, 0.0
      %v2234 = vsel %vm589, %v2112, 0.0
      %v2235 = vsel %vm587, %v2114, 0.0
      %v2236 = vsel %vm588, %v2116, 0.0
      %v2237 = vsel %vm589, %v2118, 0.0
      %v2238 = vsel %vm587, %v2120, 0.0
      %v2239 = vsel %vm588, %v2122, 0.0
      %v2240 = vsel %vm589, %v2124, 0.0
      %v2241 = vsel %vm587, %v2126, 0.0
      %v2242 = vsel %vm588, %v2128, 0.0
      %v2243 = vsel %vm589, %v2130, 0.0
      %v2244 = vsel %vm587, %v2132, 0.0
      %v2245 = vsel %vm588, %v2134, 0.0
      %v2246 = vsel %vm589, %v2136, 0.0
      %v2247 = vsel %vm587, %v2138, 0.0
      %v2248 = vsel %vm588, %v2140, 0.0
      %v2249 = vsel %vm589, %v2142, 0.0
      %v2250 = vsel %vm587, %v2144, 0.0
      %v2251 = vsel %vm588, %v2146, 0.0
      %v2252 = vsel %vm589, %v2148, 0.0
      %v2253 = vsel %vm587, %v2150, 0.0
      %v2254 = vsel %vm588, %v2152, 0.0
      %v2255 = vsel %vm589, %v2154, 0.0
      %v2256 = vsel %vm587, %v2156, 0.0
      %v2257 = vsel %vm588, %v2158, 0.0
      %v2258 = vsel %vm589, %v2210, 0.0
      %v2259 = vsel %vm931, %v2211, 0.0
      %v2260 = vsel %vm931, %v2212, 0.0
      %v2261 = vadd.f32 %v2259, %v2260
      %v2262 = vsel %vm931, %v2213, 0.0
      %v2263 = vadd.f32 %v2261, %v2262
      %v2264 = vsel %vm931, %v2214, 0.0
      %v2265 = vadd.f32 %v2263, %v2264
      %v2266 = vsel %vm931, %v2215, 0.0
      %v2267 = vadd.f32 %v2265, %v2266
      %v2268 = vsel %vm931, %v2216, 0.0
      %v2269 = vadd.f32 %v2267, %v2268
      %v2270 = vsel %vm931, %v2217, 0.0
      %v2271 = vadd.f32 %v2269, %v2270
      %v2272 = vsel %vm931, %v2218, 0.0
      %v2273 = vadd.f32 %v2271, %v2272
      %v2274 = vsel %vm931, %v2219, 0.0
      %v2275 = vadd.f32 %v2273, %v2274
      %v2276 = vsel %vm931, %v2220, 0.0
      %v2277 = vadd.f32 %v2275, %v2276
      %v2278 = vsel %vm931, %v2221, 0.0
      %v2279 = vadd.f32 %v2277, %v2278
      %v2280 = vsel %vm931, %v2222, 0.0
      %v2281 = vadd.f32 %v2279, %v2280
      %v2282 = vsel %vm931, %v2223, 0.0
      %v2283 = vadd.f32 %v2281, %v2282
      %v2284 = vsel %vm931, %v2224, 0.0
      %v2285 = vadd.f32 %v2283, %v2284
      %v2286 = vsel %vm931, %v2225, 0.0
      %v2287 = vadd.f32 %v2285, %v2286
      %v2288 = vsel %vm931, %v2226, 0.0
      %v2289 = vadd.f32 %v2287, %v2288
      %v2290 = vsel %vm931, %v2227, 0.0
      %v2291 = vadd.f32 %v2289, %v2290
      %v2292 = vsel %vm931, %v2228, 0.0
      %v2293 = vadd.f32 %v2291, %v2292
      %v2294 = vsel %vm931, %v2229, 0.0
      %v2295 = vadd.f32 %v2293, %v2294
      %v2296 = vsel %vm931, %v2230, 0.0
      %v2297 = vadd.f32 %v2295, %v2296
      %v2298 = vsel %vm931, %v2231, 0.0
      %v2299 = vadd.f32 %v2297, %v2298
      %v2300 = vsel %vm931, %v2232, 0.0
      %v2301 = vadd.f32 %v2299, %v2300
      %v2302 = vsel %vm931, %v2233, 0.0
      %v2303 = vadd.f32 %v2301, %v2302
      %v2304 = vsel %vm931, %v2234, 0.0
      %v2305 = vadd.f32 %v2303, %v2304
      %v2306 = vsel %vm931, %v2235, 0.0
      %v2307 = vadd.f32 %v2305, %v2306
      %v2308 = vsel %vm931, %v2236, 0.0
      %v2309 = vadd.f32 %v2307, %v2308
      %v2310 = vsel %vm931, %v2237, 0.0
      %v2311 = vadd.f32 %v2309, %v2310
      %v2312 = vsel %vm931, %v2238, 0.0
      %v2313 = vadd.f32 %v2311, %v2312
      %v2314 = vsel %vm931, %v2239, 0.0
      %v2315 = vadd.f32 %v2313, %v2314
      %v2316 = vsel %vm931, %v2240, 0.0
      %v2317 = vadd.f32 %v2315, %v2316
      %v2318 = vsel %vm931, %v2241, 0.0
      %v2319 = vadd.f32 %v2317, %v2318
      %v2320 = vsel %vm931, %v2242, 0.0
      %v2321 = vadd.f32 %v2319, %v2320
      %v2322 = vsel %vm931, %v2243, 0.0
      %v2323 = vadd.f32 %v2321, %v2322
      %v2324 = vsel %vm931, %v2244, 0.0
      %v2325 = vadd.f32 %v2323, %v2324
      %v2326 = vsel %vm931, %v2245, 0.0
      %v2327 = vadd.f32 %v2325, %v2326
      %v2328 = vsel %vm931, %v2246, 0.0
      %v2329 = vadd.f32 %v2327, %v2328
      %v2330 = vsel %vm931, %v2247, 0.0
      %v2331 = vadd.f32 %v2329, %v2330
      %v2332 = vsel %vm931, %v2248, 0.0
      %v2333 = vadd.f32 %v2331, %v2332
      %v2334 = vsel %vm931, %v2249, 0.0
      %v2335 = vadd.f32 %v2333, %v2334
      %v2336 = vsel %vm931, %v2250, 0.0
      %v2337 = vadd.f32 %v2335, %v2336
      %v2338 = vsel %vm931, %v2251, 0.0
      %v2339 = vadd.f32 %v2337, %v2338
      %v2340 = vsel %vm931, %v2252, 0.0
      %v2341 = vadd.f32 %v2339, %v2340
      %v2342 = vsel %vm931, %v2253, 0.0
      %v2343 = vadd.f32 %v2341, %v2342
      %v2344 = vsel %vm931, %v2254, 0.0
      %v2345 = vadd.f32 %v2343, %v2344
      %v2346 = vsel %vm931, %v2255, 0.0
      %v2347 = vadd.f32 %v2345, %v2346
      %v2348 = vsel %vm931, %v2256, 0.0
      %v2349 = vadd.f32 %v2347, %v2348
      %v2350 = vsel %vm931, %v2257, 0.0
      %v2351 = vadd.f32 %v2349, %v2350
      %v2352 = vsel %vm931, %v2258, 0.0
      %v2353 = vadd.f32 %v2351, %v2352
      %v2354 = vrot.slane %v2353, 4
      %v2355 = vadd.f32 %v2353, %v2354
      %v2356 = vrot.slane %v2355, 2
      %v2357 = vadd.f32 %v2355, %v2356
      %v2358 = vrot.slane %v2357, 1
      %v2359 = vadd.f32 %v2357, %v2358
      %vm2360 = vcmask 57344
      %2361 = vst.msk [vmem:[%s315] sm:$0x1] %vm2360, %v2359
      %v2362 = vmul.f32 %v2211, %v2211
      %v2363 = vmul.f32 %v2212, %v2212
      %v2364 = vmul.f32 %v2213, %v2213
      %v2365 = vmul.f32 %v2214, %v2214
      %v2366 = vmul.f32 %v2215, %v2215
      %v2367 = vmul.f32 %v2216, %v2216
      %v2368 = vmul.f32 %v2217, %v2217
      %v2369 = vmul.f32 %v2218, %v2218
      %v2370 = vmul.f32 %v2219, %v2219
      %v2371 = vmul.f32 %v2220, %v2220
      %v2372 = vmul.f32 %v2221, %v2221
      %v2373 = vmul.f32 %v2222, %v2222
      %v2374 = vmul.f32 %v2223, %v2223
      %v2375 = vmul.f32 %v2224, %v2224
      %v2376 = vmul.f32 %v2225, %v2225
      %v2377 = vmul.f32 %v2226, %v2226
      %v2378 = vmul.f32 %v2227, %v2227
      %v2379 = vmul.f32 %v2228, %v2228
      %v2380 = vmul.f32 %v2229, %v2229
      %v2381 = vmul.f32 %v2230, %v2230
      %v2382 = vmul.f32 %v2231, %v2231
      %v2383 = vmul.f32 %v2232, %v2232
      %v2384 = vmul.f32 %v2233, %v2233
      %v2385 = vmul.f32 %v2234, %v2234
      %v2386 = vmul.f32 %v2235, %v2235
      %v2387 = vmul.f32 %v2236, %v2236
      %v2388 = vmul.f32 %v2237, %v2237
      %v2389 = vmul.f32 %v2238, %v2238
      %v2390 = vmul.f32 %v2239, %v2239
      %v2391 = vmul.f32 %v2240, %v2240
      %v2392 = vmul.f32 %v2241, %v2241
      %v2393 = vmul.f32 %v2242, %v2242
      %v2394 = vmul.f32 %v2243, %v2243
      %v2395 = vmul.f32 %v2244, %v2244
      %v2396 = vmul.f32 %v2245, %v2245
      %v2397 = vmul.f32 %v2246, %v2246
      %v2398 = vmul.f32 %v2247, %v2247
      %v2399 = vmul.f32 %v2248, %v2248
      %v2400 = vmul.f32 %v2249, %v2249
      %v2401 = vmul.f32 %v2250, %v2250
      %v2402 = vmul.f32 %v2251, %v2251
      %v2403 = vmul.f32 %v2252, %v2252
      %v2404 = vmul.f32 %v2253, %v2253
      %v2405 = vmul.f32 %v2254, %v2254
      %v2406 = vmul.f32 %v2255, %v2255
      %v2407 = vmul.f32 %v2256, %v2256
      %v2408 = vmul.f32 %v2257, %v2257
      %v2409 = vmul.f32 %v2258, %v2258
      %v2410 = vsel %vm931, %v2362, 0.0
      %v2411 = vsel %vm931, %v2363, 0.0
      %v2412 = vadd.f32 %v2410, %v2411
      %v2413 = vsel %vm931, %v2364, 0.0
      %v2414 = vadd.f32 %v2412, %v2413
      %v2415 = vsel %vm931, %v2365, 0.0
      %v2416 = vadd.f32 %v2414, %v2415
      %v2417 = vsel %vm931, %v2366, 0.0
      %v2418 = vadd.f32 %v2416, %v2417
      %v2419 = vsel %vm931, %v2367, 0.0
      %v2420 = vadd.f32 %v2418, %v2419
      %v2421 = vsel %vm931, %v2368, 0.0
      %v2422 = vadd.f32 %v2420, %v2421
      %v2423 = vsel %vm931, %v2369, 0.0
      %v2424 = vadd.f32 %v2422, %v2423
      %v2425 = vsel %vm931, %v2370, 0.0
      %v2426 = vadd.f32 %v2424, %v2425
      %v2427 = vsel %vm931, %v2371, 0.0
      %v2428 = vadd.f32 %v2426, %v2427
      %v2429 = vsel %vm931, %v2372, 0.0
      %v2430 = vadd.f32 %v2428, %v2429
      %v2431 = vsel %vm931, %v2373, 0.0
      %v2432 = vadd.f32 %v2430, %v2431
      %v2433 = vsel %vm931, %v2374, 0.0
      %v2434 = vadd.f32 %v2432, %v2433
      %v2435 = vsel %vm931, %v2375, 0.0
      %v2436 = vadd.f32 %v2434, %v2435
      %v2437 = vsel %vm931, %v2376, 0.0
      %v2438 = vadd.f32 %v2436, %v2437
      %v2439 = vsel %vm931, %v2377, 0.0
      %v2440 = vadd.f32 %v2438, %v2439
      %v2441 = vsel %vm931, %v2378, 0.0
      %v2442 = vadd.f32 %v2440, %v2441
      %v2443 = vsel %vm931, %v2379, 0.0
      %v2444 = vadd.f32 %v2442, %v2443
      %v2445 = vsel %vm931, %v2380, 0.0
      %v2446 = vadd.f32 %v2444, %v2445
      %v2447 = vsel %vm931, %v2381, 0.0
      %v2448 = vadd.f32 %v2446, %v2447
      %v2449 = vsel %vm931, %v2382, 0.0
      %v2450 = vadd.f32 %v2448, %v2449
      %v2451 = vsel %vm931, %v2383, 0.0
      %v2452 = vadd.f32 %v2450, %v2451
      %v2453 = vsel %vm931, %v2384, 0.0
      %v2454 = vadd.f32 %v2452, %v2453
      %v2455 = vsel %vm931, %v2385, 0.0
      %v2456 = vadd.f32 %v2454, %v2455
      %v2457 = vsel %vm931, %v2386, 0.0
      %v2458 = vadd.f32 %v2456, %v2457
      %v2459 = vsel %vm931, %v2387, 0.0
      %v2460 = vadd.f32 %v2458, %v2459
      %v2461 = vsel %vm931, %v2388, 0.0
      %v2462 = vadd.f32 %v2460, %v2461
      %v2463 = vsel %vm931, %v2389, 0.0
      %v2464 = vadd.f32 %v2462, %v2463
      %v2465 = vsel %vm931, %v2390, 0.0
      %v2466 = vadd.f32 %v2464, %v2465
      %v2467 = vsel %vm931, %v2391, 0.0
      %v2468 = vadd.f32 %v2466, %v2467
      %v2469 = vsel %vm931, %v2392, 0.0
      %v2470 = vadd.f32 %v2468, %v2469
      %v2471 = vsel %vm931, %v2393, 0.0
      %v2472 = vadd.f32 %v2470, %v2471
      %v2473 = vsel %vm931, %v2394, 0.0
      %v2474 = vadd.f32 %v2472, %v2473
      %v2475 = vsel %vm931, %v2395, 0.0
      %v2476 = vadd.f32 %v2474, %v2475
      %v2477 = vsel %vm931, %v2396, 0.0
      %v2478 = vadd.f32 %v2476, %v2477
      %v2479 = vsel %vm931, %v2397, 0.0
      %v2480 = vadd.f32 %v2478, %v2479
      %v2481 = vsel %vm931, %v2398, 0.0
      %v2482 = vadd.f32 %v2480, %v2481
      %v2483 = vsel %vm931, %v2399, 0.0
      %v2484 = vadd.f32 %v2482, %v2483
      %v2485 = vsel %vm931, %v2400, 0.0
      %v2486 = vadd.f32 %v2484, %v2485
      %v2487 = vsel %vm931, %v2401, 0.0
      %v2488 = vadd.f32 %v2486, %v2487
      %v2489 = vsel %vm931, %v2402, 0.0
      %v2490 = vadd.f32 %v2488, %v2489
      %v2491 = vsel %vm931, %v2403, 0.0
      %v2492 = vadd.f32 %v2490, %v2491
      %v2493 = vsel %vm931, %v2404, 0.0
      %v2494 = vadd.f32 %v2492, %v2493
      %v2495 = vsel %vm931, %v2405, 0.0
      %v2496 = vadd.f32 %v2494, %v2495
      %v2497 = vsel %vm931, %v2406, 0.0
      %v2498 = vadd.f32 %v2496, %v2497
      %v2499 = vsel %vm931, %v2407, 0.0
      %v2500 = vadd.f32 %v2498, %v2499
      %v2501 = vsel %vm931, %v2408, 0.0
      %v2502 = vadd.f32 %v2500, %v2501
      %v2503 = vsel %vm931, %v2409, 0.0
      %v2504 = vadd.f32 %v2502, %v2503
      %v2505 = vrot.slane %v2504, 4
      %v2506 = vadd.f32 %v2504, %v2505
      %v2507 = vrot.slane %v2506, 2
      %v2508 = vadd.f32 %v2506, %v2507
      %v2509 = vrot.slane %v2508, 1
      %v2510 = vadd.f32 %v2508, %v2509
      %2511 = vst.msk [vmem:[%s321] sm:$0x1] %vm2360, %v2510
      %v2512 = vpack.c.bf16 %v2211, %v2211
      %v2513 = vpack.c.bf16 %v2212, %v2212
      %v2514 = vpack.c.bf16 %v2213, %v2213
      %v2515 = vpack.c.bf16 %v2214, %v2214
      %v2516 = vpack.c.bf16 %v2215, %v2215
      %v2517 = vpack.c.bf16 %v2216, %v2216
      %v2518 = vpack.c.bf16 %v2217, %v2217
      %v2519 = vpack.c.bf16 %v2218, %v2218
      %v2520 = vpack.c.bf16 %v2219, %v2219
      %v2521 = vpack.c.bf16 %v2220, %v2220
      %v2522 = vpack.c.bf16 %v2221, %v2221
      %v2523 = vpack.c.bf16 %v2222, %v2222
      %v2524 = vpack.c.bf16 %v2223, %v2223
      %v2525 = vpack.c.bf16 %v2224, %v2224
      %v2526 = vpack.c.bf16 %v2225, %v2225
      %v2527 = vpack.c.bf16 %v2226, %v2226
      %v2528 = vpack.c.bf16 %v2227, %v2227
      %v2529 = vpack.c.bf16 %v2228, %v2228
      %v2530 = vpack.c.bf16 %v2229, %v2229
      %v2531 = vpack.c.bf16 %v2230, %v2230
      %v2532 = vpack.c.bf16 %v2231, %v2231
      %v2533 = vpack.c.bf16 %v2232, %v2232
      %v2534 = vpack.c.bf16 %v2233, %v2233
      %v2535 = vpack.c.bf16 %v2234, %v2234
      %v2536 = vpack.c.bf16 %v2235, %v2235
      %v2537 = vpack.c.bf16 %v2236, %v2236
      %v2538 = vpack.c.bf16 %v2237, %v2237
      %v2539 = vpack.c.bf16 %v2238, %v2238
      %v2540 = vpack.c.bf16 %v2239, %v2239
      %v2541 = vpack.c.bf16 %v2240, %v2240
      %v2542 = vpack.c.bf16 %v2241, %v2241
      %v2543 = vpack.c.bf16 %v2242, %v2242
      %v2544 = vpack.c.bf16 %v2243, %v2243
      %v2545 = vpack.c.bf16 %v2244, %v2244
      %v2546 = vpack.c.bf16 %v2245, %v2245
      %v2547 = vpack.c.bf16 %v2246, %v2246
      %v2548 = vpack.c.bf16 %v2247, %v2247
      %v2549 = vpack.c.bf16 %v2248, %v2248
      %v2550 = vpack.c.bf16 %v2249, %v2249
      %v2551 = vpack.c.bf16 %v2250, %v2250
      %v2552 = vpack.c.bf16 %v2251, %v2251
      %v2553 = vpack.c.bf16 %v2252, %v2252
      %v2554 = vpack.c.bf16 %v2253, %v2253
      %v2555 = vpack.c.bf16 %v2254, %v2254
      %v2556 = vpack.c.bf16 %v2255, %v2255
      %v2557 = vpack.c.bf16 %v2256, %v2256
      %v2558 = vpack.c.bf16 %v2257, %v2257
      %v2559 = vpack.c.bf16 %v2258, %v2258
      %s2560 = scalar_lea.vmem %s309, 12
      %vm2561 = vcmask 60416
      %2562 = vst.msk [vmem:[%s2560] sm:$0xf] %vm2561, %v2512
      %2563 = vst.msk [vmem:[%s2560 + $0x4] sm:$0xf] %vm2561, %v2513
      %2564 = vst.msk [vmem:[%s2560 + $0x8] sm:$0xf] %vm2561, %v2514
      %2565 = vst.msk [vmem:[%s2560 + $0xc] sm:$0xf] %vm2561, %v2515
      %2566 = vst.msk [vmem:[%s2560 + $0x10] sm:$0xf] %vm2561, %v2516
      %2567 = vst.msk [vmem:[%s2560 + $0x14] sm:$0xf] %vm2561, %v2517
      %2568 = vst.msk [vmem:[%s2560 + $0x18] sm:$0xf] %vm2561, %v2518
      %2569 = vst.msk [vmem:[%s2560 + $0x1c] sm:$0xf] %vm2561, %v2519
      %2570 = vst.msk [vmem:[%s2560 + $0x20] sm:$0xf] %vm2561, %v2520
      %2571 = vst.msk [vmem:[%s2560 + $0x24] sm:$0xf] %vm2561, %v2521
      %2572 = vst.msk [vmem:[%s2560 + $0x28] sm:$0xf] %vm2561, %v2522
      %2573 = vst.msk [vmem:[%s2560 + $0x2c] sm:$0xf] %vm2561, %v2523
      %2574 = vst.msk [vmem:[%s2560 + $0x30] sm:$0xf] %vm2561, %v2524
      %2575 = vst.msk [vmem:[%s2560 + $0x34] sm:$0xf] %vm2561, %v2525
      %2576 = vst.msk [vmem:[%s2560 + $0x38] sm:$0xf] %vm2561, %v2526
      %2577 = vst.msk [vmem:[%s2560 + $0x3c] sm:$0xf] %vm2561, %v2527
      %2578 = vst.msk [vmem:[%s2560 + $0x40] sm:$0xf] %vm2561, %v2528
      %2579 = vst.msk [vmem:[%s2560 + $0x44] sm:$0xf] %vm2561, %v2529
      %2580 = vst.msk [vmem:[%s2560 + $0x48] sm:$0xf] %vm2561, %v2530
      %2581 = vst.msk [vmem:[%s2560 + $0x4c] sm:$0xf] %vm2561, %v2531
      %2582 = vst.msk [vmem:[%s2560 + $0x50] sm:$0xf] %vm2561, %v2532
      %2583 = vst.msk [vmem:[%s2560 + $0x54] sm:$0xf] %vm2561, %v2533
      %2584 = vst.msk [vmem:[%s2560 + $0x58] sm:$0xf] %vm2561, %v2534
      %2585 = vst.msk [vmem:[%s2560 + $0x5c] sm:$0xf] %vm2561, %v2535
      %2586 = vst.msk [vmem:[%s2560 + $0x60] sm:$0xf] %vm2561, %v2536
      %2587 = vst.msk [vmem:[%s2560 + $0x64] sm:$0xf] %vm2561, %v2537
      %2588 = vst.msk [vmem:[%s2560 + $0x68] sm:$0xf] %vm2561, %v2538
      %2589 = vst.msk [vmem:[%s2560 + $0x6c] sm:$0xf] %vm2561, %v2539
      %2590 = vst.msk [vmem:[%s2560 + $0x70] sm:$0xf] %vm2561, %v2540
      %2591 = vst.msk [vmem:[%s2560 + $0x74] sm:$0xf] %vm2561, %v2541
      %2592 = vst.msk [vmem:[%s2560 + $0x78] sm:$0xf] %vm2561, %v2542
      %2593 = vst.msk [vmem:[%s2560 + $0x7c] sm:$0xf] %vm2561, %v2543
      %2594 = vst.msk [vmem:[%s2560 + $0x80] sm:$0xf] %vm2561, %v2544
      %2595 = vst.msk [vmem:[%s2560 + $0x84] sm:$0xf] %vm2561, %v2545
      %2596 = vst.msk [vmem:[%s2560 + $0x88] sm:$0xf] %vm2561, %v2546
      %2597 = vst.msk [vmem:[%s2560 + $0x8c] sm:$0xf] %vm2561, %v2547
      %2598 = vst.msk [vmem:[%s2560 + $0x90] sm:$0xf] %vm2561, %v2548
      %2599 = vst.msk [vmem:[%s2560 + $0x94] sm:$0xf] %vm2561, %v2549
      %2600 = vst.msk [vmem:[%s2560 + $0x98] sm:$0xf] %vm2561, %v2550
      %2601 = vst.msk [vmem:[%s2560 + $0x9c] sm:$0xf] %vm2561, %v2551
      %2602 = vst.msk [vmem:[%s2560 + $0xa0] sm:$0xf] %vm2561, %v2552
      %2603 = vst.msk [vmem:[%s2560 + $0xa4] sm:$0xf] %vm2561, %v2553
      %2604 = vst.msk [vmem:[%s2560 + $0xa8] sm:$0xf] %vm2561, %v2554
      %2605 = vst.msk [vmem:[%s2560 + $0xac] sm:$0xf] %vm2561, %v2555
      %2606 = vst.msk [vmem:[%s2560 + $0xb0] sm:$0xf] %vm2561, %v2556
      %2607 = vst.msk [vmem:[%s2560 + $0xb4] sm:$0xf] %vm2561, %v2557
      %2608 = vst.msk [vmem:[%s2560 + $0xb8] sm:$0xf] %vm2561, %v2558
      %2609 = vst.msk [vmem:[%s2560 + $0xbc] sm:$0xf] %vm2561, %v2559
      %2610 = vst.msk [vmem:[%s309] sm:$0xf] %vm2561, 0
      %2611 = vst.msk [vmem:[%s309 + $0x4] sm:$0xf] %vm2561, 0
      %2612 = vst.msk [vmem:[%s309 + $0x8] sm:$0xf] %vm2561, 0
      %s2613 = scalar_lea.vmem %s309, 204
      %2614 = vst.msk [vmem:[%s2613] sm:$0xf] %vm2561, 0
      %2615 = vst.msk [vmem:[%s2613 + $0x4] sm:$0xf] %vm2561, 0
      %2616 = vst.msk [vmem:[%s2613 + $0x8] sm:$0xf] %vm2561, 0
      %p2617 = scmp.lt.s32.totalorder %s22, 1
      %s2618 = scalar_select %p2617, %s22, 1
      %p2619 = scmp.lt.s32.totalorder %s23, 0
      %s2620 = scalar_select %p2619, %s23, 0
      %s2621 = smul.addr %s2618, 54
      %s2622 = sadd.s32 %s2620, %s2621
      %s2623 = smul.addr %s2622, 4
      %s2624 = scalar_lea.vmem %s4, %s2623
      %p2625 = scmp.lt.s32.totalorder %s22, 1
      %s2626 = scalar_select %p2625, %s22, 1
      %p2627 = scmp.lt.s32.totalorder %s23, 0
      %s2628 = scalar_select %p2627, %s23, 0
      %s2629 = sadd.s32 %s2628, %s2626
      %s2630 = scalar_lea.vmem %s5, %s2629
      %p2631 = scmp.lt.s32.totalorder %s22, 1
      %s2632 = scalar_select %p2631, %s22, 1
      %p2633 = scmp.lt.s32.totalorder %s23, 0
      %s2634 = scalar_select %p2633, %s23, 0
      %s2635 = sadd.s32 %s2634, %s2632
      %s2636 = scalar_lea.vmem %s6, %s2635
      // Predicated region
      $region37: #{double_conv_forward.4} parent=35 // pred_check
        %p2637 = pneg %p144
      $region38: #{double_conv_forward.4} parent=35 // pred_check_branch
        %2639 = sbr.rel (%p2637) target = $region40
      $region39: #{double_conv_forward.4} parent=35 // pred_region
        _
      $region40: #{double_conv_forward.4} parent=35 // pred_fallthru
        _
      // Predicated region
      $region41: #{double_conv_forward.4} parent=35 // pred_check
        %p2640 = pneg %p172
      $region42: #{double_conv_forward.4} parent=35 // pred_check_branch
        %2642 = sbr.rel (%p2640) target = $region44
      $region43: #{double_conv_forward.4} parent=35 // pred_region
        _
      $region44: #{double_conv_forward.4} parent=35 // pred_fallthru
        _
      // Predicated region
      $region45: #{double_conv_forward.4} parent=35 // pred_check
        %p2643 = pneg %p200
      $region46: #{double_conv_forward.4} parent=35 // pred_check_branch
        %2645 = sbr.rel (%p2643) target = $region48
      $region47: #{double_conv_forward.4} parent=35 // pred_region
        _
      $region48: #{double_conv_forward.4} parent=35 // pred_fallthru
        _
    $region36: #{double_conv_forward.4} parent=5 // pred_fallthru
      _
    %p2646 = scmp.le.s32.totalorder 2, %s13
    // Predicated region
    $region49: #{double_conv_forward.4} parent=5 // pred_check
      %p2647 = pneg %p2646
    $region50: #{double_conv_forward.4} parent=5 // pred_check_branch
      %2649 = sbr.rel (%p2647) target = $region52
    $region51: #{double_conv_forward.4} parent=5 // pred_region
      %s2650 = ssub.s32 %s13, 2
      // Predicated region
      $region53: #{double_conv_forward.4} parent=51 // pred_check
        %p2651 = pneg %p150
      $region54: #{double_conv_forward.4} parent=51 // pred_check_branch
        %2653 = sbr.rel (%p2651) target = $region56
      $region55: #{double_conv_forward.4} parent=51 // pred_region
        %p2654 = scmp.lt.s32.totalorder %s24, 1
        %s2655 = scalar_select %p2654, %s24, 1
        %p2656 = scmp.lt.s32.totalorder %s25, 0
        %s2657 = scalar_select %p2656, %s25, 0
        %s2658 = smul.addr %s2655, 54
        %s2659 = sadd.s32 %s2657, %s2658
        %s2660 = smul.addr %s2659, 4
        %s2661 = scalar_lea.vmem %s4, %s2660
      $region56: #{double_conv_forward.4} parent=51 // pred_fallthru
        _
      // Predicated region
      $region57: #{double_conv_forward.4} parent=51 // pred_check
        %p2662 = pneg %p178
      $region58: #{double_conv_forward.4} parent=51 // pred_check_branch
        %2664 = sbr.rel (%p2662) target = $region60
      $region59: #{double_conv_forward.4} parent=51 // pred_region
        %p2665 = scmp.lt.s32.totalorder %s24, 1
        %s2666 = scalar_select %p2665, %s24, 1
        %p2667 = scmp.lt.s32.totalorder %s25, 0
        %s2668 = scalar_select %p2667, %s25, 0
        %s2669 = sadd.s32 %s2668, %s2666
        %s2670 = scalar_lea.vmem %s5, %s2669
      $region60: #{double_conv_forward.4} parent=51 // pred_fallthru
        _
      // Predicated region
      $region61: #{double_conv_forward.4} parent=51 // pred_check
        %p2671 = pneg %p206
      $region62: #{double_conv_forward.4} parent=51 // pred_check_branch
        %2673 = sbr.rel (%p2671) target = $region64
      $region63: #{double_conv_forward.4} parent=51 // pred_region
        %p2674 = scmp.lt.s32.totalorder %s24, 1
        %s2675 = scalar_select %p2674, %s24, 1
        %p2676 = scmp.lt.s32.totalorder %s25, 0
        %s2677 = scalar_select %p2676, %s25, 0
        %s2678 = sadd.s32 %s2677, %s2675
        %s2679 = scalar_lea.vmem %s6, %s2678
      $region64: #{double_conv_forward.4} parent=51 // pred_fallthru
        _
    $region52: #{double_conv_forward.4} parent=5 // pred_fallthru
      _
  $region6: #{double_conv_forward.4} parent=0 // loop_footer
    %s17 = sadd.s32 1, %s13
  $region7: #{double_conv_forward.4} parent=0 // loop_footer_branch
    %12 = sbr.rel target = $region3
  $region8: #{double_conv_forward.4} parent=0 // loop_exit
    _

// kernel: double_conv_forward.3
$region0: #{double_conv_forward.3}
  #allocation0 [shape = 'u32[]', space=smem, size = 0x4, offset = 0x4, fixed_abs, tag = 'smem constant byte address 0x4 - core index']
  #allocation1 [shape = 'u32[72,128]{1,0:T(1,128)}', space=vmem, size = 0x9000, scoped, tag = 'internal scratch']
  %s0 = inlined_call_operand.vmem [shape: bf16[2,18,24,4], index: 0, kind: input, shape index: {}]
  %s1 = inlined_call_operand.vmem [shape: bf16[3,12,8], index: 1, kind: input, shape index: {}]
  %s2 = inlined_call_operand.vmem [shape: bf16[2,18,24,8], index: 2, kind: output, shape index: {0}]
  %s3 = inlined_call_operand.vmem [shape: f32[2,1,8], index: 3, kind: output, shape index: {1}]
  %s4 = inlined_call_operand.vmem [shape: f32[2,1,8], index: 4, kind: output, shape index: {2}]
  %5 = xla_tuple %s2, %s3, %s4
  %s6 = sld [smem:[#allocation0]]
  $region57: #{double_conv_forward.3} parent=0
    _
  %s8 = ssub.s32 1, %s6
  %s9 = scalar_select 0, %s8, %s6
  loop: start=0, step=1, limit=4
  $region2: #{double_conv_forward.3} parent=0 // loop_pre_header
    _
  $region3: #{double_conv_forward.3} parent=0 // loop_header
    %s11 = sphi 0, %s15
    %p12 = scmp.ge.s32.totalorder %s11, 4
    %s18 = sphi 0, %s30
    %s19 = sphi 0, %s26
    %s20 = sphi 0, %s18
    %s21 = sphi 0, %s19
    %s22 = sphi 0, %s20
    %s23 = sphi 0, %s21
    %s33 = sphi 0, %s35
    %s36 = sphi 0, %s33
    %s37 = sphi 0, %s36
    %s53 = sphi 0, %s37
    %s59 = sphi 0, %s61
    %s62 = sphi 0, %s59
    %s63 = sphi 0, %s62
    %s79 = sphi 0, %s63
    %s87 = sphi 0, %s89
    %s90 = sphi 0, %s87
    %s91 = sphi 0, %s90
    %s107 = sphi 0, %s91
    %s115 = sphi 0, %s117
    %s118 = sphi 0, %s115
    %s119 = sphi 0, %s118
    %s135 = sphi 0, %s119
    %s143 = sphi 0, %s145
    %s146 = sphi 0, %s143
    %s147 = sphi 0, %s146
    %s163 = sphi 0, %s147
  $region4: #{double_conv_forward.3} parent=0 // loop_header_branch
    %14 = sbr.rel (%p12) target = $region8
  $region5: #{double_conv_forward.3} parent=0 // loop_body
    %s16 = ssub.s32 %s11, 1
    %s17 = ssub.s32 %s11, 2
    %s24 = sadd.s32 1, %s19
    %p25 = scmp.ge.s32.totalorder %s24, 1
    %s26 = scalar_select %p25, 0, %s24
    %s27 = sadd.s32 1, %s18
    %s28 = scalar_select %p25, %s27, %s18
    %p29 = scmp.ge.s32.totalorder %s28, 2
    %s30 = scalar_select %p29, 0, %s28
    %s31 = ssub.s32 %s18, %s30
    %p32 = scmp.eq.s32.totalorder %s31, 0
    %s34 = sadd.s32 %s33, 1
    %s35 = scalar_select %p32, %s33, %s34
    %p38 = pneg %p32
    %p39 = scmp.eq.s32.totalorder %s11, 1
    %p40 = por %p38, %p39
    %p41 = scmp.ne.s32.totalorder %s33, %s36
    %p42 = scmp.eq.s32.totalorder %s11, 0
    %p43 = por %p41, %p42
    %p44 = scmp.ne.s32.totalorder %s33, %s36
    %p45 = scmp.eq.s32.totalorder %s16, 1
    %p46 = por %p44, %p45
    %p47 = scmp.ne.s32.totalorder %s36, %s37
    %p48 = scmp.eq.s32.totalorder %s16, 0
    %p49 = por %p47, %p48
    %p50 = scmp.ne.s32.totalorder %s36, %s37
    %p51 = scmp.eq.s32.totalorder %s17, 1
    %p52 = por %p50, %p51
    %p54 = scmp.ne.s32.totalorder %s37, %s53
    %p55 = scmp.eq.s32.totalorder %s17, 0
    %p56 = por %p54, %p55
    %s57 = ssub.s32 %s19, %s26
    %p58 = scmp.eq.s32.totalorder %s57, 0
    %s60 = sadd.s32 %s59, 1
    %s61 = scalar_select %p58, %s59, %s60
    %p64 = pneg %p58
    %p65 = scmp.eq.s32.totalorder %s11, 1
    %p66 = por %p64, %p65
    %p67 = scmp.ne.s32.totalorder %s59, %s62
    %p68 = scmp.eq.s32.totalorder %s11, 0
    %p69 = por %p67, %p68
    %p70 = scmp.ne.s32.totalorder %s59, %s62
    %p71 = scmp.eq.s32.totalorder %s16, 1
    %p72 = por %p70, %p71
    %p73 = scmp.ne.s32.totalorder %s62, %s63
    %p74 = scmp.eq.s32.totalorder %s16, 0
    %p75 = por %p73, %p74
    %p76 = scmp.ne.s32.totalorder %s62, %s63
    %p77 = scmp.eq.s32.totalorder %s17, 1
    %p78 = por %p76, %p77
    %p80 = scmp.ne.s32.totalorder %s63, %s79
    %p81 = scmp.eq.s32.totalorder %s17, 0
    %p82 = por %p80, %p81
    %s83 = ssub.s32 %s18, %s30
    %s84 = ssub.s32 %s19, %s26
    %s85 = sor.u32 %s83, %s84
    %p86 = scmp.eq.s32.totalorder %s85, 0
    %s88 = sadd.s32 %s87, 1
    %s89 = scalar_select %p86, %s87, %s88
    %p92 = pneg %p86
    %p93 = scmp.eq.s32.totalorder %s11, 1
    %p94 = por %p92, %p93
    %p95 = scmp.ne.s32.totalorder %s87, %s90
    %p96 = scmp.eq.s32.totalorder %s11, 0
    %p97 = por %p95, %p96
    %p98 = scmp.ne.s32.totalorder %s87, %s90
    %p99 = scmp.eq.s32.totalorder %s16, 1
    %p100 = por %p98, %p99
    %p101 = scmp.ne.s32.totalorder %s90, %s91
    %p102 = scmp.eq.s32.totalorder %s16, 0
    %p103 = por %p101, %p102
    %p104 = scmp.ne.s32.totalorder %s90, %s91
    %p105 = scmp.eq.s32.totalorder %s17, 1
    %p106 = por %p104, %p105
    %p108 = scmp.ne.s32.totalorder %s91, %s107
    %p109 = scmp.eq.s32.totalorder %s17, 0
    %p110 = por %p108, %p109
    %s111 = ssub.s32 %s18, %s30
    %s112 = ssub.s32 %s19, %s26
    %s113 = sor.u32 %s111, %s112
    %p114 = scmp.eq.s32.totalorder %s113, 0
    %s116 = sadd.s32 %s115, 1
    %s117 = scalar_select %p114, %s115, %s116
    %p120 = pneg %p114
    %p121 = scmp.eq.s32.totalorder %s11, 1
    %p122 = por %p120, %p121
    %p123 = scmp.ne.s32.totalorder %s115, %s118
    %p124 = scmp.eq.s32.totalorder %s11, 0
    %p125 = por %p123, %p124
    %p126 = scmp.ne.s32.totalorder %s115, %s118
    %p127 = scmp.eq.s32.totalorder %s16, 1
    %p128 = por %p126, %p127
    %p129 = scmp.ne.s32.totalorder %s118, %s119
    %p130 = scmp.eq.s32.totalorder %s16, 0
    %p131 = por %p129, %p130
    %p132 = scmp.ne.s32.totalorder %s118, %s119
    %p133 = scmp.eq.s32.totalorder %s17, 1
    %p134 = por %p132, %p133
    %p136 = scmp.ne.s32.totalorder %s119, %s135
    %p137 = scmp.eq.s32.totalorder %s17, 0
    %p138 = por %p136, %p137
    %s139 = ssub.s32 %s18, %s30
    %s140 = ssub.s32 %s19, %s26
    %s141 = sor.u32 %s139, %s140
    %p142 = scmp.eq.s32.totalorder %s141, 0
    %s144 = sadd.s32 %s143, 1
    %s145 = scalar_select %p142, %s143, %s144
    %p148 = pneg %p142
    %p149 = scmp.eq.s32.totalorder %s11, 1
    %p150 = por %p148, %p149
    %p151 = scmp.ne.s32.totalorder %s143, %s146
    %p152 = scmp.eq.s32.totalorder %s11, 0
    %p153 = por %p151, %p152
    %p154 = scmp.ne.s32.totalorder %s143, %s146
    %p155 = scmp.eq.s32.totalorder %s16, 1
    %p156 = por %p154, %p155
    %p157 = scmp.ne.s32.totalorder %s146, %s147
    %p158 = scmp.eq.s32.totalorder %s16, 0
    %p159 = por %p157, %p158
    %p160 = scmp.ne.s32.totalorder %s146, %s147
    %p161 = scmp.eq.s32.totalorder %s17, 1
    %p162 = por %p160, %p161
    %p164 = scmp.ne.s32.totalorder %s147, %s163
    %p165 = scmp.eq.s32.totalorder %s17, 0
    %p166 = por %p164, %p165
    %p167 = scmp.le.s32.totalorder 1, %s11
    %p168 = scmp.lt.s32.totalorder %s11, 3
    %p169 = pnand %p167, %p168
    %p170 = pneg %p169
    // Predicated region
    $region9: #{double_conv_forward.3} parent=5 // pred_check
      _
    $region10: #{double_conv_forward.3} parent=5 // pred_check_branch
      %172 = sbr.rel (%p169) target = $region12
    $region11: #{double_conv_forward.3} parent=5 // pred_region
      %s173 = ssub.s32 %s11, 1
      // Predicated region
      $region13: #{double_conv_forward.3} parent=11 // pred_check
        %p174 = pneg %p75
      $region14: #{double_conv_forward.3} parent=11 // pred_check_branch
        %176 = sbr.rel (%p174) target = $region16
      $region15: #{double_conv_forward.3} parent=11 // pred_region
        %p177 = scmp.lt.s32.totalorder %s21, 0
        %s178 = scalar_select %p177, %s21, 0
        %s179 = smul.addr %s178, 4
        %s180 = scalar_lea.vmem %s1, %s179
      $region16: #{double_conv_forward.3} parent=11 // pred_fallthru
        _
    $region12: #{double_conv_forward.3} parent=5 // pred_fallthru
      _
    %p181 = scmp.lt.s32.totalorder %s11, 2
    // Predicated region
    $region17: #{double_conv_forward.3} parent=5 // pred_check
      %p182 = pneg %p181
    $region18: #{double_conv_forward.3} parent=5 // pred_check_branch
      %184 = sbr.rel (%p182) target = $region20
    $region19: #{double_conv_forward.3} parent=5 // pred_region
      // Predicated region
      $region21: #{double_conv_forward.3} parent=19 // pred_check
        %p185 = pneg %p43
      $region22: #{double_conv_forward.3} parent=19 // pred_check_branch
        %187 = sbr.rel (%p185) target = $region24
      $region23: #{double_conv_forward.3} parent=19 // pred_region
        %p188 = scmp.lt.s32.totalorder %s18, 1
        %s189 = scalar_select %p188, %s18, 1
        %s190 = smul.addr %s189, 54
        %s191 = smul.addr %s190, 4
        %s192 = scalar_lea.vmem %s0, %s191
      $region24: #{double_conv_forward.3} parent=19 // pred_fallthru
        _
    $region20: #{double_conv_forward.3} parent=5 // pred_fallthru
      _
    %p193 = scmp.le.s32.totalorder 1, %s11
    %p194 = scmp.lt.s32.totalorder %s11, 3
    %p195 = pnand %p193, %p194
    %p196 = pneg %p195
    // Predicated region
    $region25: #{double_conv_forward.3} parent=5 // pred_check
      _
    $region26: #{double_conv_forward.3} parent=5 // pred_check_branch
      %198 = sbr.rel (%p195) target = $region28
    $region27: #{double_conv_forward.3} parent=5 // pred_region
      %s199 = ssub.s32 %s11, 1
      %p200 = scmp.lt.s32.totalorder %s20, 1
      %s201 = scalar_select %p200, %s20, 1
      %s202 = smul.addr %s201, 54
      %s203 = smul.addr %s202, 4
      %s204 = scalar_lea.vmem %s0, %s203
      %p205 = pneg %p49
      %p206 = pneg %p46
      %p207 = scmp.lt.s32.totalorder %s21, 0
      %s208 = scalar_select %p207, %s21, 0
      %s209 = smul.addr %s208, 4
      %s210 = scalar_lea.vmem %s1, %s209
      %p211 = pneg %p75
      %p212 = pneg %p72
      %p213 = pneg %p103
      %p214 = pneg %p100
      %p215 = scmp.lt.s32.totalorder %s20, 1
      %s216 = scalar_select %p215, %s20, 1
      %p217 = scmp.lt.s32.totalorder %s21, 0
      %s218 = scalar_select %p217, %s21, 0
      %s219 = smul.addr %s216, 54
      %s220 = sadd.s32 %s218, %s219
      %s221 = smul.addr %s220, 4
      %s222 = scalar_lea.vmem %s2, %s221
      %p223 = pneg %p131
      %p224 = pneg %p128
      %p225 = scmp.lt.s32.totalorder %s20, 1
      %s226 = scalar_select %p225, %s20, 1
      %p227 = scmp.lt.s32.totalorder %s21, 0
      %s228 = scalar_select %p227, %s21, 0
      %s229 = sadd.s32 %s228, %s226
      %s230 = scalar_lea.vmem %s3, %s229
      %p231 = pneg %p159
      %p232 = pneg %p156
      %p233 = scmp.lt.s32.totalorder %s20, 1
      %s234 = scalar_select %p233, %s20, 1
      %p235 = scmp.lt.s32.totalorder %s21, 0
      %s236 = scalar_select %p235, %s21, 0
      %s237 = sadd.s32 %s236, %s234
      %s238 = scalar_lea.vmem %s4, %s237
      %p239 = scmp.lt.s32.totalorder %s20, 1
      %s240 = scalar_select %p239, %s20, 1
      %s241 = smul.addr %s240, 54
      %s242 = smul.addr %s241, 4
      %s243 = scalar_lea.vmem %s0, %s242
      %p244 = scmp.lt.s32.totalorder %s21, 0
      %s245 = scalar_select %p244, %s21, 0
      %s246 = smul.addr %s245, 4
      %s247 = scalar_lea.vmem %s1, %s246
      %p248 = scmp.lt.s32.totalorder %s20, 1
      %s249 = scalar_select %p248, %s20, 1
      %p250 = scmp.lt.s32.totalorder %s21, 0
      %s251 = scalar_select %p250, %s21, 0
      %s252 = smul.addr %s249, 54
      %s253 = sadd.s32 %s251, %s252
      %s254 = smul.addr %s253, 4
      %s255 = scalar_lea.vmem %s2, %s254
      %p256 = scmp.lt.s32.totalorder %s20, 1
      %s257 = scalar_select %p256, %s20, 1
      %p258 = scmp.lt.s32.totalorder %s21, 0
      %s259 = scalar_select %p258, %s21, 0
      %s260 = sadd.s32 %s259, %s257
      %s261 = scalar_lea.vmem %s3, %s260
      %p262 = scmp.lt.s32.totalorder %s20, 1
      %s263 = scalar_select %p262, %s20, 1
      %p264 = scmp.lt.s32.totalorder %s21, 0
      %s265 = scalar_select %p264, %s21, 0
      %s266 = sadd.s32 %s265, %s263
      %s267 = scalar_lea.vmem %s4, %s266
      %v269 = vlaneseq
      %v270 = vshrl.u32 %v269, 7
      %v271 = vadd.s32 %v270, 8
      %v272 = vadd.s32 %v270, 16
      %vm273 = vcmp.ge.s32.totalorder %v270, 1
      %vm274 = vcmp.ge.s32.totalorder %v271, 1
      %vm275 = vcmp.ge.s32.totalorder %v272, 1
      %vm276 = vcmp.le.s32.totalorder %v270, 16
      %vm277 = vcmp.le.s32.totalorder %v271, 16
      %vm278 = vcmp.le.s32.totalorder %v272, 16
      %vm279 = vmand %vm273, %vm276
      %vm280 = vmand %vm274, %vm277
      %vm281 = vmand %vm275, %vm278
      %v282 = vld [vmem:[%s243] sm:$0xf]
      %v283 = vld [vmem:[%s243 + $0x4] sm:$0xf]
      %v284 = vld [vmem:[%s243 + $0x8] sm:$0xf]
      %v285 = vld [vmem:[%s243 + $0xc] sm:$0xf]
      %v286 = vld [vmem:[%s243 + $0x10] sm:$0xf]
      %v287 = vld [vmem:[%s243 + $0x14] sm:$0xf]
      %v288 = vld [vmem:[%s243 + $0x18] sm:$0xf]
      %v289 = vld [vmem:[%s243 + $0x1c] sm:$0xf]
      %v290 = vld [vmem:[%s243 + $0x20] sm:$0xf]
      %v291 = vld [vmem:[%s243 + $0x24] sm:$0xf]
      %v292 = vld [vmem:[%s243 + $0x28] sm:$0xf]
      %v293 = vld [vmem:[%s243 + $0x2c] sm:$0xf]
      %v294 = vld [vmem:[%s243 + $0x30] sm:$0xf]
      %v295 = vld [vmem:[%s243 + $0x34] sm:$0xf]
      %v296 = vld [vmem:[%s243 + $0x38] sm:$0xf]
      %v297 = vld [vmem:[%s243 + $0x3c] sm:$0xf]
      %v298 = vld [vmem:[%s243 + $0x40] sm:$0xf]
      %v299 = vld [vmem:[%s243 + $0x44] sm:$0xf]
      %v300 = vld [vmem:[%s243 + $0x48] sm:$0xf]
      %v301 = vld [vmem:[%s243 + $0x4c] sm:$0xf]
      %v302 = vld [vmem:[%s243 + $0x50] sm:$0xf]
      %v303 = vld [vmem:[%s243 + $0x54] sm:$0xf]
      %v304 = vld [vmem:[%s243 + $0x58] sm:$0xf]
      %v305 = vld [vmem:[%s243 + $0x5c] sm:$0xf]
      %v306 = vld [vmem:[%s243 + $0x60] sm:$0xf]
      %v307 = vld [vmem:[%s243 + $0x64] sm:$0xf]
      %v308 = vld [vmem:[%s243 + $0x68] sm:$0xf]
      %v309 = vld [vmem:[%s243 + $0x6c] sm:$0xf]
      %v310 = vld [vmem:[%s243 + $0x70] sm:$0xf]
      %v311 = vld [vmem:[%s243 + $0x74] sm:$0xf]
      %v312 = vld [vmem:[%s243 + $0x78] sm:$0xf]
      %v313 = vld [vmem:[%s243 + $0x7c] sm:$0xf]
      %v314 = vld [vmem:[%s243 + $0x80] sm:$0xf]
      %v315 = vld [vmem:[%s243 + $0x84] sm:$0xf]
      %v316 = vld [vmem:[%s243 + $0x88] sm:$0xf]
      %v317 = vld [vmem:[%s243 + $0x8c] sm:$0xf]
      %v318 = vld [vmem:[%s243 + $0x90] sm:$0xf]
      %v319 = vld [vmem:[%s243 + $0x94] sm:$0xf]
      %v320 = vld [vmem:[%s243 + $0x98] sm:$0xf]
      %v321 = vld [vmem:[%s243 + $0x9c] sm:$0xf]
      %v322 = vld [vmem:[%s243 + $0xa0] sm:$0xf]
      %v323 = vld [vmem:[%s243 + $0xa4] sm:$0xf]
      %v324 = vld [vmem:[%s243 + $0xa8] sm:$0xf]
      %v325 = vld [vmem:[%s243 + $0xac] sm:$0xf]
      %v326 = vld [vmem:[%s243 + $0xb0] sm:$0xf]
      %v327 = vld [vmem:[%s243 + $0xb4] sm:$0xf]
      %v328 = vld [vmem:[%s243 + $0xb8] sm:$0xf]
      %v329 = vld [vmem:[%s243 + $0xbc] sm:$0xf]
      %v330 = vld [vmem:[%s243 + $0xc0] sm:$0xf]
      %v331 = vld [vmem:[%s243 + $0xc4] sm:$0xf]
      %v332 = vld [vmem:[%s243 + $0xc8] sm:$0xf]
      %v333 = vld [vmem:[%s243 + $0xcc] sm:$0xf]
      %v334 = vld [vmem:[%s243 + $0xd0] sm:$0xf]
      %v335 = vld [vmem:[%s243 + $0xd4] sm:$0xf]
      %v384 = vunpack.c.l.b16 %v282
      %v385 = vunpack.c.l.b16 %v283
      %v386 = vunpack.c.l.b16 %v284
      %v387 = vunpack.c.l.b16 %v285
      %v388 = vunpack.c.l.b16 %v286
      %v389 = vunpack.c.l.b16 %v287
      %v390 = vunpack.c.l.b16 %v288
      %v391 = vunpack.c.l.b16 %v289
      %v392 = vunpack.c.l.b16 %v290
      %v393 = vunpack.c.l.b16 %v291
      %v394 = vunpack.c.l.b16 %v292
      %v395 = vunpack.c.l.b16 %v293
      %v396 = vunpack.c.l.b16 %v294
      %v397 = vunpack.c.l.b16 %v295
      %v398 = vunpack.c.l.b16 %v296
      %v399 = vunpack.c.l.b16 %v297
      %v400 = vunpack.c.l.b16 %v298
      %v401 = vunpack.c.l.b16 %v299
      %v402 = vunpack.c.l.b16 %v300
      %v403 = vunpack.c.l.b16 %v301
      %v404 = vunpack.c.l.b16 %v302
      %v405 = vunpack.c.l.b16 %v303
      %v406 = vunpack.c.l.b16 %v304
      %v407 = vunpack.c.l.b16 %v305
      %v408 = vunpack.c.l.b16 %v306
      %v409 = vunpack.c.l.b16 %v307
      %v410 = vunpack.c.l.b16 %v308
      %v411 = vunpack.c.l.b16 %v309
      %v412 = vunpack.c.l.b16 %v310
      %v413 = vunpack.c.l.b16 %v311
      %v414 = vunpack.c.l.b16 %v312
      %v415 = vunpack.c.l.b16 %v313
      %v416 = vunpack.c.l.b16 %v314
      %v417 = vunpack.c.l.b16 %v315
      %v418 = vunpack.c.l.b16 %v316
      %v419 = vunpack.c.l.b16 %v317
      %v420 = vunpack.c.l.b16 %v318
      %v421 = vunpack.c.l.b16 %v319
      %v422 = vunpack.c.l.b16 %v320
      %v423 = vunpack.c.l.b16 %v321
      %v424 = vunpack.c.l.b16 %v322
      %v425 = vunpack.c.l.b16 %v323
      %v426 = vunpack.c.l.b16 %v324
      %v427 = vunpack.c.l.b16 %v325
      %v428 = vunpack.c.l.b16 %v326
      %v429 = vunpack.c.l.b16 %v327
      %v430 = vunpack.c.l.b16 %v328
      %v431 = vunpack.c.l.b16 %v329
      %v432 = vpack.c.b16 %v385, %v384
      %v433 = vpack.c.b16 %v387, %v386
      %v434 = vpack.c.b16 %v389, %v388
      %v435 = vpack.c.b16 %v391, %v390
      %v436 = vpack.c.b16 %v393, %v392
      %v437 = vpack.c.b16 %v395, %v394
      %v438 = vpack.c.b16 %v397, %v396
      %v439 = vpack.c.b16 %v399, %v398
      %v440 = vpack.c.b16 %v401, %v400
      %v441 = vpack.c.b16 %v403, %v402
      %v442 = vpack.c.b16 %v405, %v404
      %v443 = vpack.c.b16 %v407, %v406
      %v444 = vpack.c.b16 %v409, %v408
      %v445 = vpack.c.b16 %v411, %v410
      %v446 = vpack.c.b16 %v413, %v412
      %v447 = vpack.c.b16 %v415, %v414
      %v448 = vpack.c.b16 %v417, %v416
      %v449 = vpack.c.b16 %v419, %v418
      %v450 = vpack.c.b16 %v421, %v420
      %v451 = vpack.c.b16 %v423, %v422
      %v452 = vpack.c.b16 %v425, %v424
      %v453 = vpack.c.b16 %v427, %v426
      %v454 = vpack.c.b16 %v429, %v428
      %v455 = vpack.c.b16 %v431, %v430
      %v459 = vunpack.c.l.b16 %v330
      %v460 = vunpack.c.l.b16 %v331
      %v461 = vunpack.c.l.b16 %v332
      %v462 = vpack.c.b16 %v388, %v387
      %v463 = vpack.c.b16 %v390, %v389
      %v464 = vpack.c.b16 %v392, %v391
      %v465 = vpack.c.b16 %v394, %v393
      %v466 = vpack.c.b16 %v396, %v395
      %v467 = vpack.c.b16 %v398, %v397
      %v468 = vpack.c.b16 %v400, %v399
      %v469 = vpack.c.b16 %v402, %v401
      %v470 = vpack.c.b16 %v404, %v403
      %v471 = vpack.c.b16 %v406, %v405
      %v472 = vpack.c.b16 %v408, %v407
      %v473 = vpack.c.b16 %v410, %v409
      %v474 = vpack.c.b16 %v412, %v411
      %v475 = vpack.c.b16 %v414, %v413
      %v476 = vpack.c.b16 %v416, %v415
      %v477 = vpack.c.b16 %v418, %v417
      %v478 = vpack.c.b16 %v420, %v419
      %v479 = vpack.c.b16 %v422, %v421
      %v480 = vpack.c.b16 %v424, %v423
      %v481 = vpack.c.b16 %v426, %v425
      %v482 = vpack.c.b16 %v428, %v427
      %v483 = vpack.c.b16 %v430, %v429
      %v484 = vpack.c.b16 %v459, %v431
      %v485 = vpack.c.b16 %v461, %v460
      %486 = vrot.lane.b32.xlu0 %v462, 4
      %v487 = vpop.permute.xlu0 %486
      %488 = vrot.lane.b32.xlu0 %v463, 4
      %v489 = vpop.permute.xlu0 %488
      %490 = vrot.lane.b32.xlu0 %v464, 4
      %v491 = vpop.permute.xlu0 %490
      %492 = vrot.lane.b32.xlu0 %v465, 4
      %v493 = vpop.permute.xlu0 %492
      %494 = vrot.lane.b32.xlu0 %v466, 4
      %v495 = vpop.permute.xlu0 %494
      %496 = vrot.lane.b32.xlu0 %v467, 4
      %v497 = vpop.permute.xlu0 %496
      %498 = vrot.lane.b32.xlu0 %v468, 4
      %v499 = vpop.permute.xlu0 %498
      %500 = vrot.lane.b32.xlu0 %v469, 4
      %v501 = vpop.permute.xlu0 %500
      %502 = vrot.lane.b32.xlu0 %v470, 4
      %v503 = vpop.permute.xlu0 %502
      %504 = vrot.lane.b32.xlu0 %v471, 4
      %v505 = vpop.permute.xlu0 %504
      %506 = vrot.lane.b32.xlu0 %v472, 4
      %v507 = vpop.permute.xlu0 %506
      %508 = vrot.lane.b32.xlu0 %v473, 4
      %v509 = vpop.permute.xlu0 %508
      %510 = vrot.lane.b32.xlu0 %v474, 4
      %v511 = vpop.permute.xlu0 %510
      %512 = vrot.lane.b32.xlu0 %v475, 4
      %v513 = vpop.permute.xlu0 %512
      %514 = vrot.lane.b32.xlu0 %v476, 4
      %v515 = vpop.permute.xlu0 %514
      %516 = vrot.lane.b32.xlu0 %v477, 4
      %v517 = vpop.permute.xlu0 %516
      %518 = vrot.lane.b32.xlu0 %v478, 4
      %v519 = vpop.permute.xlu0 %518
      %520 = vrot.lane.b32.xlu0 %v479, 4
      %v521 = vpop.permute.xlu0 %520
      %522 = vrot.lane.b32.xlu0 %v480, 4
      %v523 = vpop.permute.xlu0 %522
      %524 = vrot.lane.b32.xlu0 %v481, 4
      %v525 = vpop.permute.xlu0 %524
      %526 = vrot.lane.b32.xlu0 %v482, 4
      %v527 = vpop.permute.xlu0 %526
      %528 = vrot.lane.b32.xlu0 %v483, 4
      %v529 = vpop.permute.xlu0 %528
      %530 = vrot.lane.b32.xlu0 %v484, 4
      %v531 = vpop.permute.xlu0 %530
      %532 = vrot.lane.b32.xlu0 %v485, 4
      %v533 = vpop.permute.xlu0 %532
      %v537 = vunpack.c.l.b16 %v333
      %v538 = vunpack.c.l.b16 %v334
      %v539 = vunpack.c.l.b16 %v335
      %v540 = vpack.c.b16 %v460, %v459
      %v541 = vpack.c.b16 %v537, %v461
      %v542 = vpack.c.b16 %v539, %v538
      %543 = vrot.lane.b32.xlu0 %v435, 8
      %v544 = vpop.permute.xlu0 %543
      %545 = vrot.lane.b32.xlu0 %v436, 8
      %v546 = vpop.permute.xlu0 %545
      %547 = vrot.lane.b32.xlu0 %v437, 8
      %v548 = vpop.permute.xlu0 %547
      %549 = vrot.lane.b32.xlu0 %v438, 8
      %v550 = vpop.permute.xlu0 %549
      %551 = vrot.lane.b32.xlu0 %v439, 8
      %v552 = vpop.permute.xlu0 %551
      %553 = vrot.lane.b32.xlu0 %v440, 8
      %v554 = vpop.permute.xlu0 %553
      %555 = vrot.lane.b32.xlu0 %v441, 8
      %v556 = vpop.permute.xlu0 %555
      %557 = vrot.lane.b32.xlu0 %v442, 8
      %v558 = vpop.permute.xlu0 %557
      %559 = vrot.lane.b32.xlu0 %v443, 8
      %v560 = vpop.permute.xlu0 %559
      %561 = vrot.lane.b32.xlu0 %v444, 8
      %v562 = vpop.permute.xlu0 %561
      %563 = vrot.lane.b32.xlu0 %v445, 8
      %v564 = vpop.permute.xlu0 %563
      %565 = vrot.lane.b32.xlu0 %v446, 8
      %v566 = vpop.permute.xlu0 %565
      %567 = vrot.lane.b32.xlu0 %v447, 8
      %v568 = vpop.permute.xlu0 %567
      %569 = vrot.lane.b32.xlu0 %v448, 8
      %v570 = vpop.permute.xlu0 %569
      %571 = vrot.lane.b32.xlu0 %v449, 8
      %v572 = vpop.permute.xlu0 %571
      %573 = vrot.lane.b32.xlu0 %v450, 8
      %v574 = vpop.permute.xlu0 %573
      %575 = vrot.lane.b32.xlu0 %v451, 8
      %v576 = vpop.permute.xlu0 %575
      %577 = vrot.lane.b32.xlu0 %v452, 8
      %v578 = vpop.permute.xlu0 %577
      %579 = vrot.lane.b32.xlu0 %v453, 8
      %v580 = vpop.permute.xlu0 %579
      %581 = vrot.lane.b32.xlu0 %v454, 8
      %v582 = vpop.permute.xlu0 %581
      %583 = vrot.lane.b32.xlu0 %v455, 8
      %v584 = vpop.permute.xlu0 %583
      %585 = vrot.lane.b32.xlu0 %v540, 8
      %v586 = vpop.permute.xlu0 %585
      %587 = vrot.lane.b32.xlu0 %v541, 8
      %v588 = vpop.permute.xlu0 %587
      %589 = vrot.lane.b32.xlu0 %v542, 8
      %v590 = vpop.permute.xlu0 %589
      %vm591 = vcmask 31744
      %v594 = vsel %vm591, %v432, %v487
      %v597 = vsel %vm591, %v433, %v489
      %v600 = vsel %vm591, %v434, %v491
      %v603 = vsel %vm591, %v435, %v493
      %v606 = vsel %vm591, %v436, %v495
      %v609 = vsel %vm591, %v437, %v497
      %v612 = vsel %vm591, %v438, %v499
      %v615 = vsel %vm591, %v439, %v501
      %v618 = vsel %vm591, %v440, %v503
      %v621 = vsel %vm591, %v441, %v505
      %v624 = vsel %vm591, %v442, %v507
      %v627 = vsel %vm591, %v443, %v509
      %v630 = vsel %vm591, %v444, %v511
      %v633 = vsel %vm591, %v445, %v513
      %v636 = vsel %vm591, %v446, %v515
      %v639 = vsel %vm591, %v447, %v517
      %v642 = vsel %vm591, %v448, %v519
      %v645 = vsel %vm591, %v449, %v521
      %v648 = vsel %vm591, %v450, %v523
      %v651 = vsel %vm591, %v451, %v525
      %v654 = vsel %vm591, %v452, %v527
      %v657 = vsel %vm591, %v453, %v529
      %v660 = vsel %vm591, %v454, %v531
      %v663 = vsel %vm591, %v455, %v533
      %vm664 = vcmask 64512
      %v666 = vsel %vm664, %v594, %v544
      %v668 = vsel %vm664, %v597, %v546
      %v670 = vsel %vm664, %v600, %v548
      %v672 = vsel %vm664, %v603, %v550
      %v674 = vsel %vm664, %v606, %v552
      %v676 = vsel %vm664, %v609, %v554
      %v678 = vsel %vm664, %v612, %v556
      %v680 = vsel %vm664, %v615, %v558
      %v682 = vsel %vm664, %v618, %v560
      %v684 = vsel %vm664, %v621, %v562
      %v686 = vsel %vm664, %v624, %v564
      %v688 = vsel %vm664, %v627, %v566
      %v690 = vsel %vm664, %v630, %v568
      %v692 = vsel %vm664, %v633, %v570
      %v694 = vsel %vm664, %v636, %v572
      %v696 = vsel %vm664, %v639, %v574
      %v698 = vsel %vm664, %v642, %v576
      %v700 = vsel %vm664, %v645, %v578
      %v702 = vsel %vm664, %v648, %v580
      %v704 = vsel %vm664, %v651, %v582
      %v706 = vsel %vm664, %v654, %v584
      %v708 = vsel %vm664, %v657, %v586
      %v710 = vsel %vm664, %v660, %v588
      %v712 = vsel %vm664, %v663, %v590
      %v713 = vld [vmem:[%s247] sm:$0xf]
      %v714 = vld [vmem:[%s247 + $0x4] sm:$0x3]
      %v717 = vunpack.c.l.b16 %v713
      %v718 = vunpack.c.l.b16 %v714
      %v719 = vpack.c.b16 %v718, %v717
      %vm720 = vcmask 97280
      %v721 = vsel %vm720, %v666, 0
      %v723 = vsel %vm720, %v668, 0
      %v725 = vsel %vm720, %v670, 0
      %v727 = vsel %vm720, %v672, 0
      %v729 = vsel %vm720, %v674, 0
      %v731 = vsel %vm720, %v676, 0
      %v733 = vsel %vm720, %v678, 0
      %v735 = vsel %vm720, %v680, 0
      %v737 = vsel %vm720, %v682, 0
      %v739 = vsel %vm720, %v684, 0
      %v741 = vsel %vm720, %v686, 0
      %v743 = vsel %vm720, %v688, 0
      %v745 = vsel %vm720, %v690, 0
      %v747 = vsel %vm720, %v692, 0
      %v749 = vsel %vm720, %v694, 0
      %v751 = vsel %vm720, %v696, 0
      %v753 = vsel %vm720, %v698, 0
      %v755 = vsel %vm720, %v700, 0
      %v757 = vsel %vm720, %v702, 0
      %v759 = vsel %vm720, %v704, 0
      %v761 = vsel %vm720, %v706, 0
      %v763 = vsel %vm720, %v708, 0
      %v765 = vsel %vm720, %v710, 0
      %v767 = vsel %vm720, %v712, 0
      %vm769 = vcmask 1045504
      %v771 = vsel %vm769, %v719, 0
      %773 = vmatpush.bf16.msra.mxu0 0
      %774 = vmatpush.bf16.msra.mxu0 0
      %775 = vmatpush.bf16.msra.mxu0 0
      %776 = vmatpush.bf16.msra.mxu0 0
      %777 = vmatpush.bf16.msra.mxu0 0
      %778 = vmatpush.bf16.msra.mxu0 0
      %779 = vmatpush.bf16.msra.mxu0 0
      %780 = vmatpush.bf16.msra.mxu0 %v771
      %781 = vmatmul.bf16.gmra.mxu0 %v721
      %v782 = vpop.f32.mrf.mxu0
      %v783 = vadd.f32 0.0, %v782
      %v784 = vpop.f32.mrf.mxu0
      %v785 = vadd.f32 0.0, %v784
      %786 = vmatmul.bf16.gmra.mxu0 %v723
      %v787 = vpop.f32.mrf.mxu0
      %v788 = vadd.f32 0.0, %v787
      %v789 = vpop.f32.mrf.mxu0
      %v790 = vadd.f32 0.0, %v789
      %791 = vmatmul.bf16.gmra.mxu0 %v725
      %v792 = vpop.f32.mrf.mxu0
      %v793 = vadd.f32 0.0, %v792
      %v794 = vpop.f32.mrf.mxu0
      %v795 = vadd.f32 0.0, %v794
      %796 = vmatmul.bf16.gmra.mxu0 %v727
      %v797 = vpop.f32.mrf.mxu0
      %v798 = vadd.f32 0.0, %v797
      %v799 = vpop.f32.mrf.mxu0
      %v800 = vadd.f32 0.0, %v799
      %801 = vmatmul.bf16.gmra.mxu0 %v729
      %v802 = vpop.f32.mrf.mxu0
      %v803 = vadd.f32 0.0, %v802
      %v804 = vpop.f32.mrf.mxu0
      %v805 = vadd.f32 0.0, %v804
      %806 = vmatmul.bf16.gmra.mxu0 %v731
      %v807 = vpop.f32.mrf.mxu0
      %v808 = vadd.f32 0.0, %v807
      %v809 = vpop.f32.mrf.mxu0
      %v810 = vadd.f32 0.0, %v809
      %811 = vmatmul.bf16.gmra.mxu0 %v733
      %v812 = vpop.f32.mrf.mxu0
      %v813 = vadd.f32 0.0, %v812
      %v814 = vpop.f32.mrf.mxu0
      %v815 = vadd.f32 0.0, %v814
      %816 = vmatmul.bf16.gmra.mxu0 %v735
      %v817 = vpop.f32.mrf.mxu0
      %v818 = vadd.f32 0.0, %v817
      %v819 = vpop.f32.mrf.mxu0
      %v820 = vadd.f32 0.0, %v819
      %821 = vmatmul.bf16.gmra.mxu0 %v737
      %v822 = vpop.f32.mrf.mxu0
      %v823 = vadd.f32 0.0, %v822
      %v824 = vpop.f32.mrf.mxu0
      %v825 = vadd.f32 0.0, %v824
      %826 = vmatmul.bf16.gmra.mxu0 %v739
      %v827 = vpop.f32.mrf.mxu0
      %v828 = vadd.f32 0.0, %v827
      %v829 = vpop.f32.mrf.mxu0
      %v830 = vadd.f32 0.0, %v829
      %831 = vmatmul.bf16.gmra.mxu0 %v741
      %v832 = vpop.f32.mrf.mxu0
      %v833 = vadd.f32 0.0, %v832
      %v834 = vpop.f32.mrf.mxu0
      %v835 = vadd.f32 0.0, %v834
      %836 = vmatmul.bf16.gmra.mxu0 %v743
      %v837 = vpop.f32.mrf.mxu0
      %v838 = vadd.f32 0.0, %v837
      %v839 = vpop.f32.mrf.mxu0
      %v840 = vadd.f32 0.0, %v839
      %841 = vmatmul.bf16.gmra.mxu0 %v745
      %v842 = vpop.f32.mrf.mxu0
      %v843 = vadd.f32 0.0, %v842
      %v844 = vpop.f32.mrf.mxu0
      %v845 = vadd.f32 0.0, %v844
      %846 = vmatmul.bf16.gmra.mxu0 %v747
      %v847 = vpop.f32.mrf.mxu0
      %v848 = vadd.f32 0.0, %v847
      %v849 = vpop.f32.mrf.mxu0
      %v850 = vadd.f32 0.0, %v849
      %851 = vmatmul.bf16.gmra.mxu0 %v749
      %v852 = vpop.f32.mrf.mxu0
      %v853 = vadd.f32 0.0, %v852
      %v854 = vpop.f32.mrf.mxu0
      %v855 = vadd.f32 0.0, %v854
      %856 = vmatmul.bf16.gmra.mxu0 %v751
      %v857 = vpop.f32.mrf.mxu0
      %v858 = vadd.f32 0.0, %v857
      %v859 = vpop.f32.mrf.mxu0
      %v860 = vadd.f32 0.0, %v859
      %861 = vmatmul.bf16.gmra.mxu0 %v753
      %v862 = vpop.f32.mrf.mxu0
      %v863 = vadd.f32 0.0, %v862
      %v864 = vpop.f32.mrf.mxu0
      %v865 = vadd.f32 0.0, %v864
      %866 = vmatmul.bf16.gmra.mxu0 %v755
      %v867 = vpop.f32.mrf.mxu0
      %v868 = vadd.f32 0.0, %v867
      %v869 = vpop.f32.mrf.mxu0
      %v870 = vadd.f32 0.0, %v869
      %871 = vmatmul.bf16.gmra.mxu0 %v757
      %v872 = vpop.f32.mrf.mxu0
      %v873 = vadd.f32 0.0, %v872
      %v874 = vpop.f32.mrf.mxu0
      %v875 = vadd.f32 0.0, %v874
      %876 = vmatmul.bf16.gmra.mxu0 %v759
      %v877 = vpop.f32.mrf.mxu0
      %v878 = vadd.f32 0.0, %v877
      %v879 = vpop.f32.mrf.mxu0
      %v880 = vadd.f32 0.0, %v879
      %881 = vmatmul.bf16.gmra.mxu0 %v761
      %v882 = vpop.f32.mrf.mxu0
      %v883 = vadd.f32 0.0, %v882
      %v884 = vpop.f32.mrf.mxu0
      %v885 = vadd.f32 0.0, %v884
      %886 = vmatmul.bf16.gmra.mxu0 %v763
      %v887 = vpop.f32.mrf.mxu0
      %v888 = vadd.f32 0.0, %v887
      %v889 = vpop.f32.mrf.mxu0
      %v890 = vadd.f32 0.0, %v889
      %891 = vmatmul.bf16.gmra.mxu0 %v765
      %v892 = vpop.f32.mrf.mxu0
      %v893 = vadd.f32 0.0, %v892
      %v894 = vpop.f32.mrf.mxu0
      %v895 = vadd.f32 0.0, %v894
      %896 = vmatmul.bf16.gmra.mxu0 %v767
      %v897 = vpop.f32.mrf.mxu0
      %v898 = vadd.f32 0.0, %v897
      %v899 = vpop.f32.mrf.mxu0
      %v900 = vadd.f32 0.0, %v899
      %901 = vdwg.mxu0
      %s902 = scalar_lea.vmem %s247, 8
      %v903 = vld [vmem:[%s902] sm:$0xf]
      %v904 = vld [vmem:[%s902 + $0x4] sm:$0x3]
      %v907 = vunpack.c.l.b16 %v903
      %v908 = vunpack.c.l.b16 %v904
      %v909 = vpack.c.b16 %v908, %v907
      %v911 = vsel %vm769, %v909, 0
      %913 = vmatpush.bf16.msra.mxu0 0
      %914 = vmatpush.bf16.msra.mxu0 0
      %915 = vmatpush.bf16.msra.mxu0 0
      %916 = vmatpush.bf16.msra.mxu0 0
      %917 = vmatpush.bf16.msra.mxu0 0
      %918 = vmatpush.bf16.msra.mxu0 0
      %919 = vmatpush.bf16.msra.mxu0 0
      %920 = vmatpush.bf16.msra.mxu0 %v911
      %921 = vmatmul.bf16.gmra.mxu0 %v721
      %v922 = vpop.f32.mrf.mxu0
      %v923 = vadd.f32 0.0, %v922
      %v924 = vpop.f32.mrf.mxu0
      %v925 = vadd.f32 0.0, %v924
      %926 = vmatmul.bf16.gmra.mxu0 %v723
      %v927 = vpop.f32.mrf.mxu0
      %v928 = vadd.f32 0.0, %v927
      %v929 = vpop.f32.mrf.mxu0
      %v930 = vadd.f32 0.0, %v929
      %931 = vmatmul.bf16.gmra.mxu0 %v725
      %v932 = vpop.f32.mrf.mxu0
      %v933 = vadd.f32 0.0, %v932
      %v934 = vpop.f32.mrf.mxu0
      %v935 = vadd.f32 0.0, %v934
      %936 = vmatmul.bf16.gmra.mxu0 %v727
      %v937 = vpop.f32.mrf.mxu0
      %v938 = vadd.f32 0.0, %v937
      %v939 = vpop.f32.mrf.mxu0
      %v940 = vadd.f32 0.0, %v939
      %941 = vmatmul.bf16.gmra.mxu0 %v729
      %v942 = vpop.f32.mrf.mxu0
      %v943 = vadd.f32 0.0, %v942
      %v944 = vpop.f32.mrf.mxu0
      %v945 = vadd.f32 0.0, %v944
      %946 = vmatmul.bf16.gmra.mxu0 %v731
      %v947 = vpop.f32.mrf.mxu0
      %v948 = vadd.f32 0.0, %v947
      %v949 = vpop.f32.mrf.mxu0
      %v950 = vadd.f32 0.0, %v949
      %951 = vmatmul.bf16.gmra.mxu0 %v733
      %v952 = vpop.f32.mrf.mxu0
      %v953 = vadd.f32 0.0, %v952
      %v954 = vpop.f32.mrf.mxu0
      %v955 = vadd.f32 0.0, %v954
      %956 = vmatmul.bf16.gmra.mxu0 %v735
      %v957 = vpop.f32.mrf.mxu0
      %v958 = vadd.f32 0.0, %v957
      %v959 = vpop.f32.mrf.mxu0
      %v960 = vadd.f32 0.0, %v959
      %961 = vmatmul.bf16.gmra.mxu0 %v737
      %v962 = vpop.f32.mrf.mxu0
      %v963 = vadd.f32 0.0, %v962
      %v964 = vpop.f32.mrf.mxu0
      %v965 = vadd.f32 0.0, %v964
      %966 = vmatmul.bf16.gmra.mxu0 %v739
      %v967 = vpop.f32.mrf.mxu0
      %v968 = vadd.f32 0.0, %v967
      %v969 = vpop.f32.mrf.mxu0
      %v970 = vadd.f32 0.0, %v969
      %971 = vmatmul.bf16.gmra.mxu0 %v741
      %v972 = vpop.f32.mrf.mxu0
      %v973 = vadd.f32 0.0, %v972
      %v974 = vpop.f32.mrf.mxu0
      %v975 = vadd.f32 0.0, %v974
      %976 = vmatmul.bf16.gmra.mxu0 %v743
      %v977 = vpop.f32.mrf.mxu0
      %v978 = vadd.f32 0.0, %v977
      %v979 = vpop.f32.mrf.mxu0
      %v980 = vadd.f32 0.0, %v979
      %981 = vmatmul.bf16.gmra.mxu0 %v745
      %v982 = vpop.f32.mrf.mxu0
      %v983 = vadd.f32 0.0, %v982
      %v984 = vpop.f32.mrf.mxu0
      %v985 = vadd.f32 0.0, %v984
      %986 = vmatmul.bf16.gmra.mxu0 %v747
      %v987 = vpop.f32.mrf.mxu0
      %v988 = vadd.f32 0.0, %v987
      %v989 = vpop.f32.mrf.mxu0
      %v990 = vadd.f32 0.0, %v989
      %991 = vmatmul.bf16.gmra.mxu0 %v749
      %v992 = vpop.f32.mrf.mxu0
      %v993 = vadd.f32 0.0, %v992
      %v994 = vpop.f32.mrf.mxu0
      %v995 = vadd.f32 0.0, %v994
      %996 = vmatmul.bf16.gmra.mxu0 %v751
      %v997 = vpop.f32.mrf.mxu0
      %v998 = vadd.f32 0.0, %v997
      %v999 = vpop.f32.mrf.mxu0
      %v1000 = vadd.f32 0.0, %v999
      %1001 = vmatmul.bf16.gmra.mxu0 %v753
      %v1002 = vpop.f32.mrf.mxu0
      %v1003 = vadd.f32 0.0, %v1002
      %v1004 = vpop.f32.mrf.mxu0
      %v1005 = vadd.f32 0.0, %v1004
      %1006 = vmatmul.bf16.gmra.mxu0 %v755
      %v1007 = vpop.f32.mrf.mxu0
      %v1008 = vadd.f32 0.0, %v1007
      %v1009 = vpop.f32.mrf.mxu0
      %v1010 = vadd.f32 0.0, %v1009
      %1011 = vmatmul.bf16.gmra.mxu0 %v757
      %v1012 = vpop.f32.mrf.mxu0
      %v1013 = vadd.f32 0.0, %v1012
      %v1014 = vpop.f32.mrf.mxu0
      %v1015 = vadd.f32 0.0, %v1014
      %1016 = vmatmul.bf16.gmra.mxu0 %v759
      %v1017 = vpop.f32.mrf.mxu0
      %v1018 = vadd.f32 0.0, %v1017
      %v1019 = vpop.f32.mrf.mxu0
      %v1020 = vadd.f32 0.0, %v1019
      %1021 = vmatmul.bf16.gmra.mxu0 %v761
      %v1022 = vpop.f32.mrf.mxu0
      %v1023 = vadd.f32 0.0, %v1022
      %v1024 = vpop.f32.mrf.mxu0
      %v1025 = vadd.f32 0.0, %v1024
      %1026 = vmatmul.bf16.gmra.mxu0 %v763
      %v1027 = vpop.f32.mrf.mxu0
      %v1028 = vadd.f32 0.0, %v1027
      %v1029 = vpop.f32.mrf.mxu0
      %v1030 = vadd.f32 0.0, %v1029
      %1031 = vmatmul.bf16.gmra.mxu0 %v765
      %v1032 = vpop.f32.mrf.mxu0
      %v1033 = vadd.f32 0.0, %v1032
      %v1034 = vpop.f32.mrf.mxu0
      %v1035 = vadd.f32 0.0, %v1034
      %1036 = vmatmul.bf16.gmra.mxu0 %v767
      %v1037 = vpop.f32.mrf.mxu0
      %v1038 = vadd.f32 0.0, %v1037
      %v1039 = vpop.f32.mrf.mxu0
      %v1040 = vadd.f32 0.0, %v1039
      %1041 = vdwg.mxu0
      %s1042 = scalar_lea.vmem %s247, 16
      %v1043 = vld [vmem:[%s1042] sm:$0xf]
      %v1044 = vld [vmem:[%s1042 + $0x4] sm:$0x3]
      %v1047 = vunpack.c.l.b16 %v1043
      %v1048 = vunpack.c.l.b16 %v1044
      %v1049 = vpack.c.b16 %v1048, %v1047
      %v1051 = vsel %vm769, %v1049, 0
      %1053 = vmatpush.bf16.msra.mxu0 0
      %1054 = vmatpush.bf16.msra.mxu0 0
      %1055 = vmatpush.bf16.msra.mxu0 0
      %1056 = vmatpush.bf16.msra.mxu0 0
      %1057 = vmatpush.bf16.msra.mxu0 0
      %1058 = vmatpush.bf16.msra.mxu0 0
      %1059 = vmatpush.bf16.msra.mxu0 0
      %1060 = vmatpush.bf16.msra.mxu0 %v1051
      %1061 = vmatmul.bf16.gmra.mxu0 %v721
      %v1062 = vpop.f32.mrf.mxu0
      %v1063 = vadd.f32 0.0, %v1062
      %v1064 = vpop.f32.mrf.mxu0
      %v1065 = vadd.f32 0.0, %v1064
      %1066 = vmatmul.bf16.gmra.mxu0 %v723
      %v1067 = vpop.f32.mrf.mxu0
      %v1068 = vadd.f32 0.0, %v1067
      %v1069 = vpop.f32.mrf.mxu0
      %v1070 = vadd.f32 0.0, %v1069
      %1071 = vmatmul.bf16.gmra.mxu0 %v725
      %v1072 = vpop.f32.mrf.mxu0
      %v1073 = vadd.f32 0.0, %v1072
      %v1074 = vpop.f32.mrf.mxu0
      %v1075 = vadd.f32 0.0, %v1074
      %1076 = vmatmul.bf16.gmra.mxu0 %v727
      %v1077 = vpop.f32.mrf.mxu0
      %v1078 = vadd.f32 0.0, %v1077
      %v1079 = vpop.f32.mrf.mxu0
      %v1080 = vadd.f32 0.0, %v1079
      %1081 = vmatmul.bf16.gmra.mxu0 %v729
      %v1082 = vpop.f32.mrf.mxu0
      %v1083 = vadd.f32 0.0, %v1082
      %v1084 = vpop.f32.mrf.mxu0
      %v1085 = vadd.f32 0.0, %v1084
      %1086 = vmatmul.bf16.gmra.mxu0 %v731
      %v1087 = vpop.f32.mrf.mxu0
      %v1088 = vadd.f32 0.0, %v1087
      %v1089 = vpop.f32.mrf.mxu0
      %v1090 = vadd.f32 0.0, %v1089
      %1091 = vmatmul.bf16.gmra.mxu0 %v733
      %v1092 = vpop.f32.mrf.mxu0
      %v1093 = vadd.f32 0.0, %v1092
      %v1094 = vpop.f32.mrf.mxu0
      %v1095 = vadd.f32 0.0, %v1094
      %1096 = vmatmul.bf16.gmra.mxu0 %v735
      %v1097 = vpop.f32.mrf.mxu0
      %v1098 = vadd.f32 0.0, %v1097
      %v1099 = vpop.f32.mrf.mxu0
      %v1100 = vadd.f32 0.0, %v1099
      %1101 = vmatmul.bf16.gmra.mxu0 %v737
      %v1102 = vpop.f32.mrf.mxu0
      %v1103 = vadd.f32 0.0, %v1102
      %v1104 = vpop.f32.mrf.mxu0
      %v1105 = vadd.f32 0.0, %v1104
      %1106 = vmatmul.bf16.gmra.mxu0 %v739
      %v1107 = vpop.f32.mrf.mxu0
      %v1108 = vadd.f32 0.0, %v1107
      %v1109 = vpop.f32.mrf.mxu0
      %v1110 = vadd.f32 0.0, %v1109
      %1111 = vmatmul.bf16.gmra.mxu0 %v741
      %v1112 = vpop.f32.mrf.mxu0
      %v1113 = vadd.f32 0.0, %v1112
      %v1114 = vpop.f32.mrf.mxu0
      %v1115 = vadd.f32 0.0, %v1114
      %1116 = vmatmul.bf16.gmra.mxu0 %v743
      %v1117 = vpop.f32.mrf.mxu0
      %v1118 = vadd.f32 0.0, %v1117
      %v1119 = vpop.f32.mrf.mxu0
      %v1120 = vadd.f32 0.0, %v1119
      %1121 = vmatmul.bf16.gmra.mxu0 %v745
      %v1122 = vpop.f32.mrf.mxu0
      %v1123 = vadd.f32 0.0, %v1122
      %v1124 = vpop.f32.mrf.mxu0
      %v1125 = vadd.f32 0.0, %v1124
      %1126 = vmatmul.bf16.gmra.mxu0 %v747
      %v1127 = vpop.f32.mrf.mxu0
      %v1128 = vadd.f32 0.0, %v1127
      %v1129 = vpop.f32.mrf.mxu0
      %v1130 = vadd.f32 0.0, %v1129
      %1131 = vmatmul.bf16.gmra.mxu0 %v749
      %v1132 = vpop.f32.mrf.mxu0
      %v1133 = vadd.f32 0.0, %v1132
      %v1134 = vpop.f32.mrf.mxu0
      %v1135 = vadd.f32 0.0, %v1134
      %1136 = vmatmul.bf16.gmra.mxu0 %v751
      %v1137 = vpop.f32.mrf.mxu0
      %v1138 = vadd.f32 0.0, %v1137
      %v1139 = vpop.f32.mrf.mxu0
      %v1140 = vadd.f32 0.0, %v1139
      %1141 = vmatmul.bf16.gmra.mxu0 %v753
      %v1142 = vpop.f32.mrf.mxu0
      %v1143 = vadd.f32 0.0, %v1142
      %v1144 = vpop.f32.mrf.mxu0
      %v1145 = vadd.f32 0.0, %v1144
      %1146 = vmatmul.bf16.gmra.mxu0 %v755
      %v1147 = vpop.f32.mrf.mxu0
      %v1148 = vadd.f32 0.0, %v1147
      %v1149 = vpop.f32.mrf.mxu0
      %v1150 = vadd.f32 0.0, %v1149
      %1151 = vmatmul.bf16.gmra.mxu0 %v757
      %v1152 = vpop.f32.mrf.mxu0
      %v1153 = vadd.f32 0.0, %v1152
      %v1154 = vpop.f32.mrf.mxu0
      %v1155 = vadd.f32 0.0, %v1154
      %1156 = vmatmul.bf16.gmra.mxu0 %v759
      %v1157 = vpop.f32.mrf.mxu0
      %v1158 = vadd.f32 0.0, %v1157
      %v1159 = vpop.f32.mrf.mxu0
      %v1160 = vadd.f32 0.0, %v1159
      %1161 = vmatmul.bf16.gmra.mxu0 %v761
      %v1162 = vpop.f32.mrf.mxu0
      %v1163 = vadd.f32 0.0, %v1162
      %v1164 = vpop.f32.mrf.mxu0
      %v1165 = vadd.f32 0.0, %v1164
      %1166 = vmatmul.bf16.gmra.mxu0 %v763
      %v1167 = vpop.f32.mrf.mxu0
      %v1168 = vadd.f32 0.0, %v1167
      %v1169 = vpop.f32.mrf.mxu0
      %v1170 = vadd.f32 0.0, %v1169
      %1171 = vmatmul.bf16.gmra.mxu0 %v765
      %v1172 = vpop.f32.mrf.mxu0
      %v1173 = vadd.f32 0.0, %v1172
      %v1174 = vpop.f32.mrf.mxu0
      %v1175 = vadd.f32 0.0, %v1174
      %1176 = vmatmul.bf16.gmra.mxu0 %v767
      %v1177 = vpop.f32.mrf.mxu0
      %v1178 = vadd.f32 0.0, %v1177
      %v1179 = vpop.f32.mrf.mxu0
      %v1180 = vadd.f32 0.0, %v1179
      %1181 = vdwg.mxu0
      %vm1230 = vcmask 1046528
      %v1231 = vrot.slane %v923, 1
      %v1232 = vrot.slane %v925, 1
      %v1233 = vsel %vm1230, %v1231, %v1232
      %v1234 = vrot.slane %v928, 1
      %v1235 = vsel %vm1230, %v1232, %v1234
      %v1236 = vrot.slane %v930, 1
      %v1237 = vsel %vm1230, %v1234, %v1236
      %v1238 = vrot.slane %v933, 1
      %v1239 = vsel %vm1230, %v1236, %v1238
      %v1240 = vrot.slane %v935, 1
      %v1241 = vsel %vm1230, %v1238, %v1240
      %v1242 = vrot.slane %v938, 1
      %v1243 = vsel %vm1230, %v1240, %v1242
      %v1244 = vrot.slane %v940, 1
      %v1245 = vsel %vm1230, %v1242, %v1244
      %v1246 = vrot.slane %v943, 1
      %v1247 = vsel %vm1230, %v1244, %v1246
      %v1248 = vrot.slane %v945, 1
      %v1249 = vsel %vm1230, %v1246, %v1248
      %v1250 = vrot.slane %v948, 1
      %v1251 = vsel %vm1230, %v1248, %v1250
      %v1252 = vrot.slane %v950, 1
      %v1253 = vsel %vm1230, %v1250, %v1252
      %v1254 = vrot.slane %v953, 1
      %v1255 = vsel %vm1230, %v1252, %v1254
      %v1256 = vrot.slane %v955, 1
      %v1257 = vsel %vm1230, %v1254, %v1256
      %v1258 = vrot.slane %v958, 1
      %v1259 = vsel %vm1230, %v1256, %v1258
      %v1260 = vrot.slane %v960, 1
      %v1261 = vsel %vm1230, %v1258, %v1260
      %v1262 = vrot.slane %v963, 1
      %v1263 = vsel %vm1230, %v1260, %v1262
      %v1264 = vrot.slane %v965, 1
      %v1265 = vsel %vm1230, %v1262, %v1264
      %v1266 = vrot.slane %v968, 1
      %v1267 = vsel %vm1230, %v1264, %v1266
      %v1268 = vrot.slane %v970, 1
      %v1269 = vsel %vm1230, %v1266, %v1268
      %v1270 = vrot.slane %v973, 1
      %v1271 = vsel %vm1230, %v1268, %v1270
      %v1272 = vrot.slane %v975, 1
      %v1273 = vsel %vm1230, %v1270, %v1272
      %v1274 = vrot.slane %v978, 1
      %v1275 = vsel %vm1230, %v1272, %v1274
      %v1276 = vrot.slane %v980, 1
      %v1277 = vsel %vm1230, %v1274, %v1276
      %v1278 = vrot.slane %v983, 1
      %v1279 = vsel %vm1230, %v1276, %v1278
      %v1280 = vrot.slane %v985, 1
      %v1281 = vsel %vm1230, %v1278, %v1280
      %v1282 = vrot.slane %v988, 1
      %v1283 = vsel %vm1230, %v1280, %v1282
      %v1284 = vrot.slane %v990, 1
      %v1285 = vsel %vm1230, %v1282, %v1284
      %v1286 = vrot.slane %v993, 1
      %v1287 = vsel %vm1230, %v1284, %v1286
      %v1288 = vrot.slane %v995, 1
      %v1289 = vsel %vm1230, %v1286, %v1288
      %v1290 = vrot.slane %v998, 1
      %v1291 = vsel %vm1230, %v1288, %v1290
      %v1292 = vrot.slane %v1000, 1
      %v1293 = vsel %vm1230, %v1290, %v1292
      %v1294 = vrot.slane %v1003, 1
      %v1295 = vsel %vm1230, %v1292, %v1294
      %v1296 = vrot.slane %v1005, 1
      %v1297 = vsel %vm1230, %v1294, %v1296
      %v1298 = vrot.slane %v1008, 1
      %v1299 = vsel %vm1230, %v1296, %v1298
      %v1300 = vrot.slane %v1010, 1
      %v1301 = vsel %vm1230, %v1298, %v1300
      %v1302 = vrot.slane %v1013, 1
      %v1303 = vsel %vm1230, %v1300, %v1302
      %v1304 = vrot.slane %v1015, 1
      %v1305 = vsel %vm1230, %v1302, %v1304
      %v1306 = vrot.slane %v1018, 1
      %v1307 = vsel %vm1230, %v1304, %v1306
      %v1308 = vrot.slane %v1020, 1
      %v1309 = vsel %vm1230, %v1306, %v1308
      %v1310 = vrot.slane %v1023, 1
      %v1311 = vsel %vm1230, %v1308, %v1310
      %v1312 = vrot.slane %v1025, 1
      %v1313 = vsel %vm1230, %v1310, %v1312
      %v1314 = vrot.slane %v1028, 1
      %v1315 = vsel %vm1230, %v1312, %v1314
      %v1316 = vrot.slane %v1030, 1
      %v1317 = vsel %vm1230, %v1314, %v1316
      %v1318 = vrot.slane %v1033, 1
      %v1319 = vsel %vm1230, %v1316, %v1318
      %v1320 = vrot.slane %v1035, 1
      %v1321 = vsel %vm1230, %v1318, %v1320
      %v1322 = vrot.slane %v1038, 1
      %v1323 = vsel %vm1230, %v1320, %v1322
      %v1324 = vrot.slane %v1040, 1
      %v1325 = vsel %vm1230, %v1322, %v1324
      %v1374 = vadd.f32 %v783, %v1233
      %v1375 = vadd.f32 %v785, %v1235
      %v1376 = vadd.f32 %v788, %v1237
      %v1377 = vadd.f32 %v790, %v1239
      %v1378 = vadd.f32 %v793, %v1241
      %v1379 = vadd.f32 %v795, %v1243
      %v1380 = vadd.f32 %v798, %v1245
      %v1381 = vadd.f32 %v800, %v1247
      %v1382 = vadd.f32 %v803, %v1249
      %v1383 = vadd.f32 %v805, %v1251
      %v1384 = vadd.f32 %v808, %v1253
      %v1385 = vadd.f32 %v810, %v1255
      %v1386 = vadd.f32 %v813, %v1257
      %v1387 = vadd.f32 %v815, %v1259
      %v1388 = vadd.f32 %v818, %v1261
      %v1389 = vadd.f32 %v820, %v1263
      %v1390 = vadd.f32 %v823, %v1265
      %v1391 = vadd.f32 %v825, %v1267
      %v1392 = vadd.f32 %v828, %v1269
      %v1393 = vadd.f32 %v830, %v1271
      %v1394 = vadd.f32 %v833, %v1273
      %v1395 = vadd.f32 %v835, %v1275
      %v1396 = vadd.f32 %v838, %v1277
      %v1397 = vadd.f32 %v840, %v1279
      %v1398 = vadd.f32 %v843, %v1281
      %v1399 = vadd.f32 %v845, %v1283
      %v1400 = vadd.f32 %v848, %v1285
      %v1401 = vadd.f32 %v850, %v1287
      %v1402 = vadd.f32 %v853, %v1289
      %v1403 = vadd.f32 %v855, %v1291
      %v1404 = vadd.f32 %v858, %v1293
      %v1405 = vadd.f32 %v860, %v1295
      %v1406 = vadd.f32 %v863, %v1297
      %v1407 = vadd.f32 %v865, %v1299
      %v1408 = vadd.f32 %v868, %v1301
      %v1409 = vadd.f32 %v870, %v1303
      %v1410 = vadd.f32 %v873, %v1305
      %v1411 = vadd.f32 %v875, %v1307
      %v1412 = vadd.f32 %v878, %v1309
      %v1413 = vadd.f32 %v880, %v1311
      %v1414 = vadd.f32 %v883, %v1313
      %v1415 = vadd.f32 %v885, %v1315
      %v1416 = vadd.f32 %v888, %v1317
      %v1417 = vadd.f32 %v890, %v1319
      %v1418 = vadd.f32 %v893, %v1321
      %v1419 = vadd.f32 %v895, %v1323
      %v1420 = vadd.f32 %v898, %v1325
      %v1421 = vadd.f32 %v900, %v1324
      %v1470 = vrot.slane %v1063, 2
      %v1471 = vrot.slane %v1065, 2
      %v1472 = vsel %vm769, %v1470, %v1471
      %v1473 = vrot.slane %v1068, 2
      %v1474 = vsel %vm769, %v1471, %v1473
      %v1475 = vrot.slane %v1070, 2
      %v1476 = vsel %vm769, %v1473, %v1475
      %v1477 = vrot.slane %v1073, 2
      %v1478 = vsel %vm769, %v1475, %v1477
      %v1479 = vrot.slane %v1075, 2
      %v1480 = vsel %vm769, %v1477, %v1479
      %v1481 = vrot.slane %v1078, 2
      %v1482 = vsel %vm769, %v1479, %v1481
      %v1483 = vrot.slane %v1080, 2
      %v1484 = vsel %vm769, %v1481, %v1483
      %v1485 = vrot.slane %v1083, 2
      %v1486 = vsel %vm769, %v1483, %v1485
      %v1487 = vrot.slane %v1085, 2
      %v1488 = vsel %vm769, %v1485, %v1487
      %v1489 = vrot.slane %v1088, 2
      %v1490 = vsel %vm769, %v1487, %v1489
      %v1491 = vrot.slane %v1090, 2
      %v1492 = vsel %vm769, %v1489, %v1491
      %v1493 = vrot.slane %v1093, 2
      %v1494 = vsel %vm769, %v1491, %v1493
      %v1495 = vrot.slane %v1095, 2
      %v1496 = vsel %vm769, %v1493, %v1495
      %v1497 = vrot.slane %v1098, 2
      %v1498 = vsel %vm769, %v1495, %v1497
      %v1499 = vrot.slane %v1100, 2
      %v1500 = vsel %vm769, %v1497, %v1499
      %v1501 = vrot.slane %v1103, 2
      %v1502 = vsel %vm769, %v1499, %v1501
      %v1503 = vrot.slane %v1105, 2
      %v1504 = vsel %vm769, %v1501, %v1503
      %v1505 = vrot.slane %v1108, 2
      %v1506 = vsel %vm769, %v1503, %v1505
      %v1507 = vrot.slane %v1110, 2
      %v1508 = vsel %vm769, %v1505, %v1507
      %v1509 = vrot.slane %v1113, 2
      %v1510 = vsel %vm769, %v1507, %v1509
      %v1511 = vrot.slane %v1115, 2
      %v1512 = vsel %vm769, %v1509, %v1511
      %v1513 = vrot.slane %v1118, 2
      %v1514 = vsel %vm769, %v1511, %v1513
      %v1515 = vrot.slane %v1120, 2
      %v1516 = vsel %vm769, %v1513, %v1515
      %v1517 = vrot.slane %v1123, 2
      %v1518 = vsel %vm769, %v1515, %v1517
      %v1519 = vrot.slane %v1125, 2
      %v1520 = vsel %vm769, %v1517, %v1519
      %v1521 = vrot.slane %v1128, 2
      %v1522 = vsel %vm769, %v1519, %v1521
      %v1523 = vrot.slane %v1130, 2
      %v1524 = vsel %vm769, %v1521, %v1523
      %v1525 = vrot.slane %v1133, 2
      %v1526 = vsel %vm769, %v1523, %v1525
      %v1527 = vrot.slane %v1135, 2
      %v1528 = vsel %vm769, %v1525, %v1527
      %v1529 = vrot.slane %v1138, 2
      %v1530 = vsel %vm769, %v1527, %v1529
      %v1531 = vrot.slane %v1140, 2
      %v1532 = vsel %vm769, %v1529, %v1531
      %v1533 = vrot.slane %v1143, 2
      %v1534 = vsel %vm769, %v1531, %v1533
      %v1535 = vrot.slane %v1145, 2
      %v1536 = vsel %vm769, %v1533, %v1535
      %v1537 = vrot.slane %v1148, 2
      %v1538 = vsel %vm769, %v1535, %v1537
      %v1539 = vrot.slane %v1150, 2
      %v1540 = vsel %vm769, %v1537, %v1539
      %v1541 = vrot.slane %v1153, 2
      %v1542 = vsel %vm769, %v1539, %v1541
      %v1543 = vrot.slane %v1155, 2
      %v1544 = vsel %vm769, %v1541, %v1543
      %v1545 = vrot.slane %v1158, 2
      %v1546 = vsel %vm769, %v1543, %v1545
      %v1547 = vrot.slane %v1160, 2
      %v1548 = vsel %vm769, %v1545, %v1547
      %v1549 = vrot.slane %v1163, 2
      %v1550 = vsel %vm769, %v1547, %v1549
      %v1551 = vrot.slane %v1165, 2
      %v1552 = vsel %vm769, %v1549, %v1551
      %v1553 = vrot.slane %v1168, 2
      %v1554 = vsel %vm769, %v1551, %v1553
      %v1555 = vrot.slane %v1170, 2
      %v1556 = vsel %vm769, %v1553, %v1555
      %v1557 = vrot.slane %v1173, 2
      %v1558 = vsel %vm769, %v1555, %v1557
      %v1559 = vrot.slane %v1175, 2
      %v1560 = vsel %vm769, %v1557, %v1559
      %v1561 = vrot.slane %v1178, 2
      %v1562 = vsel %vm769, %v1559, %v1561
      %v1563 = vrot.slane %v1180, 2
      %v1564 = vsel %vm769, %v1561, %v1563
      %v1613 = vadd.f32 %v1374, %v1472
      %v1614 = vadd.f32 %v1375, %v1474
      %v1615 = vadd.f32 %v1376, %v1476
      %v1616 = vadd.f32 %v1377, %v1478
      %v1617 = vadd.f32 %v1378, %v1480
      %v1618 = vadd.f32 %v1379, %v1482
      %v1619 = vadd.f32 %v1380, %v1484
      %v1620 = vadd.f32 %v1381, %v1486
      %v1621 = vadd.f32 %v1382, %v1488
      %v1622 = vadd.f32 %v1383, %v1490
      %v1623 = vadd.f32 %v1384, %v1492
      %v1624 = vadd.f32 %v1385, %v1494
      %v1625 = vadd.f32 %v1386, %v1496
      %v1626 = vadd.f32 %v1387, %v1498
      %v1627 = vadd.f32 %v1388, %v1500
      %v1628 = vadd.f32 %v1389, %v1502
      %v1629 = vadd.f32 %v1390, %v1504
      %v1630 = vadd.f32 %v1391, %v1506
      %v1631 = vadd.f32 %v1392, %v1508
      %v1632 = vadd.f32 %v1393, %v1510
      %v1633 = vadd.f32 %v1394, %v1512
      %v1634 = vadd.f32 %v1395, %v1514
      %v1635 = vadd.f32 %v1396, %v1516
      %v1636 = vadd.f32 %v1397, %v1518
      %v1637 = vadd.f32 %v1398, %v1520
      %v1638 = vadd.f32 %v1399, %v1522
      %v1639 = vadd.f32 %v1400, %v1524
      %v1640 = vadd.f32 %v1401, %v1526
      %v1641 = vadd.f32 %v1402, %v1528
      %v1642 = vadd.f32 %v1403, %v1530
      %v1643 = vadd.f32 %v1404, %v1532
      %v1644 = vadd.f32 %v1405, %v1534
      %v1645 = vadd.f32 %v1406, %v1536
      %v1646 = vadd.f32 %v1407, %v1538
      %v1647 = vadd.f32 %v1408, %v1540
      %v1648 = vadd.f32 %v1409, %v1542
      %v1649 = vadd.f32 %v1410, %v1544
      %v1650 = vadd.f32 %v1411, %v1546
      %v1651 = vadd.f32 %v1412, %v1548
      %v1652 = vadd.f32 %v1413, %v1550
      %v1653 = vadd.f32 %v1414, %v1552
      %v1654 = vadd.f32 %v1415, %v1554
      %v1655 = vadd.f32 %v1416, %v1556
      %v1656 = vadd.f32 %v1417, %v1558
      %v1657 = vadd.f32 %v1418, %v1560
      %v1658 = vadd.f32 %v1419, %v1562
      %v1659 = vadd.f32 %v1420, %v1564
      %v1660 = vadd.f32 %v1421, %v1563
      %vm1709 = vcmask 1040384
      %v1710 = vrot.slane %v1613, 7
      %v1711 = vrot.slane %v1614, 7
      %v1712 = vsel %vm1709, %v1710, %v1711
      %v1713 = vrot.slane %v1615, 7
      %v1714 = vsel %vm1709, %v1711, %v1713
      %v1715 = vrot.slane %v1616, 7
      %v1716 = vsel %vm1709, %v1713, %v1715
      %v1717 = vrot.slane %v1617, 7
      %v1718 = vsel %vm1709, %v1715, %v1717
      %v1719 = vrot.slane %v1618, 7
      %v1720 = vsel %vm1709, %v1717, %v1719
      %v1721 = vrot.slane %v1619, 7
      %v1722 = vsel %vm1709, %v1719, %v1721
      %v1723 = vrot.slane %v1620, 7
      %v1724 = vsel %vm1709, %v1721, %v1723
      %v1725 = vrot.slane %v1621, 7
      %v1726 = vsel %vm1709, %v1723, %v1725
      %v1727 = vrot.slane %v1622, 7
      %v1728 = vsel %vm1709, %v1725, %v1727
      %v1729 = vrot.slane %v1623, 7
      %v1730 = vsel %vm1709, %v1727, %v1729
      %v1731 = vrot.slane %v1624, 7
      %v1732 = vsel %vm1709, %v1729, %v1731
      %v1733 = vrot.slane %v1625, 7
      %v1734 = vsel %vm1709, %v1731, %v1733
      %v1735 = vrot.slane %v1626, 7
      %v1736 = vsel %vm1709, %v1733, %v1735
      %v1737 = vrot.slane %v1627, 7
      %v1738 = vsel %vm1709, %v1735, %v1737
      %v1739 = vrot.slane %v1628, 7
      %v1740 = vsel %vm1709, %v1737, %v1739
      %v1741 = vrot.slane %v1629, 7
      %v1742 = vsel %vm1709, %v1739, %v1741
      %v1743 = vrot.slane %v1630, 7
      %v1744 = vsel %vm1709, %v1741, %v1743
      %v1745 = vrot.slane %v1631, 7
      %v1746 = vsel %vm1709, %v1743, %v1745
      %v1747 = vrot.slane %v1632, 7
      %v1748 = vsel %vm1709, %v1745, %v1747
      %v1749 = vrot.slane %v1633, 7
      %v1750 = vsel %vm1709, %v1747, %v1749
      %v1751 = vrot.slane %v1634, 7
      %v1752 = vsel %vm1709, %v1749, %v1751
      %v1753 = vrot.slane %v1635, 7
      %v1754 = vsel %vm1709, %v1751, %v1753
      %v1755 = vrot.slane %v1636, 7
      %v1756 = vsel %vm1709, %v1753, %v1755
      %v1757 = vrot.slane %v1637, 7
      %v1758 = vsel %vm1709, %v1755, %v1757
      %v1759 = vrot.slane %v1638, 7
      %v1760 = vsel %vm1709, %v1757, %v1759
      %v1761 = vrot.slane %v1639, 7
      %v1762 = vsel %vm1709, %v1759, %v1761
      %v1763 = vrot.slane %v1640, 7
      %v1764 = vsel %vm1709, %v1761, %v1763
      %v1765 = vrot.slane %v1641, 7
      %v1766 = vsel %vm1709, %v1763, %v1765
      %v1767 = vrot.slane %v1642, 7
      %v1768 = vsel %vm1709, %v1765, %v1767
      %v1769 = vrot.slane %v1643, 7
      %v1770 = vsel %vm1709, %v1767, %v1769
      %v1771 = vrot.slane %v1644, 7
      %v1772 = vsel %vm1709, %v1769, %v1771
      %v1773 = vrot.slane %v1645, 7
      %v1774 = vsel %vm1709, %v1771, %v1773
      %v1775 = vrot.slane %v1646, 7
      %v1776 = vsel %vm1709, %v1773, %v1775
      %v1777 = vrot.slane %v1647, 7
      %v1778 = vsel %vm1709, %v1775, %v1777
      %v1779 = vrot.slane %v1648, 7
      %v1780 = vsel %vm1709, %v1777, %v1779
      %v1781 = vrot.slane %v1649, 7
      %v1782 = vsel %vm1709, %v1779, %v1781
      %v1783 = vrot.slane %v1650, 7
      %v1784 = vsel %vm1709, %v1781, %v1783
      %v1785 = vrot.slane %v1651, 7
      %v1786 = vsel %vm1709, %v1783, %v1785
      %v1787 = vrot.slane %v1652, 7
      %v1788 = vsel %vm1709, %v1785, %v1787
      %v1789 = vrot.slane %v1653, 7
      %v1790 = vsel %vm1709, %v1787, %v1789
      %v1791 = vrot.slane %v1654, 7
      %v1792 = vsel %vm1709, %v1789, %v1791
      %v1793 = vrot.slane %v1655, 7
      %v1794 = vsel %vm1709, %v1791, %v1793
      %v1795 = vrot.slane %v1656, 7
      %v1796 = vsel %vm1709, %v1793, %v1795
      %v1797 = vrot.slane %v1657, 7
      %v1798 = vsel %vm1709, %v1795, %v1797
      %v1799 = vrot.slane %v1658, 7
      %v1800 = vsel %vm1709, %v1797, %v1799
      %v1801 = vrot.slane %v1659, 7
      %v1802 = vsel %vm1709, %v1799, %v1801
      %v1803 = vrot.slane %v1660, 7
      %v1804 = vsel %vm1709, %v1801, %v1803
      %v1853 = vsel %vm1709, 0.0, %v1710
      %v1854 = vsel %vm1230, %v1804, 0.0
      %v1855 = vsel %vm279, 1, 0
      %v1856 = vsel %vm280, 1, 0
      %v1857 = vsel %vm281, 1, 0
      %vm1858 = vcmp.eq.s32.totalorder %v1855, 1
      %vm1859 = vcmp.eq.s32.totalorder %v1856, 1
      %vm1860 = vcmp.eq.s32.totalorder %v1857, 1
      %v1861 = vsel %vm1858, %v1853, 0.0
      %v1862 = vsel %vm1859, %v1712, 0.0
      %v1863 = vsel %vm1860, %v1714, 0.0
      %v1864 = vsel %vm1858, %v1716, 0.0
      %v1865 = vsel %vm1859, %v1718, 0.0
      %v1866 = vsel %vm1860, %v1720, 0.0
      %v1867 = vsel %vm1858, %v1722, 0.0
      %v1868 = vsel %vm1859, %v1724, 0.0
      %v1869 = vsel %vm1860, %v1726, 0.0
      %v1870 = vsel %vm1858, %v1728, 0.0
      %v1871 = vsel %vm1859, %v1730, 0.0
      %v1872 = vsel %vm1860, %v1732, 0.0
      %v1873 = vsel %vm1858, %v1734, 0.0
      %v1874 = vsel %vm1859, %v1736, 0.0
      %v1875 = vsel %vm1860, %v1738, 0.0
      %v1876 = vsel %vm1858, %v1740, 0.0
      %v1877 = vsel %vm1859, %v1742, 0.0
      %v1878 = vsel %vm1860, %v1744, 0.0
      %v1879 = vsel %vm1858, %v1746, 0.0
      %v1880 = vsel %vm1859, %v1748, 0.0
      %v1881 = vsel %vm1860, %v1750, 0.0
      %v1882 = vsel %vm1858, %v1752, 0.0
      %v1883 = vsel %vm1859, %v1754, 0.0
      %v1884 = vsel %vm1860, %v1756, 0.0
      %v1885 = vsel %vm1858, %v1758, 0.0
      %v1886 = vsel %vm1859, %v1760, 0.0
      %v1887 = vsel %vm1860, %v1762, 0.0
      %v1888 = vsel %vm1858, %v1764, 0.0
      %v1889 = vsel %vm1859, %v1766, 0.0
      %v1890 = vsel %vm1860, %v1768, 0.0
      %v1891 = vsel %vm1858, %v1770, 0.0
      %v1892 = vsel %vm1859, %v1772, 0.0
      %v1893 = vsel %vm1860, %v1774, 0.0
      %v1894 = vsel %vm1858, %v1776, 0.0
      %v1895 = vsel %vm1859, %v1778, 0.0
      %v1896 = vsel %vm1860, %v1780, 0.0
      %v1897 = vsel %vm1858, %v1782, 0.0
      %v1898 = vsel %vm1859, %v1784, 0.0
      %v1899 = vsel %vm1860, %v1786, 0.0
      %v1900 = vsel %vm1858, %v1788, 0.0
      %v1901 = vsel %vm1859, %v1790, 0.0
      %v1902 = vsel %vm1860, %v1792, 0.0
      %v1903 = vsel %vm1858, %v1794, 0.0
      %v1904 = vsel %vm1859, %v1796, 0.0
      %v1905 = vsel %vm1860, %v1798, 0.0
      %v1906 = vsel %vm1858, %v1800, 0.0
      %v1907 = vsel %vm1859, %v1802, 0.0
      %v1908 = vsel %vm1860, %v1854, 0.0
      %v1909 = vsel %vm664, %v1861, 0.0
      %v1910 = vsel %vm664, %v1862, 0.0
      %v1911 = vadd.f32 %v1909, %v1910
      %v1912 = vsel %vm664, %v1863, 0.0
      %v1913 = vadd.f32 %v1911, %v1912
      %v1914 = vsel %vm664, %v1864, 0.0
      %v1915 = vadd.f32 %v1913, %v1914
      %v1916 = vsel %vm664, %v1865, 0.0
      %v1917 = vadd.f32 %v1915, %v1916
      %v1918 = vsel %vm664, %v1866, 0.0
      %v1919 = vadd.f32 %v1917, %v1918
      %v1920 = vsel %vm664, %v1867, 0.0
      %v1921 = vadd.f32 %v1919, %v1920
      %v1922 = vsel %vm664, %v1868, 0.0
      %v1923 = vadd.f32 %v1921, %v1922
      %v1924 = vsel %vm664, %v1869, 0.0
      %v1925 = vadd.f32 %v1923, %v1924
      %v1926 = vsel %vm664, %v1870, 0.0
      %v1927 = vadd.f32 %v1925, %v1926
      %v1928 = vsel %vm664, %v1871, 0.0
      %v1929 = vadd.f32 %v1927, %v1928
      %v1930 = vsel %vm664, %v1872, 0.0
      %v1931 = vadd.f32 %v1929, %v1930
      %v1932 = vsel %vm664, %v1873, 0.0
      %v1933 = vadd.f32 %v1931, %v1932
      %v1934 = vsel %vm664, %v1874, 0.0
      %v1935 = vadd.f32 %v1933, %v1934
      %v1936 = vsel %vm664, %v1875, 0.0
      %v1937 = vadd.f32 %v1935, %v1936
      %v1938 = vsel %vm664, %v1876, 0.0
      %v1939 = vadd.f32 %v1937, %v1938
      %v1940 = vsel %vm664, %v1877, 0.0
      %v1941 = vadd.f32 %v1939, %v1940
      %v1942 = vsel %vm664, %v1878, 0.0
      %v1943 = vadd.f32 %v1941, %v1942
      %v1944 = vsel %vm664, %v1879, 0.0
      %v1945 = vadd.f32 %v1943, %v1944
      %v1946 = vsel %vm664, %v1880, 0.0
      %v1947 = vadd.f32 %v1945, %v1946
      %v1948 = vsel %vm664, %v1881, 0.0
      %v1949 = vadd.f32 %v1947, %v1948
      %v1950 = vsel %vm664, %v1882, 0.0
      %v1951 = vadd.f32 %v1949, %v1950
      %v1952 = vsel %vm664, %v1883, 0.0
      %v1953 = vadd.f32 %v1951, %v1952
      %v1954 = vsel %vm664, %v1884, 0.0
      %v1955 = vadd.f32 %v1953, %v1954
      %v1956 = vsel %vm664, %v1885, 0.0
      %v1957 = vadd.f32 %v1955, %v1956
      %v1958 = vsel %vm664, %v1886, 0.0
      %v1959 = vadd.f32 %v1957, %v1958
      %v1960 = vsel %vm664, %v1887, 0.0
      %v1961 = vadd.f32 %v1959, %v1960
      %v1962 = vsel %vm664, %v1888, 0.0
      %v1963 = vadd.f32 %v1961, %v1962
      %v1964 = vsel %vm664, %v1889, 0.0
      %v1965 = vadd.f32 %v1963, %v1964
      %v1966 = vsel %vm664, %v1890, 0.0
      %v1967 = vadd.f32 %v1965, %v1966
      %v1968 = vsel %vm664, %v1891, 0.0
      %v1969 = vadd.f32 %v1967, %v1968
      %v1970 = vsel %vm664, %v1892, 0.0
      %v1971 = vadd.f32 %v1969, %v1970
      %v1972 = vsel %vm664, %v1893, 0.0
      %v1973 = vadd.f32 %v1971, %v1972
      %v1974 = vsel %vm664, %v1894, 0.0
      %v1975 = vadd.f32 %v1973, %v1974
      %v1976 = vsel %vm664, %v1895, 0.0
      %v1977 = vadd.f32 %v1975, %v1976
      %v1978 = vsel %vm664, %v1896, 0.0
      %v1979 = vadd.f32 %v1977, %v1978
      %v1980 = vsel %vm664, %v1897, 0.0
      %v1981 = vadd.f32 %v1979, %v1980
      %v1982 = vsel %vm664, %v1898, 0.0
      %v1983 = vadd.f32 %v1981, %v1982
      %v1984 = vsel %vm664, %v1899, 0.0
      %v1985 = vadd.f32 %v1983, %v1984
      %v1986 = vsel %vm664, %v1900, 0.0
      %v1987 = vadd.f32 %v1985, %v1986
      %v1988 = vsel %vm664, %v1901, 0.0
      %v1989 = vadd.f32 %v1987, %v1988
      %v1990 = vsel %vm664, %v1902, 0.0
      %v1991 = vadd.f32 %v1989, %v1990
      %v1992 = vsel %vm664, %v1903, 0.0
      %v1993 = vadd.f32 %v1991, %v1992
      %v1994 = vsel %vm664, %v1904, 0.0
      %v1995 = vadd.f32 %v1993, %v1994
      %v1996 = vsel %vm664, %v1905, 0.0
      %v1997 = vadd.f32 %v1995, %v1996
      %v1998 = vsel %vm664, %v1906, 0.0
      %v1999 = vadd.f32 %v1997, %v1998
      %v2000 = vsel %vm664, %v1907, 0.0
      %v2001 = vadd.f32 %v1999, %v2000
      %v2002 = vsel %vm664, %v1908, 0.0
      %v2003 = vadd.f32 %v2001, %v2002
      %v2004 = vrot.slane %v2003, 4
      %v2005 = vadd.f32 %v2003, %v2004
      %v2006 = vrot.slane %v2005, 2
      %v2007 = vadd.f32 %v2005, %v2006
      %v2008 = vrot.slane %v2007, 1
      %v2009 = vadd.f32 %v2007, %v2008
      %vm2010 = vcmask 57344
      %2011 = vst.msk [vmem:[%s261] sm:$0x1] %vm2010, %v2009
      %v2012 = vmul.f32 %v1861, %v1861
      %v2013 = vmul.f32 %v1862, %v1862
      %v2014 = vmul.f32 %v1863, %v1863
      %v2015 = vmul.f32 %v1864, %v1864
      %v2016 = vmul.f32 %v1865, %v1865
      %v2017 = vmul.f32 %v1866, %v1866
      %v2018 = vmul.f32 %v1867, %v1867
      %v2019 = vmul.f32 %v1868, %v1868
      %v2020 = vmul.f32 %v1869, %v1869
      %v2021 = vmul.f32 %v1870, %v1870
      %v2022 = vmul.f32 %v1871, %v1871
      %v2023 = vmul.f32 %v1872, %v1872
      %v2024 = vmul.f32 %v1873, %v1873
      %v2025 = vmul.f32 %v1874, %v1874
      %v2026 = vmul.f32 %v1875, %v1875
      %v2027 = vmul.f32 %v1876, %v1876
      %v2028 = vmul.f32 %v1877, %v1877
      %v2029 = vmul.f32 %v1878, %v1878
      %v2030 = vmul.f32 %v1879, %v1879
      %v2031 = vmul.f32 %v1880, %v1880
      %v2032 = vmul.f32 %v1881, %v1881
      %v2033 = vmul.f32 %v1882, %v1882
      %v2034 = vmul.f32 %v1883, %v1883
      %v2035 = vmul.f32 %v1884, %v1884
      %v2036 = vmul.f32 %v1885, %v1885
      %v2037 = vmul.f32 %v1886, %v1886
      %v2038 = vmul.f32 %v1887, %v1887
      %v2039 = vmul.f32 %v1888, %v1888
      %v2040 = vmul.f32 %v1889, %v1889
      %v2041 = vmul.f32 %v1890, %v1890
      %v2042 = vmul.f32 %v1891, %v1891
      %v2043 = vmul.f32 %v1892, %v1892
      %v2044 = vmul.f32 %v1893, %v1893
      %v2045 = vmul.f32 %v1894, %v1894
      %v2046 = vmul.f32 %v1895, %v1895
      %v2047 = vmul.f32 %v1896, %v1896
      %v2048 = vmul.f32 %v1897, %v1897
      %v2049 = vmul.f32 %v1898, %v1898
      %v2050 = vmul.f32 %v1899, %v1899
      %v2051 = vmul.f32 %v1900, %v1900
      %v2052 = vmul.f32 %v1901, %v1901
      %v2053 = vmul.f32 %v1902, %v1902
      %v2054 = vmul.f32 %v1903, %v1903
      %v2055 = vmul.f32 %v1904, %v1904
      %v2056 = vmul.f32 %v1905, %v1905
      %v2057 = vmul.f32 %v1906, %v1906
      %v2058 = vmul.f32 %v1907, %v1907
      %v2059 = vmul.f32 %v1908, %v1908
      %v2060 = vsel %vm664, %v2012, 0.0
      %v2061 = vsel %vm664, %v2013, 0.0
      %v2062 = vadd.f32 %v2060, %v2061
      %v2063 = vsel %vm664, %v2014, 0.0
      %v2064 = vadd.f32 %v2062, %v2063
      %v2065 = vsel %vm664, %v2015, 0.0
      %v2066 = vadd.f32 %v2064, %v2065
      %v2067 = vsel %vm664, %v2016, 0.0
      %v2068 = vadd.f32 %v2066, %v2067
      %v2069 = vsel %vm664, %v2017, 0.0
      %v2070 = vadd.f32 %v2068, %v2069
      %v2071 = vsel %vm664, %v2018, 0.0
      %v2072 = vadd.f32 %v2070, %v2071
      %v2073 = vsel %vm664, %v2019, 0.0
      %v2074 = vadd.f32 %v2072, %v2073
      %v2075 = vsel %vm664, %v2020, 0.0
      %v2076 = vadd.f32 %v2074, %v2075
      %v2077 = vsel %vm664, %v2021, 0.0
      %v2078 = vadd.f32 %v2076, %v2077
      %v2079 = vsel %vm664, %v2022, 0.0
      %v2080 = vadd.f32 %v2078, %v2079
      %v2081 = vsel %vm664, %v2023, 0.0
      %v2082 = vadd.f32 %v2080, %v2081
      %v2083 = vsel %vm664, %v2024, 0.0
      %v2084 = vadd.f32 %v2082, %v2083
      %v2085 = vsel %vm664, %v2025, 0.0
      %v2086 = vadd.f32 %v2084, %v2085
      %v2087 = vsel %vm664, %v2026, 0.0
      %v2088 = vadd.f32 %v2086, %v2087
      %v2089 = vsel %vm664, %v2027, 0.0
      %v2090 = vadd.f32 %v2088, %v2089
      %v2091 = vsel %vm664, %v2028, 0.0
      %v2092 = vadd.f32 %v2090, %v2091
      %v2093 = vsel %vm664, %v2029, 0.0
      %v2094 = vadd.f32 %v2092, %v2093
      %v2095 = vsel %vm664, %v2030, 0.0
      %v2096 = vadd.f32 %v2094, %v2095
      %v2097 = vsel %vm664, %v2031, 0.0
      %v2098 = vadd.f32 %v2096, %v2097
      %v2099 = vsel %vm664, %v2032, 0.0
      %v2100 = vadd.f32 %v2098, %v2099
      %v2101 = vsel %vm664, %v2033, 0.0
      %v2102 = vadd.f32 %v2100, %v2101
      %v2103 = vsel %vm664, %v2034, 0.0
      %v2104 = vadd.f32 %v2102, %v2103
      %v2105 = vsel %vm664, %v2035, 0.0
      %v2106 = vadd.f32 %v2104, %v2105
      %v2107 = vsel %vm664, %v2036, 0.0
      %v2108 = vadd.f32 %v2106, %v2107
      %v2109 = vsel %vm664, %v2037, 0.0
      %v2110 = vadd.f32 %v2108, %v2109
      %v2111 = vsel %vm664, %v2038, 0.0
      %v2112 = vadd.f32 %v2110, %v2111
      %v2113 = vsel %vm664, %v2039, 0.0
      %v2114 = vadd.f32 %v2112, %v2113
      %v2115 = vsel %vm664, %v2040, 0.0
      %v2116 = vadd.f32 %v2114, %v2115
      %v2117 = vsel %vm664, %v2041, 0.0
      %v2118 = vadd.f32 %v2116, %v2117
      %v2119 = vsel %vm664, %v2042, 0.0
      %v2120 = vadd.f32 %v2118, %v2119
      %v2121 = vsel %vm664, %v2043, 0.0
      %v2122 = vadd.f32 %v2120, %v2121
      %v2123 = vsel %vm664, %v2044, 0.0
      %v2124 = vadd.f32 %v2122, %v2123
      %v2125 = vsel %vm664, %v2045, 0.0
      %v2126 = vadd.f32 %v2124, %v2125
      %v2127 = vsel %vm664, %v2046, 0.0
      %v2128 = vadd.f32 %v2126, %v2127
      %v2129 = vsel %vm664, %v2047, 0.0
      %v2130 = vadd.f32 %v2128, %v2129
      %v2131 = vsel %vm664, %v2048, 0.0
      %v2132 = vadd.f32 %v2130, %v2131
      %v2133 = vsel %vm664, %v2049, 0.0
      %v2134 = vadd.f32 %v2132, %v2133
      %v2135 = vsel %vm664, %v2050, 0.0
      %v2136 = vadd.f32 %v2134, %v2135
      %v2137 = vsel %vm664, %v2051, 0.0
      %v2138 = vadd.f32 %v2136, %v2137
      %v2139 = vsel %vm664, %v2052, 0.0
      %v2140 = vadd.f32 %v2138, %v2139
      %v2141 = vsel %vm664, %v2053, 0.0
      %v2142 = vadd.f32 %v2140, %v2141
      %v2143 = vsel %vm664, %v2054, 0.0
      %v2144 = vadd.f32 %v2142, %v2143
      %v2145 = vsel %vm664, %v2055, 0.0
      %v2146 = vadd.f32 %v2144, %v2145
      %v2147 = vsel %vm664, %v2056, 0.0
      %v2148 = vadd.f32 %v2146, %v2147
      %v2149 = vsel %vm664, %v2057, 0.0
      %v2150 = vadd.f32 %v2148, %v2149
      %v2151 = vsel %vm664, %v2058, 0.0
      %v2152 = vadd.f32 %v2150, %v2151
      %v2153 = vsel %vm664, %v2059, 0.0
      %v2154 = vadd.f32 %v2152, %v2153
      %v2155 = vrot.slane %v2154, 4
      %v2156 = vadd.f32 %v2154, %v2155
      %v2157 = vrot.slane %v2156, 2
      %v2158 = vadd.f32 %v2156, %v2157
      %v2159 = vrot.slane %v2158, 1
      %v2160 = vadd.f32 %v2158, %v2159
      %2161 = vst.msk [vmem:[%s267] sm:$0x1] %vm2010, %v2160
      %v2162 = vpack.c.bf16 %v1861, %v1861
      %v2163 = vpack.c.bf16 %v1862, %v1862
      %v2164 = vpack.c.bf16 %v1863, %v1863
      %v2165 = vpack.c.bf16 %v1864, %v1864
      %v2166 = vpack.c.bf16 %v1865, %v1865
      %v2167 = vpack.c.bf16 %v1866, %v1866
      %v2168 = vpack.c.bf16 %v1867, %v1867
      %v2169 = vpack.c.bf16 %v1868, %v1868
      %v2170 = vpack.c.bf16 %v1869, %v1869
      %v2171 = vpack.c.bf16 %v1870, %v1870
      %v2172 = vpack.c.bf16 %v1871, %v1871
      %v2173 = vpack.c.bf16 %v1872, %v1872
      %v2174 = vpack.c.bf16 %v1873, %v1873
      %v2175 = vpack.c.bf16 %v1874, %v1874
      %v2176 = vpack.c.bf16 %v1875, %v1875
      %v2177 = vpack.c.bf16 %v1876, %v1876
      %v2178 = vpack.c.bf16 %v1877, %v1877
      %v2179 = vpack.c.bf16 %v1878, %v1878
      %v2180 = vpack.c.bf16 %v1879, %v1879
      %v2181 = vpack.c.bf16 %v1880, %v1880
      %v2182 = vpack.c.bf16 %v1881, %v1881
      %v2183 = vpack.c.bf16 %v1882, %v1882
      %v2184 = vpack.c.bf16 %v1883, %v1883
      %v2185 = vpack.c.bf16 %v1884, %v1884
      %v2186 = vpack.c.bf16 %v1885, %v1885
      %v2187 = vpack.c.bf16 %v1886, %v1886
      %v2188 = vpack.c.bf16 %v1887, %v1887
      %v2189 = vpack.c.bf16 %v1888, %v1888
      %v2190 = vpack.c.bf16 %v1889, %v1889
      %v2191 = vpack.c.bf16 %v1890, %v1890
      %v2192 = vpack.c.bf16 %v1891, %v1891
      %v2193 = vpack.c.bf16 %v1892, %v1892
      %v2194 = vpack.c.bf16 %v1893, %v1893
      %v2195 = vpack.c.bf16 %v1894, %v1894
      %v2196 = vpack.c.bf16 %v1895, %v1895
      %v2197 = vpack.c.bf16 %v1896, %v1896
      %v2198 = vpack.c.bf16 %v1897, %v1897
      %v2199 = vpack.c.bf16 %v1898, %v1898
      %v2200 = vpack.c.bf16 %v1899, %v1899
      %v2201 = vpack.c.bf16 %v1900, %v1900
      %v2202 = vpack.c.bf16 %v1901, %v1901
      %v2203 = vpack.c.bf16 %v1902, %v1902
      %v2204 = vpack.c.bf16 %v1903, %v1903
      %v2205 = vpack.c.bf16 %v1904, %v1904
      %v2206 = vpack.c.bf16 %v1905, %v1905
      %v2207 = vpack.c.bf16 %v1906, %v1906
      %v2208 = vpack.c.bf16 %v1907, %v1907
      %v2209 = vpack.c.bf16 %v1908, %v1908
      %s2210 = scalar_lea.vmem %s255, 12
      %vm2211 = vcmask 60416
      %2212 = vst.msk [vmem:[%s2210] sm:$0xf] %vm2211, %v2162
      %2213 = vst.msk [vmem:[%s2210 + $0x4] sm:$0xf] %vm2211, %v2163
      %2214 = vst.msk [vmem:[%s2210 + $0x8] sm:$0xf] %vm2211, %v2164
      %2215 = vst.msk [vmem:[%s2210 + $0xc] sm:$0xf] %vm2211, %v2165
      %2216 = vst.msk [vmem:[%s2210 + $0x10] sm:$0xf] %vm2211, %v2166
      %2217 = vst.msk [vmem:[%s2210 + $0x14] sm:$0xf] %vm2211, %v2167
      %2218 = vst.msk [vmem:[%s2210 + $0x18] sm:$0xf] %vm2211, %v2168
      %2219 = vst.msk [vmem:[%s2210 + $0x1c] sm:$0xf] %vm2211, %v2169
      %2220 = vst.msk [vmem:[%s2210 + $0x20] sm:$0xf] %vm2211, %v2170
      %2221 = vst.msk [vmem:[%s2210 + $0x24] sm:$0xf] %vm2211, %v2171
      %2222 = vst.msk [vmem:[%s2210 + $0x28] sm:$0xf] %vm2211, %v2172
      %2223 = vst.msk [vmem:[%s2210 + $0x2c] sm:$0xf] %vm2211, %v2173
      %2224 = vst.msk [vmem:[%s2210 + $0x30] sm:$0xf] %vm2211, %v2174
      %2225 = vst.msk [vmem:[%s2210 + $0x34] sm:$0xf] %vm2211, %v2175
      %2226 = vst.msk [vmem:[%s2210 + $0x38] sm:$0xf] %vm2211, %v2176
      %2227 = vst.msk [vmem:[%s2210 + $0x3c] sm:$0xf] %vm2211, %v2177
      %2228 = vst.msk [vmem:[%s2210 + $0x40] sm:$0xf] %vm2211, %v2178
      %2229 = vst.msk [vmem:[%s2210 + $0x44] sm:$0xf] %vm2211, %v2179
      %2230 = vst.msk [vmem:[%s2210 + $0x48] sm:$0xf] %vm2211, %v2180
      %2231 = vst.msk [vmem:[%s2210 + $0x4c] sm:$0xf] %vm2211, %v2181
      %2232 = vst.msk [vmem:[%s2210 + $0x50] sm:$0xf] %vm2211, %v2182
      %2233 = vst.msk [vmem:[%s2210 + $0x54] sm:$0xf] %vm2211, %v2183
      %2234 = vst.msk [vmem:[%s2210 + $0x58] sm:$0xf] %vm2211, %v2184
      %2235 = vst.msk [vmem:[%s2210 + $0x5c] sm:$0xf] %vm2211, %v2185
      %2236 = vst.msk [vmem:[%s2210 + $0x60] sm:$0xf] %vm2211, %v2186
      %2237 = vst.msk [vmem:[%s2210 + $0x64] sm:$0xf] %vm2211, %v2187
      %2238 = vst.msk [vmem:[%s2210 + $0x68] sm:$0xf] %vm2211, %v2188
      %2239 = vst.msk [vmem:[%s2210 + $0x6c] sm:$0xf] %vm2211, %v2189
      %2240 = vst.msk [vmem:[%s2210 + $0x70] sm:$0xf] %vm2211, %v2190
      %2241 = vst.msk [vmem:[%s2210 + $0x74] sm:$0xf] %vm2211, %v2191
      %2242 = vst.msk [vmem:[%s2210 + $0x78] sm:$0xf] %vm2211, %v2192
      %2243 = vst.msk [vmem:[%s2210 + $0x7c] sm:$0xf] %vm2211, %v2193
      %2244 = vst.msk [vmem:[%s2210 + $0x80] sm:$0xf] %vm2211, %v2194
      %2245 = vst.msk [vmem:[%s2210 + $0x84] sm:$0xf] %vm2211, %v2195
      %2246 = vst.msk [vmem:[%s2210 + $0x88] sm:$0xf] %vm2211, %v2196
      %2247 = vst.msk [vmem:[%s2210 + $0x8c] sm:$0xf] %vm2211, %v2197
      %2248 = vst.msk [vmem:[%s2210 + $0x90] sm:$0xf] %vm2211, %v2198
      %2249 = vst.msk [vmem:[%s2210 + $0x94] sm:$0xf] %vm2211, %v2199
      %2250 = vst.msk [vmem:[%s2210 + $0x98] sm:$0xf] %vm2211, %v2200
      %2251 = vst.msk [vmem:[%s2210 + $0x9c] sm:$0xf] %vm2211, %v2201
      %2252 = vst.msk [vmem:[%s2210 + $0xa0] sm:$0xf] %vm2211, %v2202
      %2253 = vst.msk [vmem:[%s2210 + $0xa4] sm:$0xf] %vm2211, %v2203
      %2254 = vst.msk [vmem:[%s2210 + $0xa8] sm:$0xf] %vm2211, %v2204
      %2255 = vst.msk [vmem:[%s2210 + $0xac] sm:$0xf] %vm2211, %v2205
      %2256 = vst.msk [vmem:[%s2210 + $0xb0] sm:$0xf] %vm2211, %v2206
      %2257 = vst.msk [vmem:[%s2210 + $0xb4] sm:$0xf] %vm2211, %v2207
      %2258 = vst.msk [vmem:[%s2210 + $0xb8] sm:$0xf] %vm2211, %v2208
      %2259 = vst.msk [vmem:[%s2210 + $0xbc] sm:$0xf] %vm2211, %v2209
      %2260 = vst.msk [vmem:[%s255] sm:$0xf] %vm2211, 0
      %2261 = vst.msk [vmem:[%s255 + $0x4] sm:$0xf] %vm2211, 0
      %2262 = vst.msk [vmem:[%s255 + $0x8] sm:$0xf] %vm2211, 0
      %s2263 = scalar_lea.vmem %s255, 204
      %2264 = vst.msk [vmem:[%s2263] sm:$0xf] %vm2211, 0
      %2265 = vst.msk [vmem:[%s2263 + $0x4] sm:$0xf] %vm2211, 0
      %2266 = vst.msk [vmem:[%s2263 + $0x8] sm:$0xf] %vm2211, 0
      %p2267 = scmp.lt.s32.totalorder %s20, 1
      %s2268 = scalar_select %p2267, %s20, 1
      %p2269 = scmp.lt.s32.totalorder %s21, 0
      %s2270 = scalar_select %p2269, %s21, 0
      %s2271 = smul.addr %s2268, 54
      %s2272 = sadd.s32 %s2270, %s2271
      %s2273 = smul.addr %s2272, 4
      %s2274 = scalar_lea.vmem %s2, %s2273
      %p2275 = scmp.lt.s32.totalorder %s20, 1
      %s2276 = scalar_select %p2275, %s20, 1
      %p2277 = scmp.lt.s32.totalorder %s21, 0
      %s2278 = scalar_select %p2277, %s21, 0
      %s2279 = sadd.s32 %s2278, %s2276
      %s2280 = scalar_lea.vmem %s3, %s2279
      %p2281 = scmp.lt.s32.totalorder %s20, 1
      %s2282 = scalar_select %p2281, %s20, 1
      %p2283 = scmp.lt.s32.totalorder %s21, 0
      %s2284 = scalar_select %p2283, %s21, 0
      %s2285 = sadd.s32 %s2284, %s2282
      %s2286 = scalar_lea.vmem %s4, %s2285
      // Predicated region
      $region29: #{double_conv_forward.3} parent=27 // pred_check
        %p2287 = pneg %p100
      $region30: #{double_conv_forward.3} parent=27 // pred_check_branch
        %2289 = sbr.rel (%p2287) target = $region32
      $region31: #{double_conv_forward.3} parent=27 // pred_region
        _
      $region32: #{double_conv_forward.3} parent=27 // pred_fallthru
        _
      // Predicated region
      $region33: #{double_conv_forward.3} parent=27 // pred_check
        %p2290 = pneg %p128
      $region34: #{double_conv_forward.3} parent=27 // pred_check_branch
        %2292 = sbr.rel (%p2290) target = $region36
      $region35: #{double_conv_forward.3} parent=27 // pred_region
        _
      $region36: #{double_conv_forward.3} parent=27 // pred_fallthru
        _
      // Predicated region
      $region37: #{double_conv_forward.3} parent=27 // pred_check
        %p2293 = pneg %p156
      $region38: #{double_conv_forward.3} parent=27 // pred_check_branch
        %2295 = sbr.rel (%p2293) target = $region40
      $region39: #{double_conv_forward.3} parent=27 // pred_region
        _
      $region40: #{double_conv_forward.3} parent=27 // pred_fallthru
        _
    $region28: #{double_conv_forward.3} parent=5 // pred_fallthru
      _
    %p2296 = scmp.le.s32.totalorder 2, %s11
    // Predicated region
    $region41: #{double_conv_forward.3} parent=5 // pred_check
      %p2297 = pneg %p2296
    $region42: #{double_conv_forward.3} parent=5 // pred_check_branch
      %2299 = sbr.rel (%p2297) target = $region44
    $region43: #{double_conv_forward.3} parent=5 // pred_region
      %s2300 = ssub.s32 %s11, 2
      // Predicated region
      $region45: #{double_conv_forward.3} parent=43 // pred_check
        %p2301 = pneg %p106
      $region46: #{double_conv_forward.3} parent=43 // pred_check_branch
        %2303 = sbr.rel (%p2301) target = $region48
      $region47: #{double_conv_forward.3} parent=43 // pred_region
        %p2304 = scmp.lt.s32.totalorder %s22, 1
        %s2305 = scalar_select %p2304, %s22, 1
        %p2306 = scmp.lt.s32.totalorder %s23, 0
        %s2307 = scalar_select %p2306, %s23, 0
        %s2308 = smul.addr %s2305, 54
        %s2309 = sadd.s32 %s2307, %s2308
        %s2310 = smul.addr %s2309, 4
        %s2311 = scalar_lea.vmem %s2, %s2310
      $region48: #{double_conv_forward.3} parent=43 // pred_fallthru
        _
      // Predicated region
      $region49: #{double_conv_forward.3} parent=43 // pred_check
        %p2312 = pneg %p134
      $region50: #{double_conv_forward.3} parent=43 // pred_check_branch
        %2314 = sbr.rel (%p2312) target = $region52
      $region51: #{double_conv_forward.3} parent=43 // pred_region
        %p2315 = scmp.lt.s32.totalorder %s22, 1
        %s2316 = scalar_select %p2315, %s22, 1
        %p2317 = scmp.lt.s32.totalorder %s23, 0
        %s2318 = scalar_select %p2317, %s23, 0
        %s2319 = sadd.s32 %s2318, %s2316
        %s2320 = scalar_lea.vmem %s3, %s2319
      $region52: #{double_conv_forward.3} parent=43 // pred_fallthru
        _
      // Predicated region
      $region53: #{double_conv_forward.3} parent=43 // pred_check
        %p2321 = pneg %p162
      $region54: #{double_conv_forward.3} parent=43 // pred_check_branch
        %2323 = sbr.rel (%p2321) target = $region56
      $region55: #{double_conv_forward.3} parent=43 // pred_region
        %p2324 = scmp.lt.s32.totalorder %s22, 1
        %s2325 = scalar_select %p2324, %s22, 1
        %p2326 = scmp.lt.s32.totalorder %s23, 0
        %s2327 = scalar_select %p2326, %s23, 0
        %s2328 = sadd.s32 %s2327, %s2325
        %s2329 = scalar_lea.vmem %s4, %s2328
      $region56: #{double_conv_forward.3} parent=43 // pred_fallthru
        _
    $region44: #{double_conv_forward.3} parent=5 // pred_fallthru
      _
  $region6: #{double_conv_forward.3} parent=0 // loop_footer
    %s15 = sadd.s32 1, %s11
  $region7: #{double_conv_forward.3} parent=0 // loop_footer_branch
    %10 = sbr.rel target = $region3
  $region8: #{double_conv_forward.3} parent=0 // loop_exit
    _

</llo_original>
